<compile_context>
chip_gen: v6e
topology: v6e:2x2x1
jax: 0.10.0
libtpu: 0.0.40
codegen_flags: <defaults>
</compile_context>

<pallas_src>
import jax
import jax.numpy as jnp
from jax import lax
from jax.experimental import pallas as pl
from jax.experimental.pallas import tpu as pltpu

# ----- small, self-consistent hyper-parameters -------------------------------
B = 2              # batch
P = 16             # n_gcn  (patch_dim)
N = 8              # num_patches
N1 = N + 1         # sequence length incl. cls token
BN = B * N1        # packed (batch * sequence) rows
DIM = 32           # embedding dim
DEPTH = 3          # transformer depth (-> one skipcat conv)
HEADS = 2
DH = 16            # dim_head (PyTorch default)
INNER = HEADS * DH
MLP = 32           # mlp_dim
C = 4              # num_classes
SCALE = DH ** (-0.5)
EPS = 1e-5         # nn.LayerNorm default
NEG_BIG = -1e30    # cross-batch attention mask value


# ----- small math helpers usable inside the kernel ---------------------------
def _layer_norm(x, g, b):
    mu = jnp.mean(x, axis=-1, keepdims=True)
    xc = x - mu
    var = jnp.mean(xc * xc, axis=-1, keepdims=True)
    return xc * lax.rsqrt(var + EPS) * g + b


def _gelu(x):
    # TODO(synk): exact erf (torch.nn.GELU default) replaced by the tanh-based
    # GELU approximation (|err| ~ 1e-3); erf has no guaranteed Mosaic lowering
    # and the tanh form is 1 EUP op + a few VALU ops.
    return 0.5 * x * (1.0 + jnp.tanh(0.7978845608028654 * (x + 0.044715 * x * x * x)))


# ----- the fused Pallas kernel (whole batch in one grid step) -----------------
def vit_kernel(x_ref, we, emb_bias, attn_bias, cls_sel,
               ln1g, ln1b, wqkv, wo, bo,
               ln2g, ln2b, w1, b1, w2, b2,
               wsc0, wsc1, bsc,
               hg, hb, wh, bh,
               out_ref):
    # patch_to_embedding + cls token + positional embedding (bias pre-folded;
    # the cls rows of x are zero-padded so x@we contributes nothing there).
    t = jnp.dot(x_ref[...], we[...], preferred_element_type=jnp.float32) + emb_bias[...]
    bias = attn_bias[...]                               # (BN, BN) block-diag 0 / -1e30

    last = []
    for l in range(DEPTH):
        last.append(t)
        if l > 1:                                       # CAF skip-cat Conv2d(k=[1,2])
            j = l - 2
            t = (jnp.dot(wsc0[j], t, preferred_element_type=jnp.float32)
                 + jnp.dot(wsc1[j], last[l - 2], preferred_element_type=jnp.float32)
                 + bsc[j])

        # ---- Residual(PreNorm(Attention)) ----
        h = _layer_norm(t, ln1g[l], ln1b[l])
        # scale is already folded into the Q columns of wqkv (pack_params)
        qkv = jnp.dot(h, wqkv[l], preferred_element_type=jnp.float32)   # (BN, 3*INNER)
        wo_l = wo[l]                                                     # (INNER, DIM)
        o_proj = jnp.zeros((BN, DIM), jnp.float32)
        for hh in range(HEADS):
            q = qkv[:, hh * DH:(hh + 1) * DH]
            k = qkv[:, INNER + hh * DH:INNER + (hh + 1) * DH]
            v = qkv[:, 2 * INNER + hh * DH:2 * INNER + (hh + 1) * DH]
            dots = lax.dot_general(q, k, (((1,), (1,)), ((), ())),
                                   preferred_element_type=jnp.float32) + bias
            dots = dots - jnp.max(dots, axis=-1, keepdims=True)
            pexp = jnp.exp(dots)
            inv = pl.reciprocal(jnp.sum(pexp, axis=-1, keepdims=True), approx=True)
            attn = pexp * inv
            head_o = jnp.dot(attn, v, preferred_element_type=jnp.float32)   # (BN, DH)
            # project this head directly through its row-slice of W_out
            # (equivalent to concat(heads) @ W_out, without the lane concat)
            o_proj = o_proj + jnp.dot(head_o, wo_l[hh * DH:(hh + 1) * DH, :],
                                      preferred_element_type=jnp.float32)
        t = t + o_proj + bo[l]

        # ---- Residual(PreNorm(FeedForward)) ----
        h2 = _layer_norm(t, ln2g[l], ln2b[l])
        z = jnp.dot(h2, w1[l], preferred_element_type=jnp.float32) + b1[l]
        z = _gelu(z)
        t = t + jnp.dot(z, w2[l], preferred_element_type=jnp.float32) + b2[l]

    # ---- cls pooling (selector matmul) + mlp_head (single (B, C) store) ----
    cls_rows = jnp.dot(cls_sel[...], t, preferred_element_type=jnp.float32)  # (B, DIM)
    cn = _layer_norm(cls_rows, hg[...], hb[...])
    out_ref[...] = jnp.dot(cn, wh[...], preferred_element_type=jnp.float32) + bh[...]


# ----- wrapper ----------------------------------------------------------------
KP_ORDER = ['we', 'emb_bias', 'attn_bias', 'cls_sel',
            'ln1g', 'ln1b', 'wqkv', 'wo', 'bo',
            'ln2g', 'ln2b', 'w1', 'b1', 'w2', 'b2',
            'wsc0', 'wsc1', 'bsc',
            'hg', 'hb', 'wh', 'bh']


def _full_spec(shape):
    nd = len(shape)
    return pl.BlockSpec(shape, lambda i, _nd=nd: (0,) * _nd)


@jax.jit
def vit_forward(x, kp):
    bsz = x.shape[0]
    # prepend a zero row per batch (the cls slot) and pack batch into sublanes
    x_pad = jnp.concatenate(
        [jnp.zeros((bsz, 1, P), jnp.float32), x.astype(jnp.float32)], axis=1)
    x_packed = x_pad.reshape(bsz * N1, P)
    flat = [kp[k] for k in KP_ORDER]
    in_specs = [_full_spec((bsz * N1, P))] + [_full_spec(p.shape) for p in flat]
    out = pl.pallas_call(
        vit_kernel,
        out_shape=jax.ShapeDtypeStruct((bsz, C), jnp.float32),
        grid_spec=pltpu.PrefetchScalarGridSpec(
            num_scalar_prefetch=0,
            grid=(1,),
            in_specs=in_specs,
            out_specs=pl.BlockSpec((bsz, C), lambda i: (0, 0))),
        compiler_params=pltpu.CompilerParams(
            dimension_semantics=("arbitrary",)),
    )(x_packed, *flat)
    return out


# ----- one-time weight repacking (done outside the forward path) --------------
def pack_params(p):
    kp = {}
    kp['we'] = p['we']
    # fold cls token + patch-embedding bias + positional embedding into one bias
    bias1 = p['pos'] + p['be']                                   # (N1, DIM)
    bias1 = bias1.at[0].set(p['pos'][0] + p['cls'][0])           # cls row
    kp['emb_bias'] = jnp.tile(bias1, (B, 1))                     # (BN, DIM)
    # block-diagonal attention bias (0 within batch, -1e30 across batches)
    bid = jnp.repeat(jnp.arange(B), N1)
    kp['attn_bias'] = jnp.where(bid[:, None] == bid[None, :],
                                0.0, NEG_BIG).astype(jnp.float32)
    # cls-row selector: picks row b*N1 of the packed slab for each batch b
    sel = jnp.zeros((B, BN), jnp.float32)
    sel = sel.at[jnp.arange(B), jnp.arange(B) * N1].set(1.0)
    kp['cls_sel'] = sel
    for name in ('ln1g', 'ln1b', 'ln2g', 'ln2b', 'wo', 'bo',
                 'w1', 'b1', 'w2', 'b2', 'hg', 'hb', 'wh', 'bh'):
        kp[name] = p[name]
    # fold the attention scale into the Q columns of the fused QKV weight
    scale_vec = jnp.concatenate(
        [jnp.full((INNER,), SCALE, jnp.float32),
         jnp.ones((2 * INNER,), jnp.float32)])
    kp['wqkv'] = p['wqkv'] * scale_vec[None, None, :]
    # skip-cat conv as block-diagonal matmuls over the packed sequence axis
    eye_b = jnp.eye(B, dtype=jnp.float32)
    kp['wsc0'] = jnp.stack([jnp.kron(eye_b, p['wsc0'][j]) for j in range(DEPTH - 2)], 0)
    kp['wsc1'] = jnp.stack([jnp.kron(eye_b, p['wsc1'][j]) for j in range(DEPTH - 2)], 0)
    kp['bsc'] = jnp.stack([jnp.tile(p['bsc'][j], (B, 1)) for j in range(DEPTH - 2)], 0)
    return kp


# ----- deterministic synthetic parameters -------------------------------------
def init_params(key):
    shapes = {
        'we': (P, DIM), 'be': (1, DIM), 'cls': (1, DIM), 'pos': (N1, DIM),
        'ln1g': (DEPTH, 1, DIM), 'ln1b': (DEPTH, 1, DIM),
        'wqkv': (DEPTH, DIM, 3 * INNER),
        'wo': (DEPTH, INNER, DIM), 'bo': (DEPTH, 1, DIM),
        'ln2g': (DEPTH, 1, DIM), 'ln2b': (DEPTH, 1, DIM),
        'w1': (DEPTH, DIM, MLP), 'b1': (DEPTH, 1, MLP),
        'w2': (DEPTH, MLP, DIM), 'b2': (DEPTH, 1, DIM),
        'wsc0': (DEPTH - 2, N1, N1), 'wsc1': (DEPTH - 2, N1, N1),
        'bsc': (DEPTH - 2, N1, 1),
        'hg': (1, DIM), 'hb': (1, DIM), 'wh': (DIM, C), 'bh': (1, C),
    }
    keys = jax.random.split(key, len(shapes))
    params = {}
    for k_, (name, shp) in zip(keys, shapes.items()):
        params[name] = (0.1 * jax.random.normal(k_, shp)).astype(jnp.float32)
    # LayerNorm scales near 1 (like PyTorch default init)
    for name in ('ln1g', 'ln2g', 'hg'):
        params[name] = params[name] + 1.0
    return params


# ----- pure-JAX reference (mirrors the PyTorch forward exactly) ----------------
def vit_ref(x, p):
    x = x.astype(jnp.float32)
    bsz = x.shape[0]
    e = jnp.einsum('bnp,pd->bnd', x, p['we']) + p['be'][0]
    cls = jnp.broadcast_to(p['cls'][None], (bsz, 1, DIM))
    t = jnp.concatenate([cls, e], axis=1) + p['pos'][None]

    def ln(v, g, b):
        mu = jnp.mean(v, axis=-1, keepdims=True)
        var = jnp.mean((v - mu) ** 2, axis=-1, keepdims=True)
        return (v - mu) / jnp.sqrt(var + EPS) * g + b

    last = []
    for l in range(DEPTH):
        last.append(t)
        if l > 1:
            j = l - 2
            t = (jnp.einsum('oi,bid->bod', p['wsc0'][j], t)
                 + jnp.einsum('oi,bid->bod', p['wsc1'][j], last[l - 2])
                 + p['bsc'][j][None])
        h_ = ln(t, p['ln1g'][l], p['ln1b'][l])
        qkv = jnp.einsum('bnd,de->bne', h_, p['wqkv'][l])
        q, k, v = jnp.split(qkv, 3, axis=-1)
        q = q.reshape(bsz, N1, HEADS, DH).transpose(0, 2, 1, 3)
        k = k.reshape(bsz, N1, HEADS, DH).transpose(0, 2, 1, 3)
        v = v.reshape(bsz, N1, HEADS, DH).transpose(0, 2, 1, 3)
        dots = jnp.einsum('bhid,bhjd->bhij', q, k) * SCALE
        attn = jax.nn.softmax(dots, axis=-1)
        o = jnp.einsum('bhij,bhjd->bhid', attn, v)
        o = o.transpose(0, 2, 1, 3).reshape(bsz, N1, INNER)
        t = t + jnp.einsum('bni,id->bnd', o, p['wo'][l]) + p['bo'][l][None]

        h2 = ln(t, p['ln2g'][l], p['ln2b'][l])
        z = jnp.einsum('bnd,dm->bnm', h2, p['w1'][l]) + p['b1'][l][None]
        z = jax.nn.gelu(z, approximate=False)
        t = t + jnp.einsum('bnm,md->bnd', z, p['w2'][l]) + p['b2'][l][None]

    c0 = t[:, 0, :]
    cn = ln(c0, p['hg'][0], p['hb'][0])
    return cn @ p['wh'] + p['bh'][0]


if __name__ == "__main__":
    key = jax.random.PRNGKey(0)
    kx, kp_key = jax.random.split(key)
    x = jax.random.normal(kx, (B, N, P), dtype=jnp.float32)
    params = init_params(kp_key)
    packed = pack_params(params)          # one-time weight repacking

    out = jax.block_until_ready(vit_forward(x, packed))
    assert out.shape == (B, C), out.shape

    ref = vit_ref(x, params)
    if not bool(jnp.allclose(out, ref, atol=1e-2, rtol=5e-2)):
        raise SystemExit(
            f"mismatch vs reference, max_err={float(jnp.max(jnp.abs(out - ref)))}")
    print("KERNEL_OK")
</pallas_src>

<mosaic_0001>
module attributes {stable_mosaic.version = 11 : i64} {
  func.func @vit_kernel(%arg0: i32, %arg1: memref<18x16xf32, #tpu.memory_space<vmem>>, %arg2: memref<16x32xf32, #tpu.memory_space<vmem>>, %arg3: memref<18x32xf32, #tpu.memory_space<vmem>>, %arg4: memref<18x18xf32, #tpu.memory_space<vmem>>, %arg5: memref<2x18xf32, #tpu.memory_space<vmem>>, %arg6: memref<3x1x32xf32, #tpu.memory_space<vmem>>, %arg7: memref<3x1x32xf32, #tpu.memory_space<vmem>>, %arg8: memref<3x32x96xf32, #tpu.memory_space<vmem>>, %arg9: memref<3x32x32xf32, #tpu.memory_space<vmem>>, %arg10: memref<3x1x32xf32, #tpu.memory_space<vmem>>, %arg11: memref<3x1x32xf32, #tpu.memory_space<vmem>>, %arg12: memref<3x1x32xf32, #tpu.memory_space<vmem>>, %arg13: memref<3x32x32xf32, #tpu.memory_space<vmem>>, %arg14: memref<3x1x32xf32, #tpu.memory_space<vmem>>, %arg15: memref<3x32x32xf32, #tpu.memory_space<vmem>>, %arg16: memref<3x1x32xf32, #tpu.memory_space<vmem>>, %arg17: memref<1x18x18xf32, #tpu.memory_space<vmem>>, %arg18: memref<1x18x18xf32, #tpu.memory_space<vmem>>, %arg19: memref<1x18x1xf32, #tpu.memory_space<vmem>>, %arg20: memref<1x32xf32, #tpu.memory_space<vmem>>, %arg21: memref<1x32xf32, #tpu.memory_space<vmem>>, %arg22: memref<32x4xf32, #tpu.memory_space<vmem>>, %arg23: memref<1x4xf32, #tpu.memory_space<vmem>>, %arg24: memref<2x4xf32, #tpu.memory_space<vmem>>) attributes {dimension_semantics = [#tpu.dimension_semantics<arbitrary>], iteration_bounds = array<i64: 1>, scalar_prefetch = 0 : i64, scratch_operands = 0 : i64, tpu.core_type = #tpu.core_type<tc>, window_params = [{pipeline_mode = #tpu.pipeline_mode<synchronous>, transform_indices = @transform_0, window_bounds = array<i64: 18, 16>}, {pipeline_mode = #tpu.pipeline_mode<synchronous>, transform_indices = @transform_1, window_bounds = array<i64: 16, 32>}, {pipeline_mode = #tpu.pipeline_mode<synchronous>, transform_indices = @transform_2, window_bounds = array<i64: 18, 32>}, {pipeline_mode = #tpu.pipeline_mode<synchronous>, transform_indices = @transform_3, window_bounds = array<i64: 18, 18>}, {pipeline_mode = #tpu.pipeline_mode<synchronous>, transform_indices = @transform_4, window_bounds = array<i64: 2, 18>}, {pipeline_mode = #tpu.pipeline_mode<synchronous>, transform_indices = @transform_5, window_bounds = array<i64: 3, 1, 32>}, {pipeline_mode = #tpu.pipeline_mode<synchronous>, transform_indices = @transform_6, window_bounds = array<i64: 3, 1, 32>}, {pipeline_mode = #tpu.pipeline_mode<synchronous>, transform_indices = @transform_7, window_bounds = array<i64: 3, 32, 96>}, {pipeline_mode = #tpu.pipeline_mode<synchronous>, transform_indices = @transform_8, window_bounds = array<i64: 3, 32, 32>}, {pipeline_mode = #tpu.pipeline_mode<synchronous>, transform_indices = @transform_9, window_bounds = array<i64: 3, 1, 32>}, {pipeline_mode = #tpu.pipeline_mode<synchronous>, transform_indices = @transform_10, window_bounds = array<i64: 3, 1, 32>}, {pipeline_mode = #tpu.pipeline_mode<synchronous>, transform_indices = @transform_11, window_bounds = array<i64: 3, 1, 32>}, {pipeline_mode = #tpu.pipeline_mode<synchronous>, transform_indices = @transform_12, window_bounds = array<i64: 3, 32, 32>}, {pipeline_mode = #tpu.pipeline_mode<synchronous>, transform_indices = @transform_13, window_bounds = array<i64: 3, 1, 32>}, {pipeline_mode = #tpu.pipeline_mode<synchronous>, transform_indices = @transform_14, window_bounds = array<i64: 3, 32, 32>}, {pipeline_mode = #tpu.pipeline_mode<synchronous>, transform_indices = @transform_15, window_bounds = array<i64: 3, 1, 32>}, {pipeline_mode = #tpu.pipeline_mode<synchronous>, transform_indices = @transform_16, window_bounds = array<i64: 1, 18, 18>}, {pipeline_mode = #tpu.pipeline_mode<synchronous>, transform_indices = @transform_17, window_bounds = array<i64: 1, 18, 18>}, {pipeline_mode = #tpu.pipeline_mode<synchronous>, transform_indices = @transform_18, window_bounds = array<i64: 1, 18, 1>}, {pipeline_mode = #tpu.pipeline_mode<synchronous>, transform_indices = @transform_19, window_bounds = array<i64: 1, 32>}, {pipeline_mode = #tpu.pipeline_mode<synchronous>, transform_indices = @transform_20, window_bounds = array<i64: 1, 32>}, {pipeline_mode = #tpu.pipeline_mode<synchronous>, transform_indices = @transform_21, window_bounds = array<i64: 32, 4>}, {pipeline_mode = #tpu.pipeline_mode<synchronous>, transform_indices = @transform_22, window_bounds = array<i64: 1, 4>}, {pipeline_mode = #tpu.pipeline_mode<synchronous>, transform_indices = @transform_23, window_bounds = array<i64: 2, 4>}]} {
    %c0 = arith.constant 0 : index
    %c0_0 = arith.constant 0 : index
    %0 = vector.load %arg1[%c0, %c0_0] : memref<18x16xf32, #tpu.memory_space<vmem>>, vector<18x16xf32>
    %c0_1 = arith.constant 0 : index
    %c0_2 = arith.constant 0 : index
    %1 = vector.load %arg2[%c0_1, %c0_2] : memref<16x32xf32, #tpu.memory_space<vmem>>, vector<16x32xf32>
    %cst = arith.constant dense<0.000000e+00> : vector<18x32xf32>
    %2 = tpu.matmul %0, %1, %cst {dimension_numbers = #tpu.dot_dimension_numbers<[1], [0], [0], [1], [0, 0, 1, 1], [], []>} : vector<18x16xf32>, vector<16x32xf32>, vector<18x32xf32> -> vector<18x32xf32>
    %c0_3 = arith.constant 0 : index
    %c0_4 = arith.constant 0 : index
    %3 = vector.load %arg3[%c0_3, %c0_4] : memref<18x32xf32, #tpu.memory_space<vmem>>, vector<18x32xf32>
    %4 = arith.addf %2, %3 : vector<18x32xf32>
    %c0_5 = arith.constant 0 : index
    %c0_6 = arith.constant 0 : index
    %5 = vector.load %arg4[%c0_5, %c0_6] : memref<18x18xf32, #tpu.memory_space<vmem>>, vector<18x18xf32>
    %c0_7 = arith.constant 0 : index
    %c0_8 = arith.constant 0 : index
    %c0_9 = arith.constant 0 : index
    %6 = vector.load %arg6[%c0_7, %c0_8, %c0_9] : memref<3x1x32xf32, #tpu.memory_space<vmem>>, vector<1x1x32xf32>
    %7 = vector.shape_cast %6 : vector<1x1x32xf32> to vector<1x32xf32>
    %c0_10 = arith.constant 0 : index
    %c0_11 = arith.constant 0 : index
    %c0_12 = arith.constant 0 : index
    %8 = vector.load %arg7[%c0_10, %c0_11, %c0_12] : memref<3x1x32xf32, #tpu.memory_space<vmem>>, vector<1x1x32xf32>
    %9 = vector.shape_cast %8 : vector<1x1x32xf32> to vector<1x32xf32>
    %cst_13 = arith.constant dense<0.000000e+00> : vector<18xf32>
    %10 = vector.multi_reduction <add>, %4, %cst_13 [1] : vector<18x32xf32> to vector<18xf32>
    %11 = vector.shape_cast %10 : vector<18xf32> to vector<18x1xf32>
    %cst_14 = arith.constant 3.200000e+01 : f32
    %12 = vector.broadcast %cst_14 : f32 to vector<18x1xf32>
    %13 = arith.divf %11, %12 : vector<18x1xf32>
    %14 = vector.broadcast %13 : vector<18x1xf32> to vector<18x32xf32>
    %15 = arith.subf %4, %14 : vector<18x32xf32>
    %16 = arith.mulf %15, %15 : vector<18x32xf32>
    %cst_15 = arith.constant dense<0.000000e+00> : vector<18xf32>
    %17 = vector.multi_reduction <add>, %16, %cst_15 [1] : vector<18x32xf32> to vector<18xf32>
    %18 = vector.shape_cast %17 : vector<18xf32> to vector<18x1xf32>
    %cst_16 = arith.constant 3.200000e+01 : f32
    %19 = vector.broadcast %cst_16 : f32 to vector<18x1xf32>
    %20 = arith.divf %18, %19 : vector<18x1xf32>
    %cst_17 = arith.constant 9.99999974E-6 : f32
    %21 = vector.broadcast %cst_17 : f32 to vector<18x1xf32>
    %22 = arith.addf %20, %21 : vector<18x1xf32>
    %23 = math.rsqrt %22 : vector<18x1xf32>
    %24 = vector.broadcast %23 : vector<18x1xf32> to vector<18x32xf32>
    %25 = arith.mulf %15, %24 : vector<18x32xf32>
    %26 = vector.broadcast %7 : vector<1x32xf32> to vector<18x32xf32>
    %27 = arith.mulf %25, %26 : vector<18x32xf32>
    %28 = vector.broadcast %9 : vector<1x32xf32> to vector<18x32xf32>
    %29 = arith.addf %27, %28 : vector<18x32xf32>
    %c0_18 = arith.constant 0 : index
    %c0_19 = arith.constant 0 : index
    %c0_20 = arith.constant 0 : index
    %30 = vector.load %arg8[%c0_18, %c0_19, %c0_20] : memref<3x32x96xf32, #tpu.memory_space<vmem>>, vector<1x32x96xf32>
    %31 = vector.shape_cast %30 : vector<1x32x96xf32> to vector<32x96xf32>
    %cst_21 = arith.constant dense<0.000000e+00> : vector<18x96xf32>
    %32 = tpu.matmul %29, %31, %cst_21 {dimension_numbers = #tpu.dot_dimension_numbers<[1], [0], [0], [1], [0, 0, 1, 1], [], []>} : vector<18x32xf32>, vector<32x96xf32>, vector<18x96xf32> -> vector<18x96xf32>
    %c0_22 = arith.constant 0 : index
    %c0_23 = arith.constant 0 : index
    %c0_24 = arith.constant 0 : index
    %33 = vector.load %arg9[%c0_22, %c0_23, %c0_24] : memref<3x32x32xf32, #tpu.memory_space<vmem>>, vector<1x32x32xf32>
    %34 = vector.shape_cast %33 : vector<1x32x32xf32> to vector<32x32xf32>
    %cst_25 = arith.constant 0.000000e+00 : f32
    %35 = vector.broadcast %cst_25 : f32 to vector<18x32xf32>
    %36 = vector.extract_strided_slice %32 {offsets = [0, 0], sizes = [18, 16], strides = [1, 1]} : vector<18x96xf32> to vector<18x16xf32>
    %37 = vector.extract_strided_slice %32 {offsets = [0, 32], sizes = [18, 16], strides = [1, 1]} : vector<18x96xf32> to vector<18x16xf32>
    %38 = vector.extract_strided_slice %32 {offsets = [0, 64], sizes = [18, 16], strides = [1, 1]} : vector<18x96xf32> to vector<18x16xf32>
    %cst_26 = arith.constant dense<0.000000e+00> : vector<18x18xf32>
    %39 = tpu.matmul %36, %37, %cst_26 {dimension_numbers = #tpu.dot_dimension_numbers<[1], [1], [0], [0], [0, 0, 1, 0], [], []>} : vector<18x16xf32>, vector<18x16xf32>, vector<18x18xf32> -> vector<18x18xf32>
    %40 = arith.addf %39, %5 : vector<18x18xf32>
    %cst_27 = arith.constant dense<0xFF800000> : vector<18xf32>
    %41 = vector.multi_reduction <maximumf>, %40, %cst_27 [1] : vector<18x18xf32> to vector<18xf32>
    %42 = vector.shape_cast %41 : vector<18xf32> to vector<18x1xf32>
    %43 = vector.broadcast %42 : vector<18x1xf32> to vector<18x18xf32>
    %44 = arith.subf %40, %43 : vector<18x18xf32>
    %45 = math.exp %44 : vector<18x18xf32>
    %cst_28 = arith.constant dense<0.000000e+00> : vector<18xf32>
    %46 = vector.multi_reduction <add>, %45, %cst_28 [1] : vector<18x18xf32> to vector<18xf32>
    %47 = vector.shape_cast %46 : vector<18xf32> to vector<18x1xf32>
    %48 = tpu.reciprocal %47 {approx = true} : vector<18x1xf32> -> vector<18x1xf32>
    %49 = vector.broadcast %48 : vector<18x1xf32> to vector<18x18xf32>
    %50 = arith.mulf %45, %49 : vector<18x18xf32>
    %cst_29 = arith.constant dense<0.000000e+00> : vector<18x16xf32>
    %51 = tpu.matmul %50, %38, %cst_29 {dimension_numbers = #tpu.dot_dimension_numbers<[1], [0], [0], [1], [0, 0, 1, 1], [], []>} : vector<18x18xf32>, vector<18x16xf32>, vector<18x16xf32> -> vector<18x16xf32>
    %52 = vector.extract_strided_slice %34 {offsets = [0, 0], sizes = [16, 32], strides = [1, 1]} : vector<32x32xf32> to vector<16x32xf32>
    %cst_30 = arith.constant dense<0.000000e+00> : vector<18x32xf32>
    %53 = tpu.matmul %51, %52, %cst_30 {dimension_numbers = #tpu.dot_dimension_numbers<[1], [0], [0], [1], [0, 0, 1, 1], [], []>} : vector<18x16xf32>, vector<16x32xf32>, vector<18x32xf32> -> vector<18x32xf32>
    %54 = arith.addf %35, %53 : vector<18x32xf32>
    %55 = vector.extract_strided_slice %32 {offsets = [0, 16], sizes = [18, 16], strides = [1, 1]} : vector<18x96xf32> to vector<18x16xf32>
    %56 = vector.extract_strided_slice %32 {offsets = [0, 48], sizes = [18, 16], strides = [1, 1]} : vector<18x96xf32> to vector<18x16xf32>
    %57 = vector.extract_strided_slice %32 {offsets = [0, 80], sizes = [18, 16], strides = [1, 1]} : vector<18x96xf32> to vector<18x16xf32>
    %cst_31 = arith.constant dense<0.000000e+00> : vector<18x18xf32>
    %58 = tpu.matmul %55, %56, %cst_31 {dimension_numbers = #tpu.dot_dimension_numbers<[1], [1], [0], [0], [0, 0, 1, 0], [], []>} : vector<18x16xf32>, vector<18x16xf32>, vector<18x18xf32> -> vector<18x18xf32>
    %59 = arith.addf %58, %5 : vector<18x18xf32>
    %cst_32 = arith.constant dense<0xFF800000> : vector<18xf32>
    %60 = vector.multi_reduction <maximumf>, %59, %cst_32 [1] : vector<18x18xf32> to vector<18xf32>
    %61 = vector.shape_cast %60 : vector<18xf32> to vector<18x1xf32>
    %62 = vector.broadcast %61 : vector<18x1xf32> to vector<18x18xf32>
    %63 = arith.subf %59, %62 : vector<18x18xf32>
    %64 = math.exp %63 : vector<18x18xf32>
    %cst_33 = arith.constant dense<0.000000e+00> : vector<18xf32>
    %65 = vector.multi_reduction <add>, %64, %cst_33 [1] : vector<18x18xf32> to vector<18xf32>
    %66 = vector.shape_cast %65 : vector<18xf32> to vector<18x1xf32>
    %67 = tpu.reciprocal %66 {approx = true} : vector<18x1xf32> -> vector<18x1xf32>
    %68 = vector.broadcast %67 : vector<18x1xf32> to vector<18x18xf32>
    %69 = arith.mulf %64, %68 : vector<18x18xf32>
    %cst_34 = arith.constant dense<0.000000e+00> : vector<18x16xf32>
    %70 = tpu.matmul %69, %57, %cst_34 {dimension_numbers = #tpu.dot_dimension_numbers<[1], [0], [0], [1], [0, 0, 1, 1], [], []>} : vector<18x18xf32>, vector<18x16xf32>, vector<18x16xf32> -> vector<18x16xf32>
    %71 = vector.extract_strided_slice %34 {offsets = [16, 0], sizes = [16, 32], strides = [1, 1]} : vector<32x32xf32> to vector<16x32xf32>
    %cst_35 = arith.constant dense<0.000000e+00> : vector<18x32xf32>
    %72 = tpu.matmul %70, %71, %cst_35 {dimension_numbers = #tpu.dot_dimension_numbers<[1], [0], [0], [1], [0, 0, 1, 1], [], []>} : vector<18x16xf32>, vector<16x32xf32>, vector<18x32xf32> -> vector<18x32xf32>
    %73 = arith.addf %54, %72 : vector<18x32xf32>
    %74 = arith.addf %4, %73 : vector<18x32xf32>
    %c0_36 = arith.constant 0 : index
    %c0_37 = arith.constant 0 : index
    %c0_38 = arith.constant 0 : index
    %75 = vector.load %arg10[%c0_36, %c0_37, %c0_38] : memref<3x1x32xf32, #tpu.memory_space<vmem>>, vector<1x1x32xf32>
    %76 = vector.shape_cast %75 : vector<1x1x32xf32> to vector<1x32xf32>
    %77 = vector.broadcast %76 : vector<1x32xf32> to vector<18x32xf32>
    %78 = arith.addf %74, %77 : vector<18x32xf32>
    %c0_39 = arith.constant 0 : index
    %c0_40 = arith.constant 0 : index
    %c0_41 = arith.constant 0 : index
    %79 = vector.load %arg11[%c0_39, %c0_40, %c0_41] : memref<3x1x32xf32, #tpu.memory_space<vmem>>, vector<1x1x32xf32>
    %80 = vector.shape_cast %79 : vector<1x1x32xf32> to vector<1x32xf32>
    %c0_42 = arith.constant 0 : index
    %c0_43 = arith.constant 0 : index
    %c0_44 = arith.constant 0 : index
    %81 = vector.load %arg12[%c0_42, %c0_43, %c0_44] : memref<3x1x32xf32, #tpu.memory_space<vmem>>, vector<1x1x32xf32>
    %82 = vector.shape_cast %81 : vector<1x1x32xf32> to vector<1x32xf32>
    %cst_45 = arith.constant dense<0.000000e+00> : vector<18xf32>
    %83 = vector.multi_reduction <add>, %78, %cst_45 [1] : vector<18x32xf32> to vector<18xf32>
    %84 = vector.shape_cast %83 : vector<18xf32> to vector<18x1xf32>
    %cst_46 = arith.constant 3.200000e+01 : f32
    %85 = vector.broadcast %cst_46 : f32 to vector<18x1xf32>
    %86 = arith.divf %84, %85 : vector<18x1xf32>
    %87 = vector.broadcast %86 : vector<18x1xf32> to vector<18x32xf32>
    %88 = arith.subf %78, %87 : vector<18x32xf32>
    %89 = arith.mulf %88, %88 : vector<18x32xf32>
    %cst_47 = arith.constant dense<0.000000e+00> : vector<18xf32>
    %90 = vector.multi_reduction <add>, %89, %cst_47 [1] : vector<18x32xf32> to vector<18xf32>
    %91 = vector.shape_cast %90 : vector<18xf32> to vector<18x1xf32>
    %cst_48 = arith.constant 3.200000e+01 : f32
    %92 = vector.broadcast %cst_48 : f32 to vector<18x1xf32>
    %93 = arith.divf %91, %92 : vector<18x1xf32>
    %cst_49 = arith.constant 9.99999974E-6 : f32
    %94 = vector.broadcast %cst_49 : f32 to vector<18x1xf32>
    %95 = arith.addf %93, %94 : vector<18x1xf32>
    %96 = math.rsqrt %95 : vector<18x1xf32>
    %97 = vector.broadcast %96 : vector<18x1xf32> to vector<18x32xf32>
    %98 = arith.mulf %88, %97 : vector<18x32xf32>
    %99 = vector.broadcast %80 : vector<1x32xf32> to vector<18x32xf32>
    %100 = arith.mulf %98, %99 : vector<18x32xf32>
    %101 = vector.broadcast %82 : vector<1x32xf32> to vector<18x32xf32>
    %102 = arith.addf %100, %101 : vector<18x32xf32>
    %c0_50 = arith.constant 0 : index
    %c0_51 = arith.constant 0 : index
    %c0_52 = arith.constant 0 : index
    %103 = vector.load %arg13[%c0_50, %c0_51, %c0_52] : memref<3x32x32xf32, #tpu.memory_space<vmem>>, vector<1x32x32xf32>
    %104 = vector.shape_cast %103 : vector<1x32x32xf32> to vector<32x32xf32>
    %cst_53 = arith.constant dense<0.000000e+00> : vector<18x32xf32>
    %105 = tpu.matmul %102, %104, %cst_53 {dimension_numbers = #tpu.dot_dimension_numbers<[1], [0], [0], [1], [0, 0, 1, 1], [], []>} : vector<18x32xf32>, vector<32x32xf32>, vector<18x32xf32> -> vector<18x32xf32>
    %c0_54 = arith.constant 0 : index
    %c0_55 = arith.constant 0 : index
    %c0_56 = arith.constant 0 : index
    %106 = vector.load %arg14[%c0_54, %c0_55, %c0_56] : memref<3x1x32xf32, #tpu.memory_space<vmem>>, vector<1x1x32xf32>
    %107 = vector.shape_cast %106 : vector<1x1x32xf32> to vector<1x32xf32>
    %108 = vector.broadcast %107 : vector<1x32xf32> to vector<18x32xf32>
    %109 = arith.addf %105, %108 : vector<18x32xf32>
    %cst_57 = arith.constant 5.000000e-01 : f32
    %110 = vector.broadcast %cst_57 : f32 to vector<18x32xf32>
    %111 = arith.mulf %110, %109 : vector<18x32xf32>
    %cst_58 = arith.constant 4.471500e-02 : f32
    %112 = vector.broadcast %cst_58 : f32 to vector<18x32xf32>
    %113 = arith.mulf %112, %109 : vector<18x32xf32>
    %114 = arith.mulf %113, %109 : vector<18x32xf32>
    %115 = arith.mulf %114, %109 : vector<18x32xf32>
    %116 = arith.addf %109, %115 : vector<18x32xf32>
    %cst_59 = arith.constant 0.797884583 : f32
    %117 = vector.broadcast %cst_59 : f32 to vector<18x32xf32>
    %118 = arith.mulf %117, %116 : vector<18x32xf32>
    %119 = math.tanh %118 : vector<18x32xf32>
    %cst_60 = arith.constant 1.000000e+00 : f32
    %120 = vector.broadcast %cst_60 : f32 to vector<18x32xf32>
    %121 = arith.addf %120, %119 : vector<18x32xf32>
    %122 = arith.mulf %111, %121 : vector<18x32xf32>
    %c0_61 = arith.constant 0 : index
    %c0_62 = arith.constant 0 : index
    %c0_63 = arith.constant 0 : index
    %123 = vector.load %arg15[%c0_61, %c0_62, %c0_63] : memref<3x32x32xf32, #tpu.memory_space<vmem>>, vector<1x32x32xf32>
    %124 = vector.shape_cast %123 : vector<1x32x32xf32> to vector<32x32xf32>
    %cst_64 = arith.constant dense<0.000000e+00> : vector<18x32xf32>
    %125 = tpu.matmul %122, %124, %cst_64 {dimension_numbers = #tpu.dot_dimension_numbers<[1], [0], [0], [1], [0, 0, 1, 1], [], []>} : vector<18x32xf32>, vector<32x32xf32>, vector<18x32xf32> -> vector<18x32xf32>
    %126 = arith.addf %78, %125 : vector<18x32xf32>
    %c0_65 = arith.constant 0 : index
    %c0_66 = arith.constant 0 : index
    %c0_67 = arith.constant 0 : index
    %127 = vector.load %arg16[%c0_65, %c0_66, %c0_67] : memref<3x1x32xf32, #tpu.memory_space<vmem>>, vector<1x1x32xf32>
    %128 = vector.shape_cast %127 : vector<1x1x32xf32> to vector<1x32xf32>
    %129 = vector.broadcast %128 : vector<1x32xf32> to vector<18x32xf32>
    %130 = arith.addf %126, %129 : vector<18x32xf32>
    %c1 = arith.constant 1 : index
    %c0_68 = arith.constant 0 : index
    %c0_69 = arith.constant 0 : index
    %131 = vector.load %arg6[%c1, %c0_68, %c0_69] : memref<3x1x32xf32, #tpu.memory_space<vmem>>, vector<1x1x32xf32>
    %132 = vector.shape_cast %131 : vector<1x1x32xf32> to vector<1x32xf32>
    %c1_70 = arith.constant 1 : index
    %c0_71 = arith.constant 0 : index
    %c0_72 = arith.constant 0 : index
    %133 = vector.load %arg7[%c1_70, %c0_71, %c0_72] : memref<3x1x32xf32, #tpu.memory_space<vmem>>, vector<1x1x32xf32>
    %134 = vector.shape_cast %133 : vector<1x1x32xf32> to vector<1x32xf32>
    %cst_73 = arith.constant dense<0.000000e+00> : vector<18xf32>
    %135 = vector.multi_reduction <add>, %130, %cst_73 [1] : vector<18x32xf32> to vector<18xf32>
    %136 = vector.shape_cast %135 : vector<18xf32> to vector<18x1xf32>
    %cst_74 = arith.constant 3.200000e+01 : f32
    %137 = vector.broadcast %cst_74 : f32 to vector<18x1xf32>
    %138 = arith.divf %136, %137 : vector<18x1xf32>
    %139 = vector.broadcast %138 : vector<18x1xf32> to vector<18x32xf32>
    %140 = arith.subf %130, %139 : vector<18x32xf32>
    %141 = arith.mulf %140, %140 : vector<18x32xf32>
    %cst_75 = arith.constant dense<0.000000e+00> : vector<18xf32>
    %142 = vector.multi_reduction <add>, %141, %cst_75 [1] : vector<18x32xf32> to vector<18xf32>
    %143 = vector.shape_cast %142 : vector<18xf32> to vector<18x1xf32>
    %cst_76 = arith.constant 3.200000e+01 : f32
    %144 = vector.broadcast %cst_76 : f32 to vector<18x1xf32>
    %145 = arith.divf %143, %144 : vector<18x1xf32>
    %cst_77 = arith.constant 9.99999974E-6 : f32
    %146 = vector.broadcast %cst_77 : f32 to vector<18x1xf32>
    %147 = arith.addf %145, %146 : vector<18x1xf32>
    %148 = math.rsqrt %147 : vector<18x1xf32>
    %149 = vector.broadcast %148 : vector<18x1xf32> to vector<18x32xf32>
    %150 = arith.mulf %140, %149 : vector<18x32xf32>
    %151 = vector.broadcast %132 : vector<1x32xf32> to vector<18x32xf32>
    %152 = arith.mulf %150, %151 : vector<18x32xf32>
    %153 = vector.broadcast %134 : vector<1x32xf32> to vector<18x32xf32>
    %154 = arith.addf %152, %153 : vector<18x32xf32>
    %c1_78 = arith.constant 1 : index
    %c0_79 = arith.constant 0 : index
    %c0_80 = arith.constant 0 : index
    %155 = vector.load %arg8[%c1_78, %c0_79, %c0_80] : memref<3x32x96xf32, #tpu.memory_space<vmem>>, vector<1x32x96xf32>
    %156 = vector.shape_cast %155 : vector<1x32x96xf32> to vector<32x96xf32>
    %cst_81 = arith.constant dense<0.000000e+00> : vector<18x96xf32>
    %157 = tpu.matmul %154, %156, %cst_81 {dimension_numbers = #tpu.dot_dimension_numbers<[1], [0], [0], [1], [0, 0, 1, 1], [], []>} : vector<18x32xf32>, vector<32x96xf32>, vector<18x96xf32> -> vector<18x96xf32>
    %c1_82 = arith.constant 1 : index
    %c0_83 = arith.constant 0 : index
    %c0_84 = arith.constant 0 : index
    %158 = vector.load %arg9[%c1_82, %c0_83, %c0_84] : memref<3x32x32xf32, #tpu.memory_space<vmem>>, vector<1x32x32xf32>
    %159 = vector.shape_cast %158 : vector<1x32x32xf32> to vector<32x32xf32>
    %cst_85 = arith.constant 0.000000e+00 : f32
    %160 = vector.broadcast %cst_85 : f32 to vector<18x32xf32>
    %161 = vector.extract_strided_slice %157 {offsets = [0, 0], sizes = [18, 16], strides = [1, 1]} : vector<18x96xf32> to vector<18x16xf32>
    %162 = vector.extract_strided_slice %157 {offsets = [0, 32], sizes = [18, 16], strides = [1, 1]} : vector<18x96xf32> to vector<18x16xf32>
    %163 = vector.extract_strided_slice %157 {offsets = [0, 64], sizes = [18, 16], strides = [1, 1]} : vector<18x96xf32> to vector<18x16xf32>
    %cst_86 = arith.constant dense<0.000000e+00> : vector<18x18xf32>
    %164 = tpu.matmul %161, %162, %cst_86 {dimension_numbers = #tpu.dot_dimension_numbers<[1], [1], [0], [0], [0, 0, 1, 0], [], []>} : vector<18x16xf32>, vector<18x16xf32>, vector<18x18xf32> -> vector<18x18xf32>
    %165 = arith.addf %164, %5 : vector<18x18xf32>
    %cst_87 = arith.constant dense<0xFF800000> : vector<18xf32>
    %166 = vector.multi_reduction <maximumf>, %165, %cst_87 [1] : vector<18x18xf32> to vector<18xf32>
    %167 = vector.shape_cast %166 : vector<18xf32> to vector<18x1xf32>
    %168 = vector.broadcast %167 : vector<18x1xf32> to vector<18x18xf32>
    %169 = arith.subf %165, %168 : vector<18x18xf32>
    %170 = math.exp %169 : vector<18x18xf32>
    %cst_88 = arith.constant dense<0.000000e+00> : vector<18xf32>
    %171 = vector.multi_reduction <add>, %170, %cst_88 [1] : vector<18x18xf32> to vector<18xf32>
    %172 = vector.shape_cast %171 : vector<18xf32> to vector<18x1xf32>
    %173 = tpu.reciprocal %172 {approx = true} : vector<18x1xf32> -> vector<18x1xf32>
    %174 = vector.broadcast %173 : vector<18x1xf32> to vector<18x18xf32>
    %175 = arith.mulf %170, %174 : vector<18x18xf32>
    %cst_89 = arith.constant dense<0.000000e+00> : vector<18x16xf32>
    %176 = tpu.matmul %175, %163, %cst_89 {dimension_numbers = #tpu.dot_dimension_numbers<[1], [0], [0], [1], [0, 0, 1, 1], [], []>} : vector<18x18xf32>, vector<18x16xf32>, vector<18x16xf32> -> vector<18x16xf32>
    %177 = vector.extract_strided_slice %159 {offsets = [0, 0], sizes = [16, 32], strides = [1, 1]} : vector<32x32xf32> to vector<16x32xf32>
    %cst_90 = arith.constant dense<0.000000e+00> : vector<18x32xf32>
    %178 = tpu.matmul %176, %177, %cst_90 {dimension_numbers = #tpu.dot_dimension_numbers<[1], [0], [0], [1], [0, 0, 1, 1], [], []>} : vector<18x16xf32>, vector<16x32xf32>, vector<18x32xf32> -> vector<18x32xf32>
    %179 = arith.addf %160, %178 : vector<18x32xf32>
    %180 = vector.extract_strided_slice %157 {offsets = [0, 16], sizes = [18, 16], strides = [1, 1]} : vector<18x96xf32> to vector<18x16xf32>
    %181 = vector.extract_strided_slice %157 {offsets = [0, 48], sizes = [18, 16], strides = [1, 1]} : vector<18x96xf32> to vector<18x16xf32>
    %182 = vector.extract_strided_slice %157 {offsets = [0, 80], sizes = [18, 16], strides = [1, 1]} : vector<18x96xf32> to vector<18x16xf32>
    %cst_91 = arith.constant dense<0.000000e+00> : vector<18x18xf32>
    %183 = tpu.matmul %180, %181, %cst_91 {dimension_numbers = #tpu.dot_dimension_numbers<[1], [1], [0], [0], [0, 0, 1, 0], [], []>} : vector<18x16xf32>, vector<18x16xf32>, vector<18x18xf32> -> vector<18x18xf32>
    %184 = arith.addf %183, %5 : vector<18x18xf32>
    %cst_92 = arith.constant dense<0xFF800000> : vector<18xf32>
    %185 = vector.multi_reduction <maximumf>, %184, %cst_92 [1] : vector<18x18xf32> to vector<18xf32>
    %186 = vector.shape_cast %185 : vector<18xf32> to vector<18x1xf32>
    %187 = vector.broadcast %186 : vector<18x1xf32> to vector<18x18xf32>
    %188 = arith.subf %184, %187 : vector<18x18xf32>
    %189 = math.exp %188 : vector<18x18xf32>
    %cst_93 = arith.constant dense<0.000000e+00> : vector<18xf32>
    %190 = vector.multi_reduction <add>, %189, %cst_93 [1] : vector<18x18xf32> to vector<18xf32>
    %191 = vector.shape_cast %190 : vector<18xf32> to vector<18x1xf32>
    %192 = tpu.reciprocal %191 {approx = true} : vector<18x1xf32> -> vector<18x1xf32>
    %193 = vector.broadcast %192 : vector<18x1xf32> to vector<18x18xf32>
    %194 = arith.mulf %189, %193 : vector<18x18xf32>
    %cst_94 = arith.constant dense<0.000000e+00> : vector<18x16xf32>
    %195 = tpu.matmul %194, %182, %cst_94 {dimension_numbers = #tpu.dot_dimension_numbers<[1], [0], [0], [1], [0, 0, 1, 1], [], []>} : vector<18x18xf32>, vector<18x16xf32>, vector<18x16xf32> -> vector<18x16xf32>
    %196 = vector.extract_strided_slice %159 {offsets = [16, 0], sizes = [16, 32], strides = [1, 1]} : vector<32x32xf32> to vector<16x32xf32>
    %cst_95 = arith.constant dense<0.000000e+00> : vector<18x32xf32>
    %197 = tpu.matmul %195, %196, %cst_95 {dimension_numbers = #tpu.dot_dimension_numbers<[1], [0], [0], [1], [0, 0, 1, 1], [], []>} : vector<18x16xf32>, vector<16x32xf32>, vector<18x32xf32> -> vector<18x32xf32>
    %198 = arith.addf %179, %197 : vector<18x32xf32>
    %199 = arith.addf %130, %198 : vector<18x32xf32>
    %c1_96 = arith.constant 1 : index
    %c0_97 = arith.constant 0 : index
    %c0_98 = arith.constant 0 : index
    %200 = vector.load %arg10[%c1_96, %c0_97, %c0_98] : memref<3x1x32xf32, #tpu.memory_space<vmem>>, vector<1x1x32xf32>
    %201 = vector.shape_cast %200 : vector<1x1x32xf32> to vector<1x32xf32>
    %202 = vector.broadcast %201 : vector<1x32xf32> to vector<18x32xf32>
    %203 = arith.addf %199, %202 : vector<18x32xf32>
    %c1_99 = arith.constant 1 : index
    %c0_100 = arith.constant 0 : index
    %c0_101 = arith.constant 0 : index
    %204 = vector.load %arg11[%c1_99, %c0_100, %c0_101] : memref<3x1x32xf32, #tpu.memory_space<vmem>>, vector<1x1x32xf32>
    %205 = vector.shape_cast %204 : vector<1x1x32xf32> to vector<1x32xf32>
    %c1_102 = arith.constant 1 : index
    %c0_103 = arith.constant 0 : index
    %c0_104 = arith.constant 0 : index
    %206 = vector.load %arg12[%c1_102, %c0_103, %c0_104] : memref<3x1x32xf32, #tpu.memory_space<vmem>>, vector<1x1x32xf32>
    %207 = vector.shape_cast %206 : vector<1x1x32xf32> to vector<1x32xf32>
    %cst_105 = arith.constant dense<0.000000e+00> : vector<18xf32>
    %208 = vector.multi_reduction <add>, %203, %cst_105 [1] : vector<18x32xf32> to vector<18xf32>
    %209 = vector.shape_cast %208 : vector<18xf32> to vector<18x1xf32>
    %cst_106 = arith.constant 3.200000e+01 : f32
    %210 = vector.broadcast %cst_106 : f32 to vector<18x1xf32>
    %211 = arith.divf %209, %210 : vector<18x1xf32>
    %212 = vector.broadcast %211 : vector<18x1xf32> to vector<18x32xf32>
    %213 = arith.subf %203, %212 : vector<18x32xf32>
    %214 = arith.mulf %213, %213 : vector<18x32xf32>
    %cst_107 = arith.constant dense<0.000000e+00> : vector<18xf32>
    %215 = vector.multi_reduction <add>, %214, %cst_107 [1] : vector<18x32xf32> to vector<18xf32>
    %216 = vector.shape_cast %215 : vector<18xf32> to vector<18x1xf32>
    %cst_108 = arith.constant 3.200000e+01 : f32
    %217 = vector.broadcast %cst_108 : f32 to vector<18x1xf32>
    %218 = arith.divf %216, %217 : vector<18x1xf32>
    %cst_109 = arith.constant 9.99999974E-6 : f32
    %219 = vector.broadcast %cst_109 : f32 to vector<18x1xf32>
    %220 = arith.addf %218, %219 : vector<18x1xf32>
    %221 = math.rsqrt %220 : vector<18x1xf32>
    %222 = vector.broadcast %221 : vector<18x1xf32> to vector<18x32xf32>
    %223 = arith.mulf %213, %222 : vector<18x32xf32>
    %224 = vector.broadcast %205 : vector<1x32xf32> to vector<18x32xf32>
    %225 = arith.mulf %223, %224 : vector<18x32xf32>
    %226 = vector.broadcast %207 : vector<1x32xf32> to vector<18x32xf32>
    %227 = arith.addf %225, %226 : vector<18x32xf32>
    %c1_110 = arith.constant 1 : index
    %c0_111 = arith.constant 0 : index
    %c0_112 = arith.constant 0 : index
    %228 = vector.load %arg13[%c1_110, %c0_111, %c0_112] : memref<3x32x32xf32, #tpu.memory_space<vmem>>, vector<1x32x32xf32>
    %229 = vector.shape_cast %228 : vector<1x32x32xf32> to vector<32x32xf32>
    %cst_113 = arith.constant dense<0.000000e+00> : vector<18x32xf32>
    %230 = tpu.matmul %227, %229, %cst_113 {dimension_numbers = #tpu.dot_dimension_numbers<[1], [0], [0], [1], [0, 0, 1, 1], [], []>} : vector<18x32xf32>, vector<32x32xf32>, vector<18x32xf32> -> vector<18x32xf32>
    %c1_114 = arith.constant 1 : index
    %c0_115 = arith.constant 0 : index
    %c0_116 = arith.constant 0 : index
    %231 = vector.load %arg14[%c1_114, %c0_115, %c0_116] : memref<3x1x32xf32, #tpu.memory_space<vmem>>, vector<1x1x32xf32>
    %232 = vector.shape_cast %231 : vector<1x1x32xf32> to vector<1x32xf32>
    %233 = vector.broadcast %232 : vector<1x32xf32> to vector<18x32xf32>
    %234 = arith.addf %230, %233 : vector<18x32xf32>
    %cst_117 = arith.constant 5.000000e-01 : f32
    %235 = vector.broadcast %cst_117 : f32 to vector<18x32xf32>
    %236 = arith.mulf %235, %234 : vector<18x32xf32>
    %cst_118 = arith.constant 4.471500e-02 : f32
    %237 = vector.broadcast %cst_118 : f32 to vector<18x32xf32>
    %238 = arith.mulf %237, %234 : vector<18x32xf32>
    %239 = arith.mulf %238, %234 : vector<18x32xf32>
    %240 = arith.mulf %239, %234 : vector<18x32xf32>
    %241 = arith.addf %234, %240 : vector<18x32xf32>
    %cst_119 = arith.constant 0.797884583 : f32
    %242 = vector.broadcast %cst_119 : f32 to vector<18x32xf32>
    %243 = arith.mulf %242, %241 : vector<18x32xf32>
    %244 = math.tanh %243 : vector<18x32xf32>
    %cst_120 = arith.constant 1.000000e+00 : f32
    %245 = vector.broadcast %cst_120 : f32 to vector<18x32xf32>
    %246 = arith.addf %245, %244 : vector<18x32xf32>
    %247 = arith.mulf %236, %246 : vector<18x32xf32>
    %c1_121 = arith.constant 1 : index
    %c0_122 = arith.constant 0 : index
    %c0_123 = arith.constant 0 : index
    %248 = vector.load %arg15[%c1_121, %c0_122, %c0_123] : memref<3x32x32xf32, #tpu.memory_space<vmem>>, vector<1x32x32xf32>
    %249 = vector.shape_cast %248 : vector<1x32x32xf32> to vector<32x32xf32>
    %cst_124 = arith.constant dense<0.000000e+00> : vector<18x32xf32>
    %250 = tpu.matmul %247, %249, %cst_124 {dimension_numbers = #tpu.dot_dimension_numbers<[1], [0], [0], [1], [0, 0, 1, 1], [], []>} : vector<18x32xf32>, vector<32x32xf32>, vector<18x32xf32> -> vector<18x32xf32>
    %251 = arith.addf %203, %250 : vector<18x32xf32>
    %c1_125 = arith.constant 1 : index
    %c0_126 = arith.constant 0 : index
    %c0_127 = arith.constant 0 : index
    %252 = vector.load %arg16[%c1_125, %c0_126, %c0_127] : memref<3x1x32xf32, #tpu.memory_space<vmem>>, vector<1x1x32xf32>
    %253 = vector.shape_cast %252 : vector<1x1x32xf32> to vector<1x32xf32>
    %254 = vector.broadcast %253 : vector<1x32xf32> to vector<18x32xf32>
    %255 = arith.addf %251, %254 : vector<18x32xf32>
    %c0_128 = arith.constant 0 : index
    %c0_129 = arith.constant 0 : index
    %c0_130 = arith.constant 0 : index
    %256 = vector.load %arg17[%c0_128, %c0_129, %c0_130] : memref<1x18x18xf32, #tpu.memory_space<vmem>>, vector<1x18x18xf32>
    %257 = vector.shape_cast %256 : vector<1x18x18xf32> to vector<18x18xf32>
    %cst_131 = arith.constant dense<0.000000e+00> : vector<18x32xf32>
    %258 = tpu.matmul %257, %255, %cst_131 {dimension_numbers = #tpu.dot_dimension_numbers<[1], [0], [0], [1], [0, 0, 1, 1], [], []>} : vector<18x18xf32>, vector<18x32xf32>, vector<18x32xf32> -> vector<18x32xf32>
    %c0_132 = arith.constant 0 : index
    %c0_133 = arith.constant 0 : index
    %c0_134 = arith.constant 0 : index
    %259 = vector.load %arg18[%c0_132, %c0_133, %c0_134] : memref<1x18x18xf32, #tpu.memory_space<vmem>>, vector<1x18x18xf32>
    %260 = vector.shape_cast %259 : vector<1x18x18xf32> to vector<18x18xf32>
    %cst_135 = arith.constant dense<0.000000e+00> : vector<18x32xf32>
    %261 = tpu.matmul %260, %4, %cst_135 {dimension_numbers = #tpu.dot_dimension_numbers<[1], [0], [0], [1], [0, 0, 1, 1], [], []>} : vector<18x18xf32>, vector<18x32xf32>, vector<18x32xf32> -> vector<18x32xf32>
    %262 = arith.addf %258, %261 : vector<18x32xf32>
    %c0_136 = arith.constant 0 : index
    %c0_137 = arith.constant 0 : index
    %c0_138 = arith.constant 0 : index
    %263 = vector.load %arg19[%c0_136, %c0_137, %c0_138] : memref<1x18x1xf32, #tpu.memory_space<vmem>>, vector<1x18x1xf32>
    %264 = vector.shape_cast %263 : vector<1x18x1xf32> to vector<18x1xf32>
    %265 = vector.broadcast %264 : vector<18x1xf32> to vector<18x32xf32>
    %266 = arith.addf %262, %265 : vector<18x32xf32>
    %c2 = arith.constant 2 : index
    %c0_139 = arith.constant 0 : index
    %c0_140 = arith.constant 0 : index
    %267 = vector.load %arg6[%c2, %c0_139, %c0_140] : memref<3x1x32xf32, #tpu.memory_space<vmem>>, vector<1x1x32xf32>
    %268 = vector.shape_cast %267 : vector<1x1x32xf32> to vector<1x32xf32>
    %c2_141 = arith.constant 2 : index
    %c0_142 = arith.constant 0 : index
    %c0_143 = arith.constant 0 : index
    %269 = vector.load %arg7[%c2_141, %c0_142, %c0_143] : memref<3x1x32xf32, #tpu.memory_space<vmem>>, vector<1x1x32xf32>
    %270 = vector.shape_cast %269 : vector<1x1x32xf32> to vector<1x32xf32>
    %cst_144 = arith.constant dense<0.000000e+00> : vector<18xf32>
    %271 = vector.multi_reduction <add>, %266, %cst_144 [1] : vector<18x32xf32> to vector<18xf32>
    %272 = vector.shape_cast %271 : vector<18xf32> to vector<18x1xf32>
    %cst_145 = arith.constant 3.200000e+01 : f32
    %273 = vector.broadcast %cst_145 : f32 to vector<18x1xf32>
    %274 = arith.divf %272, %273 : vector<18x1xf32>
    %275 = vector.broadcast %274 : vector<18x1xf32> to vector<18x32xf32>
    %276 = arith.subf %266, %275 : vector<18x32xf32>
    %277 = arith.mulf %276, %276 : vector<18x32xf32>
    %cst_146 = arith.constant dense<0.000000e+00> : vector<18xf32>
    %278 = vector.multi_reduction <add>, %277, %cst_146 [1] : vector<18x32xf32> to vector<18xf32>
    %279 = vector.shape_cast %278 : vector<18xf32> to vector<18x1xf32>
    %cst_147 = arith.constant 3.200000e+01 : f32
    %280 = vector.broadcast %cst_147 : f32 to vector<18x1xf32>
    %281 = arith.divf %279, %280 : vector<18x1xf32>
    %cst_148 = arith.constant 9.99999974E-6 : f32
    %282 = vector.broadcast %cst_148 : f32 to vector<18x1xf32>
    %283 = arith.addf %281, %282 : vector<18x1xf32>
    %284 = math.rsqrt %283 : vector<18x1xf32>
    %285 = vector.broadcast %284 : vector<18x1xf32> to vector<18x32xf32>
    %286 = arith.mulf %276, %285 : vector<18x32xf32>
    %287 = vector.broadcast %268 : vector<1x32xf32> to vector<18x32xf32>
    %288 = arith.mulf %286, %287 : vector<18x32xf32>
    %289 = vector.broadcast %270 : vector<1x32xf32> to vector<18x32xf32>
    %290 = arith.addf %288, %289 : vector<18x32xf32>
    %c2_149 = arith.constant 2 : index
    %c0_150 = arith.constant 0 : index
    %c0_151 = arith.constant 0 : index
    %291 = vector.load %arg8[%c2_149, %c0_150, %c0_151] : memref<3x32x96xf32, #tpu.memory_space<vmem>>, vector<1x32x96xf32>
    %292 = vector.shape_cast %291 : vector<1x32x96xf32> to vector<32x96xf32>
    %cst_152 = arith.constant dense<0.000000e+00> : vector<18x96xf32>
    %293 = tpu.matmul %290, %292, %cst_152 {dimension_numbers = #tpu.dot_dimension_numbers<[1], [0], [0], [1], [0, 0, 1, 1], [], []>} : vector<18x32xf32>, vector<32x96xf32>, vector<18x96xf32> -> vector<18x96xf32>
    %c2_153 = arith.constant 2 : index
    %c0_154 = arith.constant 0 : index
    %c0_155 = arith.constant 0 : index
    %294 = vector.load %arg9[%c2_153, %c0_154, %c0_155] : memref<3x32x32xf32, #tpu.memory_space<vmem>>, vector<1x32x32xf32>
    %295 = vector.shape_cast %294 : vector<1x32x32xf32> to vector<32x32xf32>
    %cst_156 = arith.constant 0.000000e+00 : f32
    %296 = vector.broadcast %cst_156 : f32 to vector<18x32xf32>
    %297 = vector.extract_strided_slice %293 {offsets = [0, 0], sizes = [18, 16], strides = [1, 1]} : vector<18x96xf32> to vector<18x16xf32>
    %298 = vector.extract_strided_slice %293 {offsets = [0, 32], sizes = [18, 16], strides = [1, 1]} : vector<18x96xf32> to vector<18x16xf32>
    %299 = vector.extract_strided_slice %293 {offsets = [0, 64], sizes = [18, 16], strides = [1, 1]} : vector<18x96xf32> to vector<18x16xf32>
    %cst_157 = arith.constant dense<0.000000e+00> : vector<18x18xf32>
    %300 = tpu.matmul %297, %298, %cst_157 {dimension_numbers = #tpu.dot_dimension_numbers<[1], [1], [0], [0], [0, 0, 1, 0], [], []>} : vector<18x16xf32>, vector<18x16xf32>, vector<18x18xf32> -> vector<18x18xf32>
    %301 = arith.addf %300, %5 : vector<18x18xf32>
    %cst_158 = arith.constant dense<0xFF800000> : vector<18xf32>
    %302 = vector.multi_reduction <maximumf>, %301, %cst_158 [1] : vector<18x18xf32> to vector<18xf32>
    %303 = vector.shape_cast %302 : vector<18xf32> to vector<18x1xf32>
    %304 = vector.broadcast %303 : vector<18x1xf32> to vector<18x18xf32>
    %305 = arith.subf %301, %304 : vector<18x18xf32>
    %306 = math.exp %305 : vector<18x18xf32>
    %cst_159 = arith.constant dense<0.000000e+00> : vector<18xf32>
    %307 = vector.multi_reduction <add>, %306, %cst_159 [1] : vector<18x18xf32> to vector<18xf32>
    %308 = vector.shape_cast %307 : vector<18xf32> to vector<18x1xf32>
    %309 = tpu.reciprocal %308 {approx = true} : vector<18x1xf32> -> vector<18x1xf32>
    %310 = vector.broadcast %309 : vector<18x1xf32> to vector<18x18xf32>
    %311 = arith.mulf %306, %310 : vector<18x18xf32>
    %cst_160 = arith.constant dense<0.000000e+00> : vector<18x16xf32>
    %312 = tpu.matmul %311, %299, %cst_160 {dimension_numbers = #tpu.dot_dimension_numbers<[1], [0], [0], [1], [0, 0, 1, 1], [], []>} : vector<18x18xf32>, vector<18x16xf32>, vector<18x16xf32> -> vector<18x16xf32>
    %313 = vector.extract_strided_slice %295 {offsets = [0, 0], sizes = [16, 32], strides = [1, 1]} : vector<32x32xf32> to vector<16x32xf32>
    %cst_161 = arith.constant dense<0.000000e+00> : vector<18x32xf32>
    %314 = tpu.matmul %312, %313, %cst_161 {dimension_numbers = #tpu.dot_dimension_numbers<[1], [0], [0], [1], [0, 0, 1, 1], [], []>} : vector<18x16xf32>, vector<16x32xf32>, vector<18x32xf32> -> vector<18x32xf32>
    %315 = arith.addf %296, %314 : vector<18x32xf32>
    %316 = vector.extract_strided_slice %293 {offsets = [0, 16], sizes = [18, 16], strides = [1, 1]} : vector<18x96xf32> to vector<18x16xf32>
    %317 = vector.extract_strided_slice %293 {offsets = [0, 48], sizes = [18, 16], strides = [1, 1]} : vector<18x96xf32> to vector<18x16xf32>
    %318 = vector.extract_strided_slice %293 {offsets = [0, 80], sizes = [18, 16], strides = [1, 1]} : vector<18x96xf32> to vector<18x16xf32>
    %cst_162 = arith.constant dense<0.000000e+00> : vector<18x18xf32>
    %319 = tpu.matmul %316, %317, %cst_162 {dimension_numbers = #tpu.dot_dimension_numbers<[1], [1], [0], [0], [0, 0, 1, 0], [], []>} : vector<18x16xf32>, vector<18x16xf32>, vector<18x18xf32> -> vector<18x18xf32>
    %320 = arith.addf %319, %5 : vector<18x18xf32>
    %cst_163 = arith.constant dense<0xFF800000> : vector<18xf32>
    %321 = vector.multi_reduction <maximumf>, %320, %cst_163 [1] : vector<18x18xf32> to vector<18xf32>
    %322 = vector.shape_cast %321 : vector<18xf32> to vector<18x1xf32>
    %323 = vector.broadcast %322 : vector<18x1xf32> to vector<18x18xf32>
    %324 = arith.subf %320, %323 : vector<18x18xf32>
    %325 = math.exp %324 : vector<18x18xf32>
    %cst_164 = arith.constant dense<0.000000e+00> : vector<18xf32>
    %326 = vector.multi_reduction <add>, %325, %cst_164 [1] : vector<18x18xf32> to vector<18xf32>
    %327 = vector.shape_cast %326 : vector<18xf32> to vector<18x1xf32>
    %328 = tpu.reciprocal %327 {approx = true} : vector<18x1xf32> -> vector<18x1xf32>
    %329 = vector.broadcast %328 : vector<18x1xf32> to vector<18x18xf32>
    %330 = arith.mulf %325, %329 : vector<18x18xf32>
    %cst_165 = arith.constant dense<0.000000e+00> : vector<18x16xf32>
    %331 = tpu.matmul %330, %318, %cst_165 {dimension_numbers = #tpu.dot_dimension_numbers<[1], [0], [0], [1], [0, 0, 1, 1], [], []>} : vector<18x18xf32>, vector<18x16xf32>, vector<18x16xf32> -> vector<18x16xf32>
    %332 = vector.extract_strided_slice %295 {offsets = [16, 0], sizes = [16, 32], strides = [1, 1]} : vector<32x32xf32> to vector<16x32xf32>
    %cst_166 = arith.constant dense<0.000000e+00> : vector<18x32xf32>
    %333 = tpu.matmul %331, %332, %cst_166 {dimension_numbers = #tpu.dot_dimension_numbers<[1], [0], [0], [1], [0, 0, 1, 1], [], []>} : vector<18x16xf32>, vector<16x32xf32>, vector<18x32xf32> -> vector<18x32xf32>
    %334 = arith.addf %315, %333 : vector<18x32xf32>
    %335 = arith.addf %266, %334 : vector<18x32xf32>
    %c2_167 = arith.constant 2 : index
    %c0_168 = arith.constant 0 : index
    %c0_169 = arith.constant 0 : index
    %336 = vector.load %arg10[%c2_167, %c0_168, %c0_169] : memref<3x1x32xf32, #tpu.memory_space<vmem>>, vector<1x1x32xf32>
    %337 = vector.shape_cast %336 : vector<1x1x32xf32> to vector<1x32xf32>
    %338 = vector.broadcast %337 : vector<1x32xf32> to vector<18x32xf32>
    %339 = arith.addf %335, %338 : vector<18x32xf32>
    %c2_170 = arith.constant 2 : index
    %c0_171 = arith.constant 0 : index
    %c0_172 = arith.constant 0 : index
    %340 = vector.load %arg11[%c2_170, %c0_171, %c0_172] : memref<3x1x32xf32, #tpu.memory_space<vmem>>, vector<1x1x32xf32>
    %341 = vector.shape_cast %340 : vector<1x1x32xf32> to vector<1x32xf32>
    %c2_173 = arith.constant 2 : index
    %c0_174 = arith.constant 0 : index
    %c0_175 = arith.constant 0 : index
    %342 = vector.load %arg12[%c2_173, %c0_174, %c0_175] : memref<3x1x32xf32, #tpu.memory_space<vmem>>, vector<1x1x32xf32>
    %343 = vector.shape_cast %342 : vector<1x1x32xf32> to vector<1x32xf32>
    %cst_176 = arith.constant dense<0.000000e+00> : vector<18xf32>
    %344 = vector.multi_reduction <add>, %339, %cst_176 [1] : vector<18x32xf32> to vector<18xf32>
    %345 = vector.shape_cast %344 : vector<18xf32> to vector<18x1xf32>
    %cst_177 = arith.constant 3.200000e+01 : f32
    %346 = vector.broadcast %cst_177 : f32 to vector<18x1xf32>
    %347 = arith.divf %345, %346 : vector<18x1xf32>
    %348 = vector.broadcast %347 : vector<18x1xf32> to vector<18x32xf32>
    %349 = arith.subf %339, %348 : vector<18x32xf32>
    %350 = arith.mulf %349, %349 : vector<18x32xf32>
    %cst_178 = arith.constant dense<0.000000e+00> : vector<18xf32>
    %351 = vector.multi_reduction <add>, %350, %cst_178 [1] : vector<18x32xf32> to vector<18xf32>
    %352 = vector.shape_cast %351 : vector<18xf32> to vector<18x1xf32>
    %cst_179 = arith.constant 3.200000e+01 : f32
    %353 = vector.broadcast %cst_179 : f32 to vector<18x1xf32>
    %354 = arith.divf %352, %353 : vector<18x1xf32>
    %cst_180 = arith.constant 9.99999974E-6 : f32
    %355 = vector.broadcast %cst_180 : f32 to vector<18x1xf32>
    %356 = arith.addf %354, %355 : vector<18x1xf32>
    %357 = math.rsqrt %356 : vector<18x1xf32>
    %358 = vector.broadcast %357 : vector<18x1xf32> to vector<18x32xf32>
    %359 = arith.mulf %349, %358 : vector<18x32xf32>
    %360 = vector.broadcast %341 : vector<1x32xf32> to vector<18x32xf32>
    %361 = arith.mulf %359, %360 : vector<18x32xf32>
    %362 = vector.broadcast %343 : vector<1x32xf32> to vector<18x32xf32>
    %363 = arith.addf %361, %362 : vector<18x32xf32>
    %c2_181 = arith.constant 2 : index
    %c0_182 = arith.constant 0 : index
    %c0_183 = arith.constant 0 : index
    %364 = vector.load %arg13[%c2_181, %c0_182, %c0_183] : memref<3x32x32xf32, #tpu.memory_space<vmem>>, vector<1x32x32xf32>
    %365 = vector.shape_cast %364 : vector<1x32x32xf32> to vector<32x32xf32>
    %cst_184 = arith.constant dense<0.000000e+00> : vector<18x32xf32>
    %366 = tpu.matmul %363, %365, %cst_184 {dimension_numbers = #tpu.dot_dimension_numbers<[1], [0], [0], [1], [0, 0, 1, 1], [], []>} : vector<18x32xf32>, vector<32x32xf32>, vector<18x32xf32> -> vector<18x32xf32>
    %c2_185 = arith.constant 2 : index
    %c0_186 = arith.constant 0 : index
    %c0_187 = arith.constant 0 : index
    %367 = vector.load %arg14[%c2_185, %c0_186, %c0_187] : memref<3x1x32xf32, #tpu.memory_space<vmem>>, vector<1x1x32xf32>
    %368 = vector.shape_cast %367 : vector<1x1x32xf32> to vector<1x32xf32>
    %369 = vector.broadcast %368 : vector<1x32xf32> to vector<18x32xf32>
    %370 = arith.addf %366, %369 : vector<18x32xf32>
    %cst_188 = arith.constant 5.000000e-01 : f32
    %371 = vector.broadcast %cst_188 : f32 to vector<18x32xf32>
    %372 = arith.mulf %371, %370 : vector<18x32xf32>
    %cst_189 = arith.constant 4.471500e-02 : f32
    %373 = vector.broadcast %cst_189 : f32 to vector<18x32xf32>
    %374 = arith.mulf %373, %370 : vector<18x32xf32>
    %375 = arith.mulf %374, %370 : vector<18x32xf32>
    %376 = arith.mulf %375, %370 : vector<18x32xf32>
    %377 = arith.addf %370, %376 : vector<18x32xf32>
    %cst_190 = arith.constant 0.797884583 : f32
    %378 = vector.broadcast %cst_190 : f32 to vector<18x32xf32>
    %379 = arith.mulf %378, %377 : vector<18x32xf32>
    %380 = math.tanh %379 : vector<18x32xf32>
    %cst_191 = arith.constant 1.000000e+00 : f32
    %381 = vector.broadcast %cst_191 : f32 to vector<18x32xf32>
    %382 = arith.addf %381, %380 : vector<18x32xf32>
    %383 = arith.mulf %372, %382 : vector<18x32xf32>
    %c2_192 = arith.constant 2 : index
    %c0_193 = arith.constant 0 : index
    %c0_194 = arith.constant 0 : index
    %384 = vector.load %arg15[%c2_192, %c0_193, %c0_194] : memref<3x32x32xf32, #tpu.memory_space<vmem>>, vector<1x32x32xf32>
    %385 = vector.shape_cast %384 : vector<1x32x32xf32> to vector<32x32xf32>
    %cst_195 = arith.constant dense<0.000000e+00> : vector<18x32xf32>
    %386 = tpu.matmul %383, %385, %cst_195 {dimension_numbers = #tpu.dot_dimension_numbers<[1], [0], [0], [1], [0, 0, 1, 1], [], []>} : vector<18x32xf32>, vector<32x32xf32>, vector<18x32xf32> -> vector<18x32xf32>
    %387 = arith.addf %339, %386 : vector<18x32xf32>
    %c2_196 = arith.constant 2 : index
    %c0_197 = arith.constant 0 : index
    %c0_198 = arith.constant 0 : index
    %388 = vector.load %arg16[%c2_196, %c0_197, %c0_198] : memref<3x1x32xf32, #tpu.memory_space<vmem>>, vector<1x1x32xf32>
    %389 = vector.shape_cast %388 : vector<1x1x32xf32> to vector<1x32xf32>
    %390 = vector.broadcast %389 : vector<1x32xf32> to vector<18x32xf32>
    %391 = arith.addf %387, %390 : vector<18x32xf32>
    %c0_199 = arith.constant 0 : index
    %c0_200 = arith.constant 0 : index
    %392 = vector.load %arg5[%c0_199, %c0_200] : memref<2x18xf32, #tpu.memory_space<vmem>>, vector<2x18xf32>
    %cst_201 = arith.constant dense<0.000000e+00> : vector<2x32xf32>
    %393 = tpu.matmul %392, %391, %cst_201 {dimension_numbers = #tpu.dot_dimension_numbers<[1], [0], [0], [1], [0, 0, 1, 1], [], []>} : vector<2x18xf32>, vector<18x32xf32>, vector<2x32xf32> -> vector<2x32xf32>
    %c0_202 = arith.constant 0 : index
    %c0_203 = arith.constant 0 : index
    %394 = vector.load %arg20[%c0_202, %c0_203] : memref<1x32xf32, #tpu.memory_space<vmem>>, vector<1x32xf32>
    %c0_204 = arith.constant 0 : index
    %c0_205 = arith.constant 0 : index
    %395 = vector.load %arg21[%c0_204, %c0_205] : memref<1x32xf32, #tpu.memory_space<vmem>>, vector<1x32xf32>
    %cst_206 = arith.constant dense<0.000000e+00> : vector<2xf32>
    %396 = vector.multi_reduction <add>, %393, %cst_206 [1] : vector<2x32xf32> to vector<2xf32>
    %397 = vector.shape_cast %396 : vector<2xf32> to vector<2x1xf32>
    %cst_207 = arith.constant 3.200000e+01 : f32
    %398 = vector.broadcast %cst_207 : f32 to vector<2x1xf32>
    %399 = arith.divf %397, %398 : vector<2x1xf32>
    %400 = vector.broadcast %399 : vector<2x1xf32> to vector<2x32xf32>
    %401 = arith.subf %393, %400 : vector<2x32xf32>
    %402 = arith.mulf %401, %401 : vector<2x32xf32>
    %cst_208 = arith.constant dense<0.000000e+00> : vector<2xf32>
    %403 = vector.multi_reduction <add>, %402, %cst_208 [1] : vector<2x32xf32> to vector<2xf32>
    %404 = vector.shape_cast %403 : vector<2xf32> to vector<2x1xf32>
    %cst_209 = arith.constant 3.200000e+01 : f32
    %405 = vector.broadcast %cst_209 : f32 to vector<2x1xf32>
    %406 = arith.divf %404, %405 : vector<2x1xf32>
    %cst_210 = arith.constant 9.99999974E-6 : f32
    %407 = vector.broadcast %cst_210 : f32 to vector<2x1xf32>
    %408 = arith.addf %406, %407 : vector<2x1xf32>
    %409 = math.rsqrt %408 : vector<2x1xf32>
    %410 = vector.broadcast %409 : vector<2x1xf32> to vector<2x32xf32>
    %411 = arith.mulf %401, %410 : vector<2x32xf32>
    %412 = vector.broadcast %394 : vector<1x32xf32> to vector<2x32xf32>
    %413 = arith.mulf %411, %412 : vector<2x32xf32>
    %414 = vector.broadcast %395 : vector<1x32xf32> to vector<2x32xf32>
    %415 = arith.addf %413, %414 : vector<2x32xf32>
    %c0_211 = arith.constant 0 : index
    %c0_212 = arith.constant 0 : index
    %416 = vector.load %arg22[%c0_211, %c0_212] : memref<32x4xf32, #tpu.memory_space<vmem>>, vector<32x4xf32>
    %cst_213 = arith.constant dense<0.000000e+00> : vector<2x4xf32>
    %417 = tpu.matmul %415, %416, %cst_213 {dimension_numbers = #tpu.dot_dimension_numbers<[1], [0], [0], [1], [0, 0, 1, 1], [], []>} : vector<2x32xf32>, vector<32x4xf32>, vector<2x4xf32> -> vector<2x4xf32>
    %c0_214 = arith.constant 0 : index
    %c0_215 = arith.constant 0 : index
    %418 = vector.load %arg23[%c0_214, %c0_215] : memref<1x4xf32, #tpu.memory_space<vmem>>, vector<1x4xf32>
    %419 = vector.broadcast %418 : vector<1x4xf32> to vector<2x4xf32>
    %420 = arith.addf %417, %419 : vector<2x4xf32>
    %c0_216 = arith.constant 0 : index
    %c0_217 = arith.constant 0 : index
    %421 = vector.load %arg24[%c0_216, %c0_217] : memref<2x4xf32, #tpu.memory_space<vmem>>, vector<2x4xf32>
    tpu.vector_store %arg24[%c0_216, %c0_217], %420 {strides = array<i32>} : memref<2x4xf32, #tpu.memory_space<vmem>>, vector<2x4xf32>,
    return
  }
  func.func @transform_0(%arg0: i32) -> (i32, i32) {
    %c0_i32 = arith.constant 0 : i32
    %c0_i32_0 = arith.constant 0 : i32
    %c0_i32_1 = arith.constant 0 : i32
    return %c0_i32, %c0_i32_0 : i32, i32
  }
  func.func @transform_1(%arg0: i32) -> (i32, i32) {
    %c0_i32 = arith.constant 0 : i32
    %c0_i32_0 = arith.constant 0 : i32
    %c0_i32_1 = arith.constant 0 : i32
    return %c0_i32, %c0_i32_0 : i32, i32
  }
  func.func @transform_2(%arg0: i32) -> (i32, i32) {
    %c0_i32 = arith.constant 0 : i32
    %c0_i32_0 = arith.constant 0 : i32
    %c0_i32_1 = arith.constant 0 : i32
    return %c0_i32, %c0_i32_0 : i32, i32
  }
  func.func @transform_3(%arg0: i32) -> (i32, i32) {
    %c0_i32 = arith.constant 0 : i32
    %c0_i32_0 = arith.constant 0 : i32
    %c0_i32_1 = arith.constant 0 : i32
    return %c0_i32, %c0_i32_0 : i32, i32
  }
  func.func @transform_4(%arg0: i32) -> (i32, i32) {
    %c0_i32 = arith.constant 0 : i32
    %c0_i32_0 = arith.constant 0 : i32
    %c0_i32_1 = arith.constant 0 : i32
    return %c0_i32, %c0_i32_0 : i32, i32
  }
  func.func @transform_5(%arg0: i32) -> (i32, i32, i32) {
    %c0_i32 = arith.constant 0 : i32
    %c0_i32_0 = arith.constant 0 : i32
    %c0_i32_1 = arith.constant 0 : i32
    %c0_i32_2 = arith.constant 0 : i32
    return %c0_i32, %c0_i32_0, %c0_i32_1 : i32, i32, i32
  }
  func.func @transform_6(%arg0: i32) -> (i32, i32, i32) {
    %c0_i32 = arith.constant 0 : i32
    %c0_i32_0 = arith.constant 0 : i32
    %c0_i32_1 = arith.constant 0 : i32
    %c0_i32_2 = arith.constant 0 : i32
    return %c0_i32, %c0_i32_0, %c0_i32_1 : i32, i32, i32
  }
  func.func @transform_7(%arg0: i32) -> (i32, i32, i32) {
    %c0_i32 = arith.constant 0 : i32
    %c0_i32_0 = arith.constant 0 : i32
    %c0_i32_1 = arith.constant 0 : i32
    %c0_i32_2 = arith.constant 0 : i32
    return %c0_i32, %c0_i32_0, %c0_i32_1 : i32, i32, i32
  }
  func.func @transform_8(%arg0: i32) -> (i32, i32, i32) {
    %c0_i32 = arith.constant 0 : i32
    %c0_i32_0 = arith.constant 0 : i32
    %c0_i32_1 = arith.constant 0 : i32
    %c0_i32_2 = arith.constant 0 : i32
    return %c0_i32, %c0_i32_0, %c0_i32_1 : i32, i32, i32
  }
  func.func @transform_9(%arg0: i32) -> (i32, i32, i32) {
    %c0_i32 = arith.constant 0 : i32
    %c0_i32_0 = arith.constant 0 : i32
    %c0_i32_1 = arith.constant 0 : i32
    %c0_i32_2 = arith.constant 0 : i32
    return %c0_i32, %c0_i32_0, %c0_i32_1 : i32, i32, i32
  }
  func.func @transform_10(%arg0: i32) -> (i32, i32, i32) {
    %c0_i32 = arith.constant 0 : i32
    %c0_i32_0 = arith.constant 0 : i32
    %c0_i32_1 = arith.constant 0 : i32
    %c0_i32_2 = arith.constant 0 : i32
    return %c0_i32, %c0_i32_0, %c0_i32_1 : i32, i32, i32
  }
  func.func @transform_11(%arg0: i32) -> (i32, i32, i32) {
    %c0_i32 = arith.constant 0 : i32
    %c0_i32_0 = arith.constant 0 : i32
    %c0_i32_1 = arith.constant 0 : i32
    %c0_i32_2 = arith.constant 0 : i32
    return %c0_i32, %c0_i32_0, %c0_i32_1 : i32, i32, i32
  }
  func.func @transform_12(%arg0: i32) -> (i32, i32, i32) {
    %c0_i32 = arith.constant 0 : i32
    %c0_i32_0 = arith.constant 0 : i32
    %c0_i32_1 = arith.constant 0 : i32
    %c0_i32_2 = arith.constant 0 : i32
    return %c0_i32, %c0_i32_0, %c0_i32_1 : i32, i32, i32
  }
  func.func @transform_13(%arg0: i32) -> (i32, i32, i32) {
    %c0_i32 = arith.constant 0 : i32
    %c0_i32_0 = arith.constant 0 : i32
    %c0_i32_1 = arith.constant 0 : i32
    %c0_i32_2 = arith.constant 0 : i32
    return %c0_i32, %c0_i32_0, %c0_i32_1 : i32, i32, i32
  }
  func.func @transform_14(%arg0: i32) -> (i32, i32, i32) {
    %c0_i32 = arith.constant 0 : i32
    %c0_i32_0 = arith.constant 0 : i32
    %c0_i32_1 = arith.constant 0 : i32
    %c0_i32_2 = arith.constant 0 : i32
    return %c0_i32, %c0_i32_0, %c0_i32_1 : i32, i32, i32
  }
  func.func @transform_15(%arg0: i32) -> (i32, i32, i32) {
    %c0_i32 = arith.constant 0 : i32
    %c0_i32_0 = arith.constant 0 : i32
    %c0_i32_1 = arith.constant 0 : i32
    %c0_i32_2 = arith.constant 0 : i32
    return %c0_i32, %c0_i32_0, %c0_i32_1 : i32, i32, i32
  }
  func.func @transform_16(%arg0: i32) -> (i32, i32, i32) {
    %c0_i32 = arith.constant 0 : i32
    %c0_i32_0 = arith.constant 0 : i32
    %c0_i32_1 = arith.constant 0 : i32
    %c0_i32_2 = arith.constant 0 : i32
    return %c0_i32, %c0_i32_0, %c0_i32_1 : i32, i32, i32
  }
  func.func @transform_17(%arg0: i32) -> (i32, i32, i32) {
    %c0_i32 = arith.constant 0 : i32
    %c0_i32_0 = arith.constant 0 : i32
    %c0_i32_1 = arith.constant 0 : i32
    %c0_i32_2 = arith.constant 0 : i32
    return %c0_i32, %c0_i32_0, %c0_i32_1 : i32, i32, i32
  }
  func.func @transform_18(%arg0: i32) -> (i32, i32, i32) {
    %c0_i32 = arith.constant 0 : i32
    %c0_i32_0 = arith.constant 0 : i32
    %c0_i32_1 = arith.constant 0 : i32
    %c0_i32_2 = arith.constant 0 : i32
    return %c0_i32, %c0_i32_0, %c0_i32_1 : i32, i32, i32
  }
  func.func @transform_19(%arg0: i32) -> (i32, i32) {
    %c0_i32 = arith.constant 0 : i32
    %c0_i32_0 = arith.constant 0 : i32
    %c0_i32_1 = arith.constant 0 : i32
    return %c0_i32, %c0_i32_0 : i32, i32
  }
  func.func @transform_20(%arg0: i32) -> (i32, i32) {
    %c0_i32 = arith.constant 0 : i32
    %c0_i32_0 = arith.constant 0 : i32
    %c0_i32_1 = arith.constant 0 : i32
    return %c0_i32, %c0_i32_0 : i32, i32
  }
  func.func @transform_21(%arg0: i32) -> (i32, i32) {
    %c0_i32 = arith.constant 0 : i32
    %c0_i32_0 = arith.constant 0 : i32
    %c0_i32_1 = arith.constant 0 : i32
    return %c0_i32, %c0_i32_0 : i32, i32
  }
  func.func @transform_22(%arg0: i32) -> (i32, i32) {
    %c0_i32 = arith.constant 0 : i32
    %c0_i32_0 = arith.constant 0 : i32
    %c0_i32_1 = arith.constant 0 : i32
    return %c0_i32, %c0_i32_0 : i32, i32
  }
  func.func @transform_23(%arg0: i32) -> (i32, i32) {
    %c0_i32 = arith.constant 0 : i32
    %c0_i32_0 = arith.constant 0 : i32
    %c0_i32_1 = arith.constant 0 : i32
    return %c0_i32, %c0_i32_0 : i32, i32
  }
}

</mosaic_0001>

<llo_original>
// kernel: vit_forward.1
$region0: #{vit_forward.1}
  #allocation0 [shape = 'u32[]', space=smem, size = 0x4, offset = 0x4, fixed_abs, tag = 'smem constant byte address 0x4 - core index']
  #allocation1 [shape = 'u32[144,128]{1,0:T(1,128)}', space=vmem, size = 0x12000, scoped, tag = 'internal scratch']
  %s0 = inlined_call_operand.vmem [shape: f32[18,16], index: 0, kind: input, shape index: {}]
  %s1 = inlined_call_operand.hbm [shape: f32[16,32], index: 1, kind: input, shape index: {}]
  %s2 = inlined_call_operand.vmem [shape: f32[18,32], index: 2, kind: input, shape index: {}]
  %s3 = inlined_call_operand.vmem [shape: f32[18,18], index: 3, kind: input, shape index: {}]
  %s4 = inlined_call_operand.hbm [shape: f32[2,18], index: 4, kind: input, shape index: {}]
  %s5 = inlined_call_operand.hbm [shape: f32[3,1,32], index: 5, kind: input, shape index: {}]
  %s6 = inlined_call_operand.hbm [shape: f32[3,1,32], index: 6, kind: input, shape index: {}]
  %s7 = inlined_call_operand.vmem [shape: f32[3,32,96], index: 7, kind: input, shape index: {}]
  %s8 = inlined_call_operand.vmem [shape: f32[3,32,32], index: 8, kind: input, shape index: {}]
  %s9 = inlined_call_operand.hbm [shape: f32[3,1,32], index: 9, kind: input, shape index: {}]
  %s10 = inlined_call_operand.hbm [shape: f32[3,1,32], index: 10, kind: input, shape index: {}]
  %s11 = inlined_call_operand.hbm [shape: f32[3,1,32], index: 11, kind: input, shape index: {}]
  %s12 = inlined_call_operand.hbm [shape: f32[3,32,32], index: 12, kind: input, shape index: {}]
  %s13 = inlined_call_operand.hbm [shape: f32[3,1,32], index: 13, kind: input, shape index: {}]
  %s14 = inlined_call_operand.hbm [shape: f32[3,32,32], index: 14, kind: input, shape index: {}]
  %s15 = inlined_call_operand.hbm [shape: f32[3,1,32], index: 15, kind: input, shape index: {}]
  %s16 = inlined_call_operand.vmem [shape: f32[1,18,18], index: 16, kind: input, shape index: {}]
  %s17 = inlined_call_operand.vmem [shape: f32[1,18,18], index: 17, kind: input, shape index: {}]
  %s18 = inlined_call_operand.vmem [shape: f32[1,18,1], index: 18, kind: input, shape index: {}]
  %s19 = inlined_call_operand.vmem [shape: f32[1,32], index: 19, kind: input, shape index: {}]
  %s20 = inlined_call_operand.hbm [shape: f32[1,32], index: 20, kind: input, shape index: {}]
  %s21 = inlined_call_operand.vmem [shape: f32[32,4], index: 21, kind: input, shape index: {}]
  %s22 = inlined_call_operand.hbm [shape: f32[1,4], index: 22, kind: input, shape index: {}]
  %s23 = inlined_call_operand.hbm [shape: f32[2,4], index: 23, kind: output, shape index: {}]
  %s24 = sld [smem:[#allocation0]]
  $region154: #{vit_forward.1} parent=0
    _
  %s26 = ssub.s32 1, %s24
  %s27 = scalar_select 0, %s26, %s24
  $region1: #{vit_forward.1} parent=0
    #allocation2 [shape = 'u8[8192]{0}', space=vmem, size = 0x2000, scoped, tag = 'input window, operand 1, single buffered']
    #allocation3 [shape = 's32[1]{0}', space=sflag, size = 0x4, scoped, tag = 'scoped memory for vit_forward.1']
    #allocation4 [shape = 's32[1]{0}', space=sflag, size = 0x4, scoped, tag = 'scoped memory for vit_forward.1']
    #allocation5 [shape = 'u8[1024]{0}', space=vmem, size = 0x400, scoped, tag = 'input window, operand 4, single buffered']
    #allocation6 [shape = 's32[1]{0}', space=sflag, size = 0x4, scoped, tag = 'scoped memory for vit_forward.1']
    #allocation7 [shape = 'u8[1536]{0}', space=vmem, size = 0x800, scoped, tag = 'input window, operand 5, single buffered']
    #allocation8 [shape = 'u8[1536]{0}', space=vmem, size = 0x800, scoped, tag = 'input window, operand 6, single buffered']
    #allocation9 [shape = 's32[1]{0}', space=sflag, size = 0x4, scoped, tag = 'scoped memory for vit_forward.1']
    #allocation10 [shape = 'u8[1536]{0}', space=vmem, size = 0x800, scoped, tag = 'input window, operand 9, single buffered']
    #allocation11 [shape = 'u8[1536]{0}', space=vmem, size = 0x800, scoped, tag = 'input window, operand 10, single buffered']
    #allocation12 [shape = 's32[1]{0}', space=sflag, size = 0x4, scoped, tag = 'scoped memory for vit_forward.1']
    #allocation13 [shape = 'u8[1536]{0}', space=vmem, size = 0x800, scoped, tag = 'input window, operand 11, single buffered']
    #allocation14 [shape = 'u8[49152]{0}', space=vmem, size = 0xc000, scoped, tag = 'input window, operand 12, single buffered']
    #allocation15 [shape = 's32[1]{0}', space=sflag, size = 0x4, scoped, tag = 'scoped memory for vit_forward.1']
    #allocation16 [shape = 'u8[1536]{0}', space=vmem, size = 0x800, scoped, tag = 'input window, operand 13, single buffered']
    #allocation17 [shape = 'u8[49152]{0}', space=vmem, size = 0xc000, scoped, tag = 'input window, operand 14, single buffered']
    #allocation18 [shape = 's32[1]{0}', space=sflag, size = 0x4, scoped, tag = 'scoped memory for vit_forward.1']
    #allocation19 [shape = 'u8[1536]{0}', space=vmem, size = 0x800, scoped, tag = 'input window, operand 15, single buffered']
    #allocation20 [shape = 'u8[512]{0}', space=vmem, size = 0x400, scoped, tag = 'input window, operand 20, single buffered']
    #allocation21 [shape = 's32[1]{0}', space=sflag, size = 0x4, scoped, tag = 'scoped memory for vit_forward.1']
    #allocation22 [shape = 'u8[512]{0}', space=vmem, size = 0x400, scoped, tag = 'input window, operand 22, single buffered']
    #allocation23 [shape = 'u8[1024]{0}', space=vmem, size = 0x400, scoped, tag = 'output window, operand 0, single buffered']
    %28 = vsyncpa [#allocation3], 0
    %29 = vsyncpa [#allocation6], 0
    %30 = vsyncpa [#allocation9], 0
    %31 = vsyncpa [#allocation12], 0
    %32 = vsyncpa [#allocation15], 0
    %33 = vsyncpa [#allocation18], 0
    %34 = vsyncpa [#allocation21], 0
    %35 = vsyncpa [#allocation4], 0
    // Predicated region
    $region2: #{vit_forward.1} parent=1 // pred_check
      _
    $region3: #{vit_forward.1} parent=1 // pred_check_branch
      %37 = sbr.rel (0) target = $region5
    $region4: #{vit_forward.1} parent=1 // pred_region
      _
    $region5: #{vit_forward.1} parent=1 // pred_fallthru
      _
    // Predicated region
    $region6: #{vit_forward.1} parent=1 // pred_check
      _
    $region7: #{vit_forward.1} parent=1 // pred_check_branch
      %39 = sbr.rel (0) target = $region9
    $region8: #{vit_forward.1} parent=1 // pred_region
      %s41 = ssub.s32 256, 256
      %42 = vsyncadd [#allocation3], %s41
      %s43 = sshll.u32 [#allocation2], 4
      %s44 = int_to_ptr.vmem [resolvable:$true] %s43
      %49 = dma.hbm_to_vmem [thread:$0]  %s1, 256, %s44, [#allocation3], 128, 128, 8
    $region9: #{vit_forward.1} parent=1 // pred_fallthru
      _
    // Predicated region
    $region10: #{vit_forward.1} parent=1 // pred_check
      _
    $region11: #{vit_forward.1} parent=1 // pred_check_branch
      %51 = sbr.rel (0) target = $region13
    $region12: #{vit_forward.1} parent=1 // pred_region
      _
    $region13: #{vit_forward.1} parent=1 // pred_fallthru
      _
    // Predicated region
    $region14: #{vit_forward.1} parent=1 // pred_check
      _
    $region15: #{vit_forward.1} parent=1 // pred_check_branch
      %53 = sbr.rel (0) target = $region17
    $region16: #{vit_forward.1} parent=1 // pred_region
      _
    $region17: #{vit_forward.1} parent=1 // pred_fallthru
      _
    // Predicated region
    $region18: #{vit_forward.1} parent=1 // pred_check
      _
    $region19: #{vit_forward.1} parent=1 // pred_check_branch
      %55 = sbr.rel (0) target = $region21
    $region20: #{vit_forward.1} parent=1 // pred_region
      %s57 = ssub.s32 32, 32
      %58 = vsyncadd [#allocation6], %s57
      %s60 = sshll.u32 [#allocation5], 4
      %s61 = int_to_ptr.vmem [resolvable:$true] %s60
      %63 = dma.hbm_to_vmem [thread:$0]  %s4, 32, %s61, [#allocation6]
    $region21: #{vit_forward.1} parent=1 // pred_fallthru
      _
    // Predicated region
    $region22: #{vit_forward.1} parent=1 // pred_check
      _
    $region23: #{vit_forward.1} parent=1 // pred_check_branch
      %65 = sbr.rel (0) target = $region25
    $region24: #{vit_forward.1} parent=1 // pred_region
      %s67 = ssub.s32 48, 48
      %68 = vsyncadd [#allocation6], %s67
      %s69 = sshll.u32 [#allocation7], 4
      %s70 = int_to_ptr.vmem [resolvable:$true] %s69
      %75 = dma.hbm_to_vmem [thread:$0]  %s5, 48, %s70, [#allocation6], 16, 16, 1
    $region25: #{vit_forward.1} parent=1 // pred_fallthru
      _
    // Predicated region
    $region26: #{vit_forward.1} parent=1 // pred_check
      _
    $region27: #{vit_forward.1} parent=1 // pred_check_branch
      %77 = sbr.rel (0) target = $region29
    $region28: #{vit_forward.1} parent=1 // pred_region
      %s79 = ssub.s32 48, 48
      %80 = vsyncadd [#allocation9], %s79
      %s81 = sshll.u32 [#allocation8], 4
      %s82 = int_to_ptr.vmem [resolvable:$true] %s81
      %87 = dma.hbm_to_vmem [thread:$0]  %s6, 48, %s82, [#allocation9], 16, 16, 1
    $region29: #{vit_forward.1} parent=1 // pred_fallthru
      _
    // Predicated region
    $region30: #{vit_forward.1} parent=1 // pred_check
      _
    $region31: #{vit_forward.1} parent=1 // pred_check_branch
      %89 = sbr.rel (0) target = $region33
    $region32: #{vit_forward.1} parent=1 // pred_region
      _
    $region33: #{vit_forward.1} parent=1 // pred_fallthru
      _
    // Predicated region
    $region34: #{vit_forward.1} parent=1 // pred_check
      _
    $region35: #{vit_forward.1} parent=1 // pred_check_branch
      %91 = sbr.rel (0) target = $region37
    $region36: #{vit_forward.1} parent=1 // pred_region
      _
    $region37: #{vit_forward.1} parent=1 // pred_fallthru
      _
    // Predicated region
    $region38: #{vit_forward.1} parent=1 // pred_check
      _
    $region39: #{vit_forward.1} parent=1 // pred_check_branch
      %93 = sbr.rel (0) target = $region41
    $region40: #{vit_forward.1} parent=1 // pred_region
      %s95 = ssub.s32 48, 48
      %96 = vsyncadd [#allocation9], %s95
      %s97 = sshll.u32 [#allocation10], 4
      %s98 = int_to_ptr.vmem [resolvable:$true] %s97
      %103 = dma.hbm_to_vmem [thread:$0]  %s9, 48, %s98, [#allocation9], 16, 16, 1
    $region41: #{vit_forward.1} parent=1 // pred_fallthru
      _
    // Predicated region
    $region42: #{vit_forward.1} parent=1 // pred_check
      _
    $region43: #{vit_forward.1} parent=1 // pred_check_branch
      %105 = sbr.rel (0) target = $region45
    $region44: #{vit_forward.1} parent=1 // pred_region
      %s107 = ssub.s32 48, 48
      %108 = vsyncadd [#allocation12], %s107
      %s109 = sshll.u32 [#allocation11], 4
      %s110 = int_to_ptr.vmem [resolvable:$true] %s109
      %115 = dma.hbm_to_vmem [thread:$0]  %s10, 48, %s110, [#allocation12], 16, 16, 1
    $region45: #{vit_forward.1} parent=1 // pred_fallthru
      _
    // Predicated region
    $region46: #{vit_forward.1} parent=1 // pred_check
      _
    $region47: #{vit_forward.1} parent=1 // pred_check_branch
      %117 = sbr.rel (0) target = $region49
    $region48: #{vit_forward.1} parent=1 // pred_region
      %s119 = ssub.s32 48, 48
      %120 = vsyncadd [#allocation12], %s119
      %s121 = sshll.u32 [#allocation13], 4
      %s122 = int_to_ptr.vmem [resolvable:$true] %s121
      %127 = dma.hbm_to_vmem [thread:$0]  %s11, 48, %s122, [#allocation12], 16, 16, 1
    $region49: #{vit_forward.1} parent=1 // pred_fallthru
      _
    // Predicated region
    $region50: #{vit_forward.1} parent=1 // pred_check
      _
    $region51: #{vit_forward.1} parent=1 // pred_check_branch
      %129 = sbr.rel (0) target = $region53
    $region52: #{vit_forward.1} parent=1 // pred_region
      %s131 = ssub.s32 1536, 1536
      %132 = vsyncadd [#allocation15], %s131
      %s133 = sshll.u32 [#allocation14], 4
      %s134 = int_to_ptr.vmem [resolvable:$true] %s133
      %139 = dma.hbm_to_vmem [thread:$0]  %s12, 1536, %s134, [#allocation15], 128, 128, 8
    $region53: #{vit_forward.1} parent=1 // pred_fallthru
      _
    // Predicated region
    $region54: #{vit_forward.1} parent=1 // pred_check
      _
    $region55: #{vit_forward.1} parent=1 // pred_check_branch
      %141 = sbr.rel (0) target = $region57
    $region56: #{vit_forward.1} parent=1 // pred_region
      %s143 = ssub.s32 48, 48
      %144 = vsyncadd [#allocation15], %s143
      %s145 = sshll.u32 [#allocation16], 4
      %s146 = int_to_ptr.vmem [resolvable:$true] %s145
      %151 = dma.hbm_to_vmem [thread:$0]  %s13, 48, %s146, [#allocation15], 16, 16, 1
    $region57: #{vit_forward.1} parent=1 // pred_fallthru
      _
    // Predicated region
    $region58: #{vit_forward.1} parent=1 // pred_check
      _
    $region59: #{vit_forward.1} parent=1 // pred_check_branch
      %153 = sbr.rel (0) target = $region61
    $region60: #{vit_forward.1} parent=1 // pred_region
      %s155 = ssub.s32 1536, 1536
      %156 = vsyncadd [#allocation18], %s155
      %s157 = sshll.u32 [#allocation17], 4
      %s158 = int_to_ptr.vmem [resolvable:$true] %s157
      %163 = dma.hbm_to_vmem [thread:$0]  %s14, 1536, %s158, [#allocation18], 128, 128, 8
    $region61: #{vit_forward.1} parent=1 // pred_fallthru
      _
    // Predicated region
    $region62: #{vit_forward.1} parent=1 // pred_check
      _
    $region63: #{vit_forward.1} parent=1 // pred_check_branch
      %165 = sbr.rel (0) target = $region65
    $region64: #{vit_forward.1} parent=1 // pred_region
      %s167 = ssub.s32 48, 48
      %168 = vsyncadd [#allocation18], %s167
      %s169 = sshll.u32 [#allocation19], 4
      %s170 = int_to_ptr.vmem [resolvable:$true] %s169
      %175 = dma.hbm_to_vmem [thread:$0]  %s15, 48, %s170, [#allocation18], 16, 16, 1
    $region65: #{vit_forward.1} parent=1 // pred_fallthru
      _
    // Predicated region
    $region66: #{vit_forward.1} parent=1 // pred_check
      _
    $region67: #{vit_forward.1} parent=1 // pred_check_branch
      %177 = sbr.rel (0) target = $region69
    $region68: #{vit_forward.1} parent=1 // pred_region
      _
    $region69: #{vit_forward.1} parent=1 // pred_fallthru
      _
    // Predicated region
    $region70: #{vit_forward.1} parent=1 // pred_check
      _
    $region71: #{vit_forward.1} parent=1 // pred_check_branch
      %179 = sbr.rel (0) target = $region73
    $region72: #{vit_forward.1} parent=1 // pred_region
      _
    $region73: #{vit_forward.1} parent=1 // pred_fallthru
      _
    // Predicated region
    $region74: #{vit_forward.1} parent=1 // pred_check
      _
    $region75: #{vit_forward.1} parent=1 // pred_check_branch
      %181 = sbr.rel (0) target = $region77
    $region76: #{vit_forward.1} parent=1 // pred_region
      _
    $region77: #{vit_forward.1} parent=1 // pred_fallthru
      _
    // Predicated region
    $region78: #{vit_forward.1} parent=1 // pred_check
      _
    $region79: #{vit_forward.1} parent=1 // pred_check_branch
      %183 = sbr.rel (0) target = $region81
    $region80: #{vit_forward.1} parent=1 // pred_region
      _
    $region81: #{vit_forward.1} parent=1 // pred_fallthru
      _
    // Predicated region
    $region82: #{vit_forward.1} parent=1 // pred_check
      _
    $region83: #{vit_forward.1} parent=1 // pred_check_branch
      %185 = sbr.rel (0) target = $region85
    $region84: #{vit_forward.1} parent=1 // pred_region
      %s187 = ssub.s32 16, 16
      %188 = vsyncadd [#allocation21], %s187
      %s190 = sshll.u32 [#allocation20], 4
      %s191 = int_to_ptr.vmem [resolvable:$true] %s190
      %193 = dma.hbm_to_vmem [thread:$0]  %s20, 16, %s191, [#allocation21]
    $region85: #{vit_forward.1} parent=1 // pred_fallthru
      _
    // Predicated region
    $region86: #{vit_forward.1} parent=1 // pred_check
      _
    $region87: #{vit_forward.1} parent=1 // pred_check_branch
      %195 = sbr.rel (0) target = $region89
    $region88: #{vit_forward.1} parent=1 // pred_region
      _
    $region89: #{vit_forward.1} parent=1 // pred_fallthru
      _
    // Predicated region
    $region90: #{vit_forward.1} parent=1 // pred_check
      _
    $region91: #{vit_forward.1} parent=1 // pred_check_branch
      %197 = sbr.rel (0) target = $region93
    $region92: #{vit_forward.1} parent=1 // pred_region
      %s199 = ssub.s32 16, 16
      %200 = vsyncadd [#allocation21], %s199
      %s202 = sshll.u32 [#allocation22], 4
      %s203 = int_to_ptr.vmem [resolvable:$true] %s202
      %205 = dma.hbm_to_vmem [thread:$0]  %s22, 16, %s203, [#allocation21]
    $region93: #{vit_forward.1} parent=1 // pred_fallthru
      _
    // Predicated region
    $region94: #{vit_forward.1} parent=1 // pred_check
      _
    $region95: #{vit_forward.1} parent=1 // pred_check_branch
      %207 = sbr.rel (0) target = $region97
    $region96: #{vit_forward.1} parent=1 // pred_region
      %208 = dma.done [#allocation3], 256
    $region97: #{vit_forward.1} parent=1 // pred_fallthru
      _
    // Predicated region
    $region98: #{vit_forward.1} parent=1 // pred_check
      _
    $region99: #{vit_forward.1} parent=1 // pred_check_branch
      %210 = sbr.rel (0) target = $region101
    $region100: #{vit_forward.1} parent=1 // pred_region
      %211 = dma.done [#allocation6], 32
    $region101: #{vit_forward.1} parent=1 // pred_fallthru
      _
    // Predicated region
    $region102: #{vit_forward.1} parent=1 // pred_check
      _
    $region103: #{vit_forward.1} parent=1 // pred_check_branch
      %213 = sbr.rel (0) target = $region105
    $region104: #{vit_forward.1} parent=1 // pred_region
      %214 = dma.done [#allocation6], 48
    $region105: #{vit_forward.1} parent=1 // pred_fallthru
      _
    // Predicated region
    $region106: #{vit_forward.1} parent=1 // pred_check
      _
    $region107: #{vit_forward.1} parent=1 // pred_check_branch
      %216 = sbr.rel (0) target = $region109
    $region108: #{vit_forward.1} parent=1 // pred_region
      %217 = dma.done [#allocation9], 48
    $region109: #{vit_forward.1} parent=1 // pred_fallthru
      _
    // Predicated region
    $region110: #{vit_forward.1} parent=1 // pred_check
      _
    $region111: #{vit_forward.1} parent=1 // pred_check_branch
      %219 = sbr.rel (0) target = $region113
    $region112: #{vit_forward.1} parent=1 // pred_region
      %220 = dma.done [#allocation9], 48
    $region113: #{vit_forward.1} parent=1 // pred_fallthru
      _
    // Predicated region
    $region114: #{vit_forward.1} parent=1 // pred_check
      _
    $region115: #{vit_forward.1} parent=1 // pred_check_branch
      %222 = sbr.rel (0) target = $region117
    $region116: #{vit_forward.1} parent=1 // pred_region
      %223 = dma.done [#allocation12], 48
    $region117: #{vit_forward.1} parent=1 // pred_fallthru
      _
    // Predicated region
    $region118: #{vit_forward.1} parent=1 // pred_check
      _
    $region119: #{vit_forward.1} parent=1 // pred_check_branch
      %225 = sbr.rel (0) target = $region121
    $region120: #{vit_forward.1} parent=1 // pred_region
      %226 = dma.done [#allocation12], 48
    $region121: #{vit_forward.1} parent=1 // pred_fallthru
      _
    // Predicated region
    $region122: #{vit_forward.1} parent=1 // pred_check
      _
    $region123: #{vit_forward.1} parent=1 // pred_check_branch
      %228 = sbr.rel (0) target = $region125
    $region124: #{vit_forward.1} parent=1 // pred_region
      %229 = dma.done [#allocation15], 1536
    $region125: #{vit_forward.1} parent=1 // pred_fallthru
      _
    // Predicated region
    $region126: #{vit_forward.1} parent=1 // pred_check
      _
    $region127: #{vit_forward.1} parent=1 // pred_check_branch
      %231 = sbr.rel (0) target = $region129
    $region128: #{vit_forward.1} parent=1 // pred_region
      %232 = dma.done [#allocation15], 48
    $region129: #{vit_forward.1} parent=1 // pred_fallthru
      _
    // Predicated region
    $region130: #{vit_forward.1} parent=1 // pred_check
      _
    $region131: #{vit_forward.1} parent=1 // pred_check_branch
      %234 = sbr.rel (0) target = $region133
    $region132: #{vit_forward.1} parent=1 // pred_region
      %235 = dma.done [#allocation18], 1536
    $region133: #{vit_forward.1} parent=1 // pred_fallthru
      _
    // Predicated region
    $region134: #{vit_forward.1} parent=1 // pred_check
      _
    $region135: #{vit_forward.1} parent=1 // pred_check_branch
      %237 = sbr.rel (0) target = $region137
    $region136: #{vit_forward.1} parent=1 // pred_region
      %238 = dma.done [#allocation18], 48
    $region137: #{vit_forward.1} parent=1 // pred_fallthru
      _
    // Predicated region
    $region138: #{vit_forward.1} parent=1 // pred_check
      _
    $region139: #{vit_forward.1} parent=1 // pred_check_branch
      %240 = sbr.rel (0) target = $region141
    $region140: #{vit_forward.1} parent=1 // pred_region
      %241 = dma.done [#allocation21], 16
    $region141: #{vit_forward.1} parent=1 // pred_fallthru
      _
    // Predicated region
    $region142: #{vit_forward.1} parent=1 // pred_check
      _
    $region143: #{vit_forward.1} parent=1 // pred_check_branch
      %243 = sbr.rel (0) target = $region145
    $region144: #{vit_forward.1} parent=1 // pred_region
      %244 = dma.done [#allocation21], 16
    $region145: #{vit_forward.1} parent=1 // pred_fallthru
      _
    %v245 = vld [vmem:[%s0] sm:$0xff]
    %v246 = vld [vmem:[%s0 + $0x8] sm:$0xff]
    %v247 = vld [vmem:[%s0 + $0x10] sm:$0x3]
    %v248 = vld [vmem:[#allocation2] sm:$0xff]
    %v249 = vld [vmem:[#allocation2 + $0x8] sm:$0xff]
    %v250 = vld [vmem:[%s2] sm:$0xff]
    %v251 = vld [vmem:[%s2 + $0x8] sm:$0xff]
    %v252 = vld [vmem:[%s2 + $0x10] sm:$0x3]
    %vm253 = vcmask 130048
    %v255 = vsel %vm253, %v245, 0
    %v258 = vsel %vm253, %v246, 0
    %v261 = vsel %vm253, %v247, 0
    %263 = vmatprep.subr.mxu0 0.0
    %264 = vmatpush1.msra.mxu0 0.0
    %265 = vmatprep.subr.mxu0 0.0
    %266 = vmatpush1.msra.mxu0 0.0
    %267 = vmatprep.subr.mxu0 0.0
    %268 = vmatpush1.msra.mxu0 0.0
    %269 = vmatprep.subr.mxu0 0.0
    %270 = vmatpush1.msra.mxu0 0.0
    %271 = vmatprep.subr.mxu0 0.0
    %272 = vmatpush1.msra.mxu0 0.0
    %273 = vmatprep.subr.mxu0 0.0
    %274 = vmatpush1.msra.mxu0 0.0
    %275 = vmatprep.subr.mxu0 0.0
    %276 = vmatpush1.msra.mxu0 0.0
    %277 = vmatprep.subr.mxu0 0.0
    %278 = vmatpush1.msra.mxu0 0.0
    %279 = vmatprep.subr.mxu0 0.0
    %280 = vmatpush1.msra.mxu0 0.0
    %281 = vmatprep.subr.mxu0 0.0
    %282 = vmatpush1.msra.mxu0 0.0
    %283 = vmatprep.subr.mxu0 0.0
    %284 = vmatpush1.msra.mxu0 0.0
    %285 = vmatprep.subr.mxu0 0.0
    %286 = vmatpush1.msra.mxu0 0.0
    %287 = vmatprep.subr.mxu0 0.0
    %288 = vmatpush1.msra.mxu0 0.0
    %289 = vmatprep.subr.mxu0 0.0
    %290 = vmatpush1.msra.mxu0 0.0
    %291 = vmatprep.subr.mxu0 0.0
    %292 = vmatpush1.msra.mxu0 %v249
    %293 = vmatprep.subr.mxu0 0.0
    %294 = vmatpush1.msra.mxu0 %v248
    %295 = vmatprep.subr.mxu0 0.0
    %296 = vmatpush2.msra.mxu0 0.0
    %297 = vmatprep.subr.mxu0 0.0
    %298 = vmatpush2.msra.mxu0 0.0
    %299 = vmatprep.subr.mxu0 0.0
    %300 = vmatpush2.msra.mxu0 0.0
    %301 = vmatprep.subr.mxu0 0.0
    %302 = vmatpush2.msra.mxu0 0.0
    %303 = vmatprep.subr.mxu0 0.0
    %304 = vmatpush2.msra.mxu0 0.0
    %305 = vmatprep.subr.mxu0 0.0
    %306 = vmatpush2.msra.mxu0 0.0
    %307 = vmatprep.subr.mxu0 0.0
    %308 = vmatpush2.msra.mxu0 0.0
    %309 = vmatprep.subr.mxu0 0.0
    %310 = vmatpush2.msra.mxu0 0.0
    %311 = vmatprep.subr.mxu0 0.0
    %312 = vmatpush2.msra.mxu0 0.0
    %313 = vmatprep.subr.mxu0 0.0
    %314 = vmatpush2.msra.mxu0 0.0
    %315 = vmatprep.subr.mxu0 0.0
    %316 = vmatpush2.msra.mxu0 0.0
    %317 = vmatprep.subr.mxu0 0.0
    %318 = vmatpush2.msra.mxu0 0.0
    %319 = vmatprep.subr.mxu0 0.0
    %320 = vmatpush2.msra.mxu0 0.0
    %321 = vmatprep.subr.mxu0 0.0
    %322 = vmatpush2.msra.mxu0 0.0
    %323 = vmatprep.subr.mxu0 0.0
    %324 = vmatpush2.msra.mxu0 0.0
    %325 = vmatprep.subr.mxu0 0.0
    %326 = vmatpush2.msra.mxu0 0.0
    %327 = vmatprep.mubr.f32.mxu0 0.0
    %328 = vmatmul.mubr.f32.gmra.mxu0 %v255
    %v329 = vpop.f32.mrf.mxu0
    %v330 = vadd.f32 %v250, %v329
    %v331 = vpop.f32.mrf.mxu0
    %332 = vmatprep.mubr.f32.mxu0 0.0
    %333 = vmatmul.mubr.f32.gmra.mxu0 %v258
    %v334 = vpop.f32.mrf.mxu0
    %v335 = vadd.f32 %v251, %v334
    %v336 = vpop.f32.mrf.mxu0
    %337 = vmatprep.mubr.f32.mxu0 0.0
    %338 = vmatmul.mubr.f32.gmra.mxu0 %v261
    %v339 = vpop.f32.mrf.mxu0
    %v340 = vadd.f32 %v252, %v339
    %v341 = vpop.f32.mrf.mxu0
    %342 = vdwg.mxu0
    %v343 = vld [vmem:[%s3] sm:$0xff]
    %v344 = vld [vmem:[%s3 + $0x8] sm:$0xff]
    %v345 = vld [vmem:[%s3 + $0x10] sm:$0x3]
    %v346 = vld [vmem:[#allocation7] sm:$0x1]
    %v347 = vld [vmem:[#allocation8] sm:$0x1]
    %vm348 = vcmask 261120
    %v349 = vsel %vm348, %v330, 0.0
    %350 = vadd.xlane.f32.xlu0 %v349
    %v351 = vpop.xlane.xlu0 %350
    %v352 = vsel %vm348, %v335, 0.0
    %353 = vadd.xlane.f32.xlu0 %v352
    %v354 = vpop.xlane.xlu0 %353
    %vm355 = vcmask 254976
    %v356 = vsel %vm355, %v340, 0.0
    %357 = vadd.xlane.f32.xlu0 %v356
    %v358 = vpop.xlane.xlu0 %357
    %v359 = vrcp.pop 32.0
    %v360 = vmul.f32 %v351, %v359
    %v361 = vmul.f32 %v354, %v359
    %v362 = vmul.f32 %v358, %v359
    %v363 = vsub.f32 %v330, %v360
    %v364 = vsub.f32 %v335, %v361
    %v365 = vsub.f32 %v340, %v362
    %v366 = vmul.f32 %v363, %v363
    %v367 = vmul.f32 %v364, %v364
    %v368 = vmul.f32 %v365, %v365
    %v369 = vsel %vm348, %v366, 0.0
    %370 = vadd.xlane.f32.xlu0 %v369
    %v371 = vpop.xlane.xlu0 %370
    %v372 = vsel %vm348, %v367, 0.0
    %373 = vadd.xlane.f32.xlu0 %v372
    %v374 = vpop.xlane.xlu0 %373
    %v375 = vsel %vm355, %v368, 0.0
    %376 = vadd.xlane.f32.xlu0 %v375
    %v377 = vpop.xlane.xlu0 %376
    %v378 = vmul.f32 %v371, %v359
    %v379 = vmul.f32 %v374, %v359
    %v380 = vmul.f32 %v377, %v359
    %v381 = vadd.f32 %v378, 1e-05
    %v382 = vadd.f32 %v379, 1e-05
    %v383 = vadd.f32 %v380, 1e-05
    %v384 = vrsqrt.pop %v381
    %v385 = vrsqrt.pop %v382
    %v386 = vrsqrt.pop %v383
    %v387 = vmul.f32 %v363, %v384
    %v388 = vmul.f32 %v364, %v385
    %v389 = vmul.f32 %v365, %v386
    %v391 = vlaneseq
    %v392 = vshrl.u32 %v391, 7
    %v393 = vsub.s32 0, %v392
    %v394 = vrot.slane %v346, %v393
    %v396 = vmul.f32 %v387, %v394
    %v397 = vmul.f32 %v388, %v394
    %v398 = vmul.f32 %v389, %v394
    %v400 = vlaneseq
    %v401 = vshrl.u32 %v400, 7
    %v402 = vsub.s32 0, %v401
    %v403 = vrot.slane %v347, %v402
    %v405 = vadd.f32 %v396, %v403
    %v406 = vadd.f32 %v397, %v403
    %v407 = vadd.f32 %v398, %v403
    %v408 = vld [vmem:[%s7] sm:$0xff]
    %v409 = vld [vmem:[%s7 + $0x8] sm:$0xff]
    %v410 = vld [vmem:[%s7 + $0x10] sm:$0xff]
    %v411 = vld [vmem:[%s7 + $0x18] sm:$0xff]
    %v413 = vsel %vm348, %v405, 0
    %v416 = vsel %vm348, %v406, 0
    %v419 = vsel %vm348, %v407, 0
    %421 = vmatprep.subr.mxu0 0.0
    %422 = vmatpush1.msra.mxu0 0.0
    %423 = vmatprep.subr.mxu0 0.0
    %424 = vmatpush1.msra.mxu0 0.0
    %425 = vmatprep.subr.mxu0 0.0
    %426 = vmatpush1.msra.mxu0 0.0
    %427 = vmatprep.subr.mxu0 0.0
    %428 = vmatpush1.msra.mxu0 0.0
    %429 = vmatprep.subr.mxu0 0.0
    %430 = vmatpush1.msra.mxu0 0.0
    %431 = vmatprep.subr.mxu0 0.0
    %432 = vmatpush1.msra.mxu0 0.0
    %433 = vmatprep.subr.mxu0 0.0
    %434 = vmatpush1.msra.mxu0 0.0
    %435 = vmatprep.subr.mxu0 0.0
    %436 = vmatpush1.msra.mxu0 0.0
    %437 = vmatprep.subr.mxu0 0.0
    %438 = vmatpush1.msra.mxu0 0.0
    %439 = vmatprep.subr.mxu0 0.0
    %440 = vmatpush1.msra.mxu0 0.0
    %441 = vmatprep.subr.mxu0 0.0
    %442 = vmatpush1.msra.mxu0 0.0
    %443 = vmatprep.subr.mxu0 0.0
    %444 = vmatpush1.msra.mxu0 0.0
    %445 = vmatprep.subr.mxu0 0.0
    %446 = vmatpush1.msra.mxu0 %v411
    %447 = vmatprep.subr.mxu0 0.0
    %448 = vmatpush1.msra.mxu0 %v410
    %449 = vmatprep.subr.mxu0 0.0
    %450 = vmatpush1.msra.mxu0 %v409
    %451 = vmatprep.subr.mxu0 0.0
    %452 = vmatpush1.msra.mxu0 %v408
    %453 = vmatprep.subr.mxu0 0.0
    %454 = vmatpush2.msra.mxu0 0.0
    %455 = vmatprep.subr.mxu0 0.0
    %456 = vmatpush2.msra.mxu0 0.0
    %457 = vmatprep.subr.mxu0 0.0
    %458 = vmatpush2.msra.mxu0 0.0
    %459 = vmatprep.subr.mxu0 0.0
    %460 = vmatpush2.msra.mxu0 0.0
    %461 = vmatprep.subr.mxu0 0.0
    %462 = vmatpush2.msra.mxu0 0.0
    %463 = vmatprep.subr.mxu0 0.0
    %464 = vmatpush2.msra.mxu0 0.0
    %465 = vmatprep.subr.mxu0 0.0
    %466 = vmatpush2.msra.mxu0 0.0
    %467 = vmatprep.subr.mxu0 0.0
    %468 = vmatpush2.msra.mxu0 0.0
    %469 = vmatprep.subr.mxu0 0.0
    %470 = vmatpush2.msra.mxu0 0.0
    %471 = vmatprep.subr.mxu0 0.0
    %472 = vmatpush2.msra.mxu0 0.0
    %473 = vmatprep.subr.mxu0 0.0
    %474 = vmatpush2.msra.mxu0 0.0
    %475 = vmatprep.subr.mxu0 0.0
    %476 = vmatpush2.msra.mxu0 0.0
    %477 = vmatprep.subr.mxu0 0.0
    %478 = vmatpush2.msra.mxu0 0.0
    %479 = vmatprep.subr.mxu0 0.0
    %480 = vmatpush2.msra.mxu0 0.0
    %481 = vmatprep.subr.mxu0 0.0
    %482 = vmatpush2.msra.mxu0 0.0
    %483 = vmatprep.subr.mxu0 0.0
    %484 = vmatpush2.msra.mxu0 0.0
    %485 = vmatprep.mubr.f32.mxu0 0.0
    %486 = vmatmul.mubr.f32.gmra.mxu0 %v413
    %v487 = vpop.f32.mrf.mxu0
    %v488 = vadd.f32 0.0, %v487
    %v489 = vpop.f32.mrf.mxu0
    %490 = vmatprep.mubr.f32.mxu0 0.0
    %491 = vmatmul.mubr.f32.gmra.mxu0 %v416
    %v492 = vpop.f32.mrf.mxu0
    %v493 = vadd.f32 0.0, %v492
    %v494 = vpop.f32.mrf.mxu0
    %495 = vmatprep.mubr.f32.mxu0 0.0
    %496 = vmatmul.mubr.f32.gmra.mxu0 %v419
    %v497 = vpop.f32.mrf.mxu0
    %v498 = vadd.f32 0.0, %v497
    %v499 = vpop.f32.mrf.mxu0
    %500 = vdwg.mxu0
    %v501 = vld [vmem:[%s8] sm:$0xff]
    %v502 = vld [vmem:[%s8 + $0x8] sm:$0xff]
    %v503 = vld [vmem:[%s8 + $0x10] sm:$0xff]
    %v504 = vld [vmem:[%s8 + $0x18] sm:$0xff]
    %508 = vrot.lane.b32.xlu0 %v488, 96
    %v509 = vpop.permute.xlu0 %508
    %510 = vrot.lane.b32.xlu0 %v493, 96
    %v511 = vpop.permute.xlu0 %510
    %512 = vrot.lane.b32.xlu0 %v498, 96
    %v513 = vpop.permute.xlu0 %512
    %v514 = vsel %vm253, %v488, 0
    %v516 = vsel %vm253, %v493, 0
    %v518 = vsel %vm253, %v498, 0
    %v520 = vsel %vm253, %v509, 0
    %v522 = vsel %vm253, %v511, 0
    %v524 = vsel %vm253, %v513, 0
    %526 = vmatprep.subr.mxu0 0.0
    %527 = vmatpush1.xpose.msra.mxu0 0.0
    %528 = vmatprep.subr.mxu0 0.0
    %529 = vmatpush1.xpose.msra.mxu0 0.0
    %530 = vmatprep.subr.mxu0 0.0
    %531 = vmatpush1.xpose.msra.mxu0 0.0
    %532 = vmatprep.subr.mxu0 0.0
    %533 = vmatpush1.xpose.msra.mxu0 0.0
    %534 = vmatprep.subr.mxu0 0.0
    %535 = vmatpush1.xpose.msra.mxu0 0.0
    %536 = vmatprep.subr.mxu0 0.0
    %537 = vmatpush1.xpose.msra.mxu0 0.0
    %538 = vmatprep.subr.mxu0 0.0
    %539 = vmatpush1.xpose.msra.mxu0 0.0
    %540 = vmatprep.subr.mxu0 0.0
    %541 = vmatpush1.xpose.msra.mxu0 0.0
    %542 = vmatprep.subr.mxu0 0.0
    %543 = vmatpush1.xpose.msra.mxu0 0.0
    %544 = vmatprep.subr.mxu0 0.0
    %545 = vmatpush1.xpose.msra.mxu0 0.0
    %546 = vmatprep.subr.mxu0 0.0
    %547 = vmatpush1.xpose.msra.mxu0 0.0
    %548 = vmatprep.subr.mxu0 0.0
    %549 = vmatpush1.xpose.msra.mxu0 0.0
    %550 = vmatprep.subr.mxu0 0.0
    %551 = vmatpush1.xpose.msra.mxu0 0.0
    %552 = vmatprep.subr.mxu0 0.0
    %553 = vmatpush1.xpose.msra.mxu0 %v524
    %554 = vmatprep.subr.mxu0 0.0
    %555 = vmatpush1.xpose.msra.mxu0 %v522
    %556 = vmatprep.subr.mxu0 0.0
    %557 = vmatpush1.xpose.msra.mxu0 %v520
    %558 = vmatprep.subr.mxu0 0.0
    %559 = vmatpush2.xpose.msra.mxu0 0.0
    %560 = vmatprep.subr.mxu0 0.0
    %561 = vmatpush2.xpose.msra.mxu0 0.0
    %562 = vmatprep.subr.mxu0 0.0
    %563 = vmatpush2.xpose.msra.mxu0 0.0
    %564 = vmatprep.subr.mxu0 0.0
    %565 = vmatpush2.xpose.msra.mxu0 0.0
    %566 = vmatprep.subr.mxu0 0.0
    %567 = vmatpush2.xpose.msra.mxu0 0.0
    %568 = vmatprep.subr.mxu0 0.0
    %569 = vmatpush2.xpose.msra.mxu0 0.0
    %570 = vmatprep.subr.mxu0 0.0
    %571 = vmatpush2.xpose.msra.mxu0 0.0
    %572 = vmatprep.subr.mxu0 0.0
    %573 = vmatpush2.xpose.msra.mxu0 0.0
    %574 = vmatprep.subr.mxu0 0.0
    %575 = vmatpush2.xpose.msra.mxu0 0.0
    %576 = vmatprep.subr.mxu0 0.0
    %577 = vmatpush2.xpose.msra.mxu0 0.0
    %578 = vmatprep.subr.mxu0 0.0
    %579 = vmatpush2.xpose.msra.mxu0 0.0
    %580 = vmatprep.subr.mxu0 0.0
    %581 = vmatpush2.xpose.msra.mxu0 0.0
    %582 = vmatprep.subr.mxu0 0.0
    %583 = vmatpush2.xpose.msra.mxu0 0.0
    %584 = vmatprep.subr.mxu0 0.0
    %585 = vmatpush2.xpose.msra.mxu0 0.0
    %586 = vmatprep.subr.mxu0 0.0
    %587 = vmatpush2.xpose.msra.mxu0 0.0
    %588 = vmatprep.subr.mxu0 0.0
    %589 = vmatpush2.xpose.msra.mxu0 0.0
    %590 = vmatprep.mubr.f32.mxu0 0.0
    %591 = vmatmul.mubr.f32.gmra.mxu0 %v514
    %v592 = vpop.f32.mrf.mxu0
    %v593 = vadd.f32 %v343, %v592
    %v594 = vpop.f32.mrf.mxu0
    %595 = vmatprep.mubr.f32.mxu0 0.0
    %596 = vmatmul.mubr.f32.gmra.mxu0 %v516
    %v597 = vpop.f32.mrf.mxu0
    %v598 = vadd.f32 %v344, %v597
    %v599 = vpop.f32.mrf.mxu0
    %600 = vmatprep.mubr.f32.mxu0 0.0
    %601 = vmatmul.mubr.f32.gmra.mxu0 %v518
    %v602 = vpop.f32.mrf.mxu0
    %v603 = vadd.f32 %v345, %v602
    %v604 = vpop.f32.mrf.mxu0
    %605 = vdwg.mxu0
    %vm606 = vcmask 146432
    %v607 = vsel %vm606, %v593, -inf
    %608 = vmax.xlane.f32.xlu0 %v607
    %v609 = vpop.xlane.xlu0 %608
    %v610 = vsel %vm606, %v598, -inf
    %611 = vmax.xlane.f32.xlu0 %v610
    %v612 = vpop.xlane.xlu0 %611
    %vm613 = vcmask 140288
    %v614 = vsel %vm613, %v603, -inf
    %615 = vmax.xlane.f32.xlu0 %v614
    %v616 = vpop.xlane.xlu0 %615
    %v617 = vsub.f32 %v593, %v609
    %v618 = vsub.f32 %v598, %v612
    %v619 = vsub.f32 %v603, %v616
    %v620 = vmul.f32 %v617, 1.442695
    %v621 = vpow.pop %v620
    %v622 = vmul.f32 %v618, 1.442695
    %v623 = vpow.pop %v622
    %v624 = vmul.f32 %v619, 1.442695
    %v625 = vpow.pop %v624
    %v626 = vsel %vm606, %v621, 0.0
    %627 = vadd.xlane.f32.xlu0 %v626
    %v628 = vpop.xlane.xlu0 %627
    %v629 = vsel %vm606, %v623, 0.0
    %630 = vadd.xlane.f32.xlu0 %v629
    %v631 = vpop.xlane.xlu0 %630
    %v632 = vsel %vm613, %v625, 0.0
    %633 = vadd.xlane.f32.xlu0 %v632
    %v634 = vpop.xlane.xlu0 %633
    %v635 = vrcp.pop %v628
    %v636 = vrcp.pop %v631
    %v637 = vrcp.pop %v634
    %v638 = vmul.f32 %v621, %v635
    %v639 = vmul.f32 %v623, %v636
    %v640 = vmul.f32 %v625, %v637
    %641 = vrot.lane.b32.xlu0 %v488, 64
    %v642 = vpop.permute.xlu0 %641
    %643 = vrot.lane.b32.xlu0 %v493, 64
    %v644 = vpop.permute.xlu0 %643
    %645 = vrot.lane.b32.xlu0 %v498, 64
    %v646 = vpop.permute.xlu0 %645
    %v650 = vsel %vm606, %v638, 0
    %v653 = vsel %vm606, %v639, 0
    %v656 = vsel %vm606, %v640, 0
    %vm658 = vcmask 1041408
    %v659 = vsel %vm658, %v646, 0
    %661 = vmatprep.subr.mxu0 0.0
    %662 = vmatpush1.msra.mxu0 0.0
    %663 = vmatprep.subr.mxu0 0.0
    %664 = vmatpush1.msra.mxu0 0.0
    %665 = vmatprep.subr.mxu0 0.0
    %666 = vmatpush1.msra.mxu0 0.0
    %667 = vmatprep.subr.mxu0 0.0
    %668 = vmatpush1.msra.mxu0 0.0
    %669 = vmatprep.subr.mxu0 0.0
    %670 = vmatpush1.msra.mxu0 0.0
    %671 = vmatprep.subr.mxu0 0.0
    %672 = vmatpush1.msra.mxu0 0.0
    %673 = vmatprep.subr.mxu0 0.0
    %674 = vmatpush1.msra.mxu0 0.0
    %675 = vmatprep.subr.mxu0 0.0
    %676 = vmatpush1.msra.mxu0 0.0
    %677 = vmatprep.subr.mxu0 0.0
    %678 = vmatpush1.msra.mxu0 0.0
    %679 = vmatprep.subr.mxu0 0.0
    %680 = vmatpush1.msra.mxu0 0.0
    %681 = vmatprep.subr.mxu0 0.0
    %682 = vmatpush1.msra.mxu0 0.0
    %683 = vmatprep.subr.mxu0 0.0
    %684 = vmatpush1.msra.mxu0 0.0
    %685 = vmatprep.subr.mxu0 0.0
    %686 = vmatpush1.msra.mxu0 0.0
    %687 = vmatprep.subr.mxu0 0.0
    %688 = vmatpush1.msra.mxu0 %v659
    %689 = vmatprep.subr.mxu0 0.0
    %690 = vmatpush1.msra.mxu0 %v644
    %691 = vmatprep.subr.mxu0 0.0
    %692 = vmatpush1.msra.mxu0 %v642
    %693 = vmatprep.subr.mxu0 0.0
    %694 = vmatpush2.msra.mxu0 0.0
    %695 = vmatprep.subr.mxu0 0.0
    %696 = vmatpush2.msra.mxu0 0.0
    %697 = vmatprep.subr.mxu0 0.0
    %698 = vmatpush2.msra.mxu0 0.0
    %699 = vmatprep.subr.mxu0 0.0
    %700 = vmatpush2.msra.mxu0 0.0
    %701 = vmatprep.subr.mxu0 0.0
    %702 = vmatpush2.msra.mxu0 0.0
    %703 = vmatprep.subr.mxu0 0.0
    %704 = vmatpush2.msra.mxu0 0.0
    %705 = vmatprep.subr.mxu0 0.0
    %706 = vmatpush2.msra.mxu0 0.0
    %707 = vmatprep.subr.mxu0 0.0
    %708 = vmatpush2.msra.mxu0 0.0
    %709 = vmatprep.subr.mxu0 0.0
    %710 = vmatpush2.msra.mxu0 0.0
    %711 = vmatprep.subr.mxu0 0.0
    %712 = vmatpush2.msra.mxu0 0.0
    %713 = vmatprep.subr.mxu0 0.0
    %714 = vmatpush2.msra.mxu0 0.0
    %715 = vmatprep.subr.mxu0 0.0
    %716 = vmatpush2.msra.mxu0 0.0
    %717 = vmatprep.subr.mxu0 0.0
    %718 = vmatpush2.msra.mxu0 0.0
    %719 = vmatprep.subr.mxu0 0.0
    %720 = vmatpush2.msra.mxu0 0.0
    %721 = vmatprep.subr.mxu0 0.0
    %722 = vmatpush2.msra.mxu0 0.0
    %723 = vmatprep.subr.mxu0 0.0
    %724 = vmatpush2.msra.mxu0 0.0
    %725 = vmatprep.mubr.f32.mxu0 0.0
    %726 = vmatmul.mubr.f32.gmra.mxu0 %v650
    %v727 = vpop.f32.mrf.mxu0
    %v728 = vadd.f32 0.0, %v727
    %v729 = vpop.f32.mrf.mxu0
    %730 = vmatprep.mubr.f32.mxu0 0.0
    %731 = vmatmul.mubr.f32.gmra.mxu0 %v653
    %v732 = vpop.f32.mrf.mxu0
    %v733 = vadd.f32 0.0, %v732
    %v734 = vpop.f32.mrf.mxu0
    %735 = vmatprep.mubr.f32.mxu0 0.0
    %736 = vmatmul.mubr.f32.gmra.mxu0 %v656
    %v737 = vpop.f32.mrf.mxu0
    %v738 = vadd.f32 0.0, %v737
    %v739 = vpop.f32.mrf.mxu0
    %740 = vdwg.mxu0
    %741 = vrot.lane.b32.xlu0 %v488, 112
    %v742 = vpop.permute.xlu0 %741
    %743 = vrot.lane.b32.xlu0 %v493, 112
    %v744 = vpop.permute.xlu0 %743
    %745 = vrot.lane.b32.xlu0 %v498, 112
    %v746 = vpop.permute.xlu0 %745
    %747 = vrot.lane.b32.xlu0 %v488, 80
    %v748 = vpop.permute.xlu0 %747
    %749 = vrot.lane.b32.xlu0 %v493, 80
    %v750 = vpop.permute.xlu0 %749
    %751 = vrot.lane.b32.xlu0 %v498, 80
    %v752 = vpop.permute.xlu0 %751
    %v753 = vsel %vm253, %v742, 0
    %v755 = vsel %vm253, %v744, 0
    %v757 = vsel %vm253, %v746, 0
    %v759 = vsel %vm253, %v748, 0
    %v761 = vsel %vm253, %v750, 0
    %v763 = vsel %vm253, %v752, 0
    %765 = vmatprep.subr.mxu0 0.0
    %766 = vmatpush1.xpose.msra.mxu0 0.0
    %767 = vmatprep.subr.mxu0 0.0
    %768 = vmatpush1.xpose.msra.mxu0 0.0
    %769 = vmatprep.subr.mxu0 0.0
    %770 = vmatpush1.xpose.msra.mxu0 0.0
    %771 = vmatprep.subr.mxu0 0.0
    %772 = vmatpush1.xpose.msra.mxu0 0.0
    %773 = vmatprep.subr.mxu0 0.0
    %774 = vmatpush1.xpose.msra.mxu0 0.0
    %775 = vmatprep.subr.mxu0 0.0
    %776 = vmatpush1.xpose.msra.mxu0 0.0
    %777 = vmatprep.subr.mxu0 0.0
    %778 = vmatpush1.xpose.msra.mxu0 0.0
    %779 = vmatprep.subr.mxu0 0.0
    %780 = vmatpush1.xpose.msra.mxu0 0.0
    %781 = vmatprep.subr.mxu0 0.0
    %782 = vmatpush1.xpose.msra.mxu0 0.0
    %783 = vmatprep.subr.mxu0 0.0
    %784 = vmatpush1.xpose.msra.mxu0 0.0
    %785 = vmatprep.subr.mxu0 0.0
    %786 = vmatpush1.xpose.msra.mxu0 0.0
    %787 = vmatprep.subr.mxu0 0.0
    %788 = vmatpush1.xpose.msra.mxu0 0.0
    %789 = vmatprep.subr.mxu0 0.0
    %790 = vmatpush1.xpose.msra.mxu0 0.0
    %791 = vmatprep.subr.mxu0 0.0
    %792 = vmatpush1.xpose.msra.mxu0 %v763
    %793 = vmatprep.subr.mxu0 0.0
    %794 = vmatpush1.xpose.msra.mxu0 %v761
    %795 = vmatprep.subr.mxu0 0.0
    %796 = vmatpush1.xpose.msra.mxu0 %v759
    %797 = vmatprep.subr.mxu0 0.0
    %798 = vmatpush2.xpose.msra.mxu0 0.0
    %799 = vmatprep.subr.mxu0 0.0
    %800 = vmatpush2.xpose.msra.mxu0 0.0
    %801 = vmatprep.subr.mxu0 0.0
    %802 = vmatpush2.xpose.msra.mxu0 0.0
    %803 = vmatprep.subr.mxu0 0.0
    %804 = vmatpush2.xpose.msra.mxu0 0.0
    %805 = vmatprep.subr.mxu0 0.0
    %806 = vmatpush2.xpose.msra.mxu0 0.0
    %807 = vmatprep.subr.mxu0 0.0
    %808 = vmatpush2.xpose.msra.mxu0 0.0
    %809 = vmatprep.subr.mxu0 0.0
    %810 = vmatpush2.xpose.msra.mxu0 0.0
    %811 = vmatprep.subr.mxu0 0.0
    %812 = vmatpush2.xpose.msra.mxu0 0.0
    %813 = vmatprep.subr.mxu0 0.0
    %814 = vmatpush2.xpose.msra.mxu0 0.0
    %815 = vmatprep.subr.mxu0 0.0
    %816 = vmatpush2.xpose.msra.mxu0 0.0
    %817 = vmatprep.subr.mxu0 0.0
    %818 = vmatpush2.xpose.msra.mxu0 0.0
    %819 = vmatprep.subr.mxu0 0.0
    %820 = vmatpush2.xpose.msra.mxu0 0.0
    %821 = vmatprep.subr.mxu0 0.0
    %822 = vmatpush2.xpose.msra.mxu0 0.0
    %823 = vmatprep.subr.mxu0 0.0
    %824 = vmatpush2.xpose.msra.mxu0 0.0
    %825 = vmatprep.subr.mxu0 0.0
    %826 = vmatpush2.xpose.msra.mxu0 0.0
    %827 = vmatprep.subr.mxu0 0.0
    %828 = vmatpush2.xpose.msra.mxu0 0.0
    %829 = vmatprep.mubr.f32.mxu0 0.0
    %830 = vmatmul.mubr.f32.gmra.mxu0 %v753
    %v831 = vpop.f32.mrf.mxu0
    %v832 = vadd.f32 %v343, %v831
    %v833 = vpop.f32.mrf.mxu0
    %834 = vmatprep.mubr.f32.mxu0 0.0
    %835 = vmatmul.mubr.f32.gmra.mxu0 %v755
    %v836 = vpop.f32.mrf.mxu0
    %v837 = vadd.f32 %v344, %v836
    %v838 = vpop.f32.mrf.mxu0
    %839 = vmatprep.mubr.f32.mxu0 0.0
    %840 = vmatmul.mubr.f32.gmra.mxu0 %v757
    %v841 = vpop.f32.mrf.mxu0
    %v842 = vadd.f32 %v345, %v841
    %v843 = vpop.f32.mrf.mxu0
    %844 = vdwg.mxu0
    %v845 = vsel %vm606, %v832, -inf
    %846 = vmax.xlane.f32.xlu0 %v845
    %v847 = vpop.xlane.xlu0 %846
    %v848 = vsel %vm606, %v837, -inf
    %849 = vmax.xlane.f32.xlu0 %v848
    %v850 = vpop.xlane.xlu0 %849
    %v851 = vsel %vm613, %v842, -inf
    %852 = vmax.xlane.f32.xlu0 %v851
    %v853 = vpop.xlane.xlu0 %852
    %v854 = vsub.f32 %v832, %v847
    %v855 = vsub.f32 %v837, %v850
    %v856 = vsub.f32 %v842, %v853
    %v857 = vmul.f32 %v854, 1.442695
    %v858 = vpow.pop %v857
    %v859 = vmul.f32 %v855, 1.442695
    %v860 = vpow.pop %v859
    %v861 = vmul.f32 %v856, 1.442695
    %v862 = vpow.pop %v861
    %v863 = vsel %vm606, %v858, 0.0
    %864 = vadd.xlane.f32.xlu0 %v863
    %v865 = vpop.xlane.xlu0 %864
    %v866 = vsel %vm606, %v860, 0.0
    %867 = vadd.xlane.f32.xlu0 %v866
    %v868 = vpop.xlane.xlu0 %867
    %v869 = vsel %vm613, %v862, 0.0
    %870 = vadd.xlane.f32.xlu0 %v869
    %v871 = vpop.xlane.xlu0 %870
    %v872 = vrcp.pop %v865
    %v873 = vrcp.pop %v868
    %v874 = vrcp.pop %v871
    %v875 = vmul.f32 %v858, %v872
    %v876 = vmul.f32 %v860, %v873
    %v877 = vmul.f32 %v862, %v874
    %878 = vrot.lane.b32.xlu0 %v488, 48
    %v879 = vpop.permute.xlu0 %878
    %880 = vrot.lane.b32.xlu0 %v493, 48
    %v881 = vpop.permute.xlu0 %880
    %882 = vrot.lane.b32.xlu0 %v498, 48
    %v883 = vpop.permute.xlu0 %882
    %v887 = vsel %vm606, %v875, 0
    %v890 = vsel %vm606, %v876, 0
    %v893 = vsel %vm606, %v877, 0
    %v895 = vsel %vm658, %v883, 0
    %897 = vmatprep.subr.mxu0 0.0
    %898 = vmatpush1.msra.mxu0 0.0
    %899 = vmatprep.subr.mxu0 0.0
    %900 = vmatpush1.msra.mxu0 0.0
    %901 = vmatprep.subr.mxu0 0.0
    %902 = vmatpush1.msra.mxu0 0.0
    %903 = vmatprep.subr.mxu0 0.0
    %904 = vmatpush1.msra.mxu0 0.0
    %905 = vmatprep.subr.mxu0 0.0
    %906 = vmatpush1.msra.mxu0 0.0
    %907 = vmatprep.subr.mxu0 0.0
    %908 = vmatpush1.msra.mxu0 0.0
    %909 = vmatprep.subr.mxu0 0.0
    %910 = vmatpush1.msra.mxu0 0.0
    %911 = vmatprep.subr.mxu0 0.0
    %912 = vmatpush1.msra.mxu0 0.0
    %913 = vmatprep.subr.mxu0 0.0
    %914 = vmatpush1.msra.mxu0 0.0
    %915 = vmatprep.subr.mxu0 0.0
    %916 = vmatpush1.msra.mxu0 0.0
    %917 = vmatprep.subr.mxu0 0.0
    %918 = vmatpush1.msra.mxu0 0.0
    %919 = vmatprep.subr.mxu0 0.0
    %920 = vmatpush1.msra.mxu0 0.0
    %921 = vmatprep.subr.mxu0 0.0
    %922 = vmatpush1.msra.mxu0 0.0
    %923 = vmatprep.subr.mxu0 0.0
    %924 = vmatpush1.msra.mxu0 %v895
    %925 = vmatprep.subr.mxu0 0.0
    %926 = vmatpush1.msra.mxu0 %v881
    %927 = vmatprep.subr.mxu0 0.0
    %928 = vmatpush1.msra.mxu0 %v879
    %929 = vmatprep.subr.mxu0 0.0
    %930 = vmatpush2.msra.mxu0 0.0
    %931 = vmatprep.subr.mxu0 0.0
    %932 = vmatpush2.msra.mxu0 0.0
    %933 = vmatprep.subr.mxu0 0.0
    %934 = vmatpush2.msra.mxu0 0.0
    %935 = vmatprep.subr.mxu0 0.0
    %936 = vmatpush2.msra.mxu0 0.0
    %937 = vmatprep.subr.mxu0 0.0
    %938 = vmatpush2.msra.mxu0 0.0
    %939 = vmatprep.subr.mxu0 0.0
    %940 = vmatpush2.msra.mxu0 0.0
    %941 = vmatprep.subr.mxu0 0.0
    %942 = vmatpush2.msra.mxu0 0.0
    %943 = vmatprep.subr.mxu0 0.0
    %944 = vmatpush2.msra.mxu0 0.0
    %945 = vmatprep.subr.mxu0 0.0
    %946 = vmatpush2.msra.mxu0 0.0
    %947 = vmatprep.subr.mxu0 0.0
    %948 = vmatpush2.msra.mxu0 0.0
    %949 = vmatprep.subr.mxu0 0.0
    %950 = vmatpush2.msra.mxu0 0.0
    %951 = vmatprep.subr.mxu0 0.0
    %952 = vmatpush2.msra.mxu0 0.0
    %953 = vmatprep.subr.mxu0 0.0
    %954 = vmatpush2.msra.mxu0 0.0
    %955 = vmatprep.subr.mxu0 0.0
    %956 = vmatpush2.msra.mxu0 0.0
    %957 = vmatprep.subr.mxu0 0.0
    %958 = vmatpush2.msra.mxu0 0.0
    %959 = vmatprep.subr.mxu0 0.0
    %960 = vmatpush2.msra.mxu0 0.0
    %961 = vmatprep.mubr.f32.mxu0 0.0
    %962 = vmatmul.mubr.f32.gmra.mxu0 %v887
    %v963 = vpop.f32.mrf.mxu0
    %v964 = vadd.f32 0.0, %v963
    %v965 = vpop.f32.mrf.mxu0
    %966 = vmatprep.mubr.f32.mxu0 0.0
    %967 = vmatmul.mubr.f32.gmra.mxu0 %v890
    %v968 = vpop.f32.mrf.mxu0
    %v969 = vadd.f32 0.0, %v968
    %v970 = vpop.f32.mrf.mxu0
    %971 = vmatprep.mubr.f32.mxu0 0.0
    %972 = vmatmul.mubr.f32.gmra.mxu0 %v893
    %v973 = vpop.f32.mrf.mxu0
    %v974 = vadd.f32 0.0, %v973
    %v975 = vpop.f32.mrf.mxu0
    %976 = vdwg.mxu0
    %v978 = vsel %vm253, %v964, 0
    %v981 = vsel %vm253, %v969, 0
    %v984 = vsel %vm253, %v974, 0
    %986 = vmatprep.subr.mxu0 0.0
    %987 = vmatpush1.msra.mxu0 0.0
    %988 = vmatprep.subr.mxu0 0.0
    %989 = vmatpush1.msra.mxu0 0.0
    %990 = vmatprep.subr.mxu0 0.0
    %991 = vmatpush1.msra.mxu0 0.0
    %992 = vmatprep.subr.mxu0 0.0
    %993 = vmatpush1.msra.mxu0 0.0
    %994 = vmatprep.subr.mxu0 0.0
    %995 = vmatpush1.msra.mxu0 0.0
    %996 = vmatprep.subr.mxu0 0.0
    %997 = vmatpush1.msra.mxu0 0.0
    %998 = vmatprep.subr.mxu0 0.0
    %999 = vmatpush1.msra.mxu0 0.0
    %1000 = vmatprep.subr.mxu0 0.0
    %1001 = vmatpush1.msra.mxu0 0.0
    %1002 = vmatprep.subr.mxu0 0.0
    %1003 = vmatpush1.msra.mxu0 0.0
    %1004 = vmatprep.subr.mxu0 0.0
    %1005 = vmatpush1.msra.mxu0 0.0
    %1006 = vmatprep.subr.mxu0 0.0
    %1007 = vmatpush1.msra.mxu0 0.0
    %1008 = vmatprep.subr.mxu0 0.0
    %1009 = vmatpush1.msra.mxu0 0.0
    %1010 = vmatprep.subr.mxu0 0.0
    %1011 = vmatpush1.msra.mxu0 0.0
    %1012 = vmatprep.subr.mxu0 0.0
    %1013 = vmatpush1.msra.mxu0 0.0
    %1014 = vmatprep.subr.mxu0 0.0
    %1015 = vmatpush1.msra.mxu0 %v504
    %1016 = vmatprep.subr.mxu0 0.0
    %1017 = vmatpush1.msra.mxu0 %v503
    %1018 = vmatprep.subr.mxu0 0.0
    %1019 = vmatpush2.msra.mxu0 0.0
    %1020 = vmatprep.subr.mxu0 0.0
    %1021 = vmatpush2.msra.mxu0 0.0
    %1022 = vmatprep.subr.mxu0 0.0
    %1023 = vmatpush2.msra.mxu0 0.0
    %1024 = vmatprep.subr.mxu0 0.0
    %1025 = vmatpush2.msra.mxu0 0.0
    %1026 = vmatprep.subr.mxu0 0.0
    %1027 = vmatpush2.msra.mxu0 0.0
    %1028 = vmatprep.subr.mxu0 0.0
    %1029 = vmatpush2.msra.mxu0 0.0
    %1030 = vmatprep.subr.mxu0 0.0
    %1031 = vmatpush2.msra.mxu0 0.0
    %1032 = vmatprep.subr.mxu0 0.0
    %1033 = vmatpush2.msra.mxu0 0.0
    %1034 = vmatprep.subr.mxu0 0.0
    %1035 = vmatpush2.msra.mxu0 0.0
    %1036 = vmatprep.subr.mxu0 0.0
    %1037 = vmatpush2.msra.mxu0 0.0
    %1038 = vmatprep.subr.mxu0 0.0
    %1039 = vmatpush2.msra.mxu0 0.0
    %1040 = vmatprep.subr.mxu0 0.0
    %1041 = vmatpush2.msra.mxu0 0.0
    %1042 = vmatprep.subr.mxu0 0.0
    %1043 = vmatpush2.msra.mxu0 0.0
    %1044 = vmatprep.subr.mxu0 0.0
    %1045 = vmatpush2.msra.mxu0 0.0
    %1046 = vmatprep.subr.mxu0 0.0
    %1047 = vmatpush2.msra.mxu0 0.0
    %1048 = vmatprep.subr.mxu0 0.0
    %1049 = vmatpush2.msra.mxu0 0.0
    %1050 = vmatprep.mubr.f32.mxu0 0.0
    %1051 = vmatmul.mubr.f32.gmra.mxu0 %v978
    %v1052 = vpop.f32.mrf.mxu0
    %v1053 = vadd.f32 0.0, %v1052
    %v1054 = vpop.f32.mrf.mxu0
    %1055 = vmatprep.mubr.f32.mxu0 0.0
    %1056 = vmatmul.mubr.f32.gmra.mxu0 %v981
    %v1057 = vpop.f32.mrf.mxu0
    %v1058 = vadd.f32 0.0, %v1057
    %v1059 = vpop.f32.mrf.mxu0
    %1060 = vmatprep.mubr.f32.mxu0 0.0
    %1061 = vmatmul.mubr.f32.gmra.mxu0 %v984
    %v1062 = vpop.f32.mrf.mxu0
    %v1063 = vadd.f32 0.0, %v1062
    %v1064 = vpop.f32.mrf.mxu0
    %1065 = vdwg.mxu0
    %v1067 = vsel %vm253, %v728, 0
    %v1070 = vsel %vm253, %v733, 0
    %v1073 = vsel %vm253, %v738, 0
    %1075 = vmatprep.subr.mxu0 0.0
    %1076 = vmatpush1.msra.mxu0 0.0
    %1077 = vmatprep.subr.mxu0 0.0
    %1078 = vmatpush1.msra.mxu0 0.0
    %1079 = vmatprep.subr.mxu0 0.0
    %1080 = vmatpush1.msra.mxu0 0.0
    %1081 = vmatprep.subr.mxu0 0.0
    %1082 = vmatpush1.msra.mxu0 0.0
    %1083 = vmatprep.subr.mxu0 0.0
    %1084 = vmatpush1.msra.mxu0 0.0
    %1085 = vmatprep.subr.mxu0 0.0
    %1086 = vmatpush1.msra.mxu0 0.0
    %1087 = vmatprep.subr.mxu0 0.0
    %1088 = vmatpush1.msra.mxu0 0.0
    %1089 = vmatprep.subr.mxu0 0.0
    %1090 = vmatpush1.msra.mxu0 0.0
    %1091 = vmatprep.subr.mxu0 0.0
    %1092 = vmatpush1.msra.mxu0 0.0
    %1093 = vmatprep.subr.mxu0 0.0
    %1094 = vmatpush1.msra.mxu0 0.0
    %1095 = vmatprep.subr.mxu0 0.0
    %1096 = vmatpush1.msra.mxu0 0.0
    %1097 = vmatprep.subr.mxu0 0.0
    %1098 = vmatpush1.msra.mxu0 0.0
    %1099 = vmatprep.subr.mxu0 0.0
    %1100 = vmatpush1.msra.mxu0 0.0
    %1101 = vmatprep.subr.mxu0 0.0
    %1102 = vmatpush1.msra.mxu0 0.0
    %1103 = vmatprep.subr.mxu0 0.0
    %1104 = vmatpush1.msra.mxu0 %v502
    %1105 = vmatprep.subr.mxu0 0.0
    %1106 = vmatpush1.msra.mxu0 %v501
    %1107 = vmatprep.subr.mxu0 0.0
    %1108 = vmatpush2.msra.mxu0 0.0
    %1109 = vmatprep.subr.mxu0 0.0
    %1110 = vmatpush2.msra.mxu0 0.0
    %1111 = vmatprep.subr.mxu0 0.0
    %1112 = vmatpush2.msra.mxu0 0.0
    %1113 = vmatprep.subr.mxu0 0.0
    %1114 = vmatpush2.msra.mxu0 0.0
    %1115 = vmatprep.subr.mxu0 0.0
    %1116 = vmatpush2.msra.mxu0 0.0
    %1117 = vmatprep.subr.mxu0 0.0
    %1118 = vmatpush2.msra.mxu0 0.0
    %1119 = vmatprep.subr.mxu0 0.0
    %1120 = vmatpush2.msra.mxu0 0.0
    %1121 = vmatprep.subr.mxu0 0.0
    %1122 = vmatpush2.msra.mxu0 0.0
    %1123 = vmatprep.subr.mxu0 0.0
    %1124 = vmatpush2.msra.mxu0 0.0
    %1125 = vmatprep.subr.mxu0 0.0
    %1126 = vmatpush2.msra.mxu0 0.0
    %1127 = vmatprep.subr.mxu0 0.0
    %1128 = vmatpush2.msra.mxu0 0.0
    %1129 = vmatprep.subr.mxu0 0.0
    %1130 = vmatpush2.msra.mxu0 0.0
    %1131 = vmatprep.subr.mxu0 0.0
    %1132 = vmatpush2.msra.mxu0 0.0
    %1133 = vmatprep.subr.mxu0 0.0
    %1134 = vmatpush2.msra.mxu0 0.0
    %1135 = vmatprep.subr.mxu0 0.0
    %1136 = vmatpush2.msra.mxu0 0.0
    %1137 = vmatprep.subr.mxu0 0.0
    %1138 = vmatpush2.msra.mxu0 0.0
    %1139 = vmatprep.mubr.f32.mxu0 0.0
    %1140 = vmatmul.mubr.f32.gmra.mxu0 %v1067
    %v1141 = vpop.f32.mrf.mxu0
    %v1142 = vadd.f32 %v1053, %v1141
    %v1143 = vpop.f32.mrf.mxu0
    %1144 = vmatprep.mubr.f32.mxu0 0.0
    %1145 = vmatmul.mubr.f32.gmra.mxu0 %v1070
    %v1146 = vpop.f32.mrf.mxu0
    %v1147 = vadd.f32 %v1058, %v1146
    %v1148 = vpop.f32.mrf.mxu0
    %1149 = vmatprep.mubr.f32.mxu0 0.0
    %1150 = vmatmul.mubr.f32.gmra.mxu0 %v1073
    %v1151 = vpop.f32.mrf.mxu0
    %v1152 = vadd.f32 %v1063, %v1151
    %v1153 = vpop.f32.mrf.mxu0
    %1154 = vdwg.mxu0
    %v1155 = vadd.f32 %v330, %v1142
    %v1156 = vadd.f32 %v335, %v1147
    %v1157 = vadd.f32 %v340, %v1152
    %v1158 = vld [vmem:[#allocation10] sm:$0x1]
    %v1160 = vlaneseq
    %v1161 = vshrl.u32 %v1160, 7
    %v1162 = vsub.s32 0, %v1161
    %v1163 = vrot.slane %v1158, %v1162
    %v1165 = vadd.f32 %v1155, %v1163
    %v1166 = vadd.f32 %v1156, %v1163
    %v1167 = vadd.f32 %v1157, %v1163
    %v1168 = vld [vmem:[#allocation11] sm:$0x1]
    %v1169 = vld [vmem:[#allocation13] sm:$0x1]
    %v1170 = vsel %vm348, %v1165, 0.0
    %1171 = vadd.xlane.f32.xlu0 %v1170
    %v1172 = vpop.xlane.xlu0 %1171
    %v1173 = vsel %vm348, %v1166, 0.0
    %1174 = vadd.xlane.f32.xlu0 %v1173
    %v1175 = vpop.xlane.xlu0 %1174
    %v1176 = vsel %vm355, %v1167, 0.0
    %1177 = vadd.xlane.f32.xlu0 %v1176
    %v1178 = vpop.xlane.xlu0 %1177
    %v1179 = vmul.f32 %v1172, %v359
    %v1180 = vmul.f32 %v1175, %v359
    %v1181 = vmul.f32 %v1178, %v359
    %v1182 = vsub.f32 %v1165, %v1179
    %v1183 = vsub.f32 %v1166, %v1180
    %v1184 = vsub.f32 %v1167, %v1181
    %v1185 = vmul.f32 %v1182, %v1182
    %v1186 = vmul.f32 %v1183, %v1183
    %v1187 = vmul.f32 %v1184, %v1184
    %v1188 = vsel %vm348, %v1185, 0.0
    %1189 = vadd.xlane.f32.xlu0 %v1188
    %v1190 = vpop.xlane.xlu0 %1189
    %v1191 = vsel %vm348, %v1186, 0.0
    %1192 = vadd.xlane.f32.xlu0 %v1191
    %v1193 = vpop.xlane.xlu0 %1192
    %v1194 = vsel %vm355, %v1187, 0.0
    %1195 = vadd.xlane.f32.xlu0 %v1194
    %v1196 = vpop.xlane.xlu0 %1195
    %v1197 = vmul.f32 %v1190, %v359
    %v1198 = vmul.f32 %v1193, %v359
    %v1199 = vmul.f32 %v1196, %v359
    %v1200 = vadd.f32 %v1197, 1e-05
    %v1201 = vadd.f32 %v1198, 1e-05
    %v1202 = vadd.f32 %v1199, 1e-05
    %v1203 = vrsqrt.pop %v1200
    %v1204 = vrsqrt.pop %v1201
    %v1205 = vrsqrt.pop %v1202
    %v1206 = vmul.f32 %v1182, %v1203
    %v1207 = vmul.f32 %v1183, %v1204
    %v1208 = vmul.f32 %v1184, %v1205
    %v1210 = vlaneseq
    %v1211 = vshrl.u32 %v1210, 7
    %v1212 = vsub.s32 0, %v1211
    %v1213 = vrot.slane %v1168, %v1212
    %v1215 = vmul.f32 %v1206, %v1213
    %v1216 = vmul.f32 %v1207, %v1213
    %v1217 = vmul.f32 %v1208, %v1213
    %v1219 = vlaneseq
    %v1220 = vshrl.u32 %v1219, 7
    %v1221 = vsub.s32 0, %v1220
    %v1222 = vrot.slane %v1169, %v1221
    %v1224 = vadd.f32 %v1215, %v1222
    %v1225 = vadd.f32 %v1216, %v1222
    %v1226 = vadd.f32 %v1217, %v1222
    %v1227 = vld [vmem:[#allocation14] sm:$0xff]
    %v1228 = vld [vmem:[#allocation14 + $0x8] sm:$0xff]
    %v1229 = vld [vmem:[#allocation14 + $0x10] sm:$0xff]
    %v1230 = vld [vmem:[#allocation14 + $0x18] sm:$0xff]
    %v1231 = vld [vmem:[#allocation16] sm:$0x1]
    %v1233 = vlaneseq
    %v1234 = vshrl.u32 %v1233, 7
    %v1235 = vsub.s32 0, %v1234
    %v1236 = vrot.slane %v1231, %v1235
    %v1239 = vsel %vm348, %v1224, 0
    %v1242 = vsel %vm348, %v1225, 0
    %v1245 = vsel %vm348, %v1226, 0
    %1247 = vmatprep.subr.mxu0 0.0
    %1248 = vmatpush1.msra.mxu0 0.0
    %1249 = vmatprep.subr.mxu0 0.0
    %1250 = vmatpush1.msra.mxu0 0.0
    %1251 = vmatprep.subr.mxu0 0.0
    %1252 = vmatpush1.msra.mxu0 0.0
    %1253 = vmatprep.subr.mxu0 0.0
    %1254 = vmatpush1.msra.mxu0 0.0
    %1255 = vmatprep.subr.mxu0 0.0
    %1256 = vmatpush1.msra.mxu0 0.0
    %1257 = vmatprep.subr.mxu0 0.0
    %1258 = vmatpush1.msra.mxu0 0.0
    %1259 = vmatprep.subr.mxu0 0.0
    %1260 = vmatpush1.msra.mxu0 0.0
    %1261 = vmatprep.subr.mxu0 0.0
    %1262 = vmatpush1.msra.mxu0 0.0
    %1263 = vmatprep.subr.mxu0 0.0
    %1264 = vmatpush1.msra.mxu0 0.0
    %1265 = vmatprep.subr.mxu0 0.0
    %1266 = vmatpush1.msra.mxu0 0.0
    %1267 = vmatprep.subr.mxu0 0.0
    %1268 = vmatpush1.msra.mxu0 0.0
    %1269 = vmatprep.subr.mxu0 0.0
    %1270 = vmatpush1.msra.mxu0 0.0
    %1271 = vmatprep.subr.mxu0 0.0
    %1272 = vmatpush1.msra.mxu0 %v1230
    %1273 = vmatprep.subr.mxu0 0.0
    %1274 = vmatpush1.msra.mxu0 %v1229
    %1275 = vmatprep.subr.mxu0 0.0
    %1276 = vmatpush1.msra.mxu0 %v1228
    %1277 = vmatprep.subr.mxu0 0.0
    %1278 = vmatpush1.msra.mxu0 %v1227
    %1279 = vmatprep.subr.mxu0 0.0
    %1280 = vmatpush2.msra.mxu0 0.0
    %1281 = vmatprep.subr.mxu0 0.0
    %1282 = vmatpush2.msra.mxu0 0.0
    %1283 = vmatprep.subr.mxu0 0.0
    %1284 = vmatpush2.msra.mxu0 0.0
    %1285 = vmatprep.subr.mxu0 0.0
    %1286 = vmatpush2.msra.mxu0 0.0
    %1287 = vmatprep.subr.mxu0 0.0
    %1288 = vmatpush2.msra.mxu0 0.0
    %1289 = vmatprep.subr.mxu0 0.0
    %1290 = vmatpush2.msra.mxu0 0.0
    %1291 = vmatprep.subr.mxu0 0.0
    %1292 = vmatpush2.msra.mxu0 0.0
    %1293 = vmatprep.subr.mxu0 0.0
    %1294 = vmatpush2.msra.mxu0 0.0
    %1295 = vmatprep.subr.mxu0 0.0
    %1296 = vmatpush2.msra.mxu0 0.0
    %1297 = vmatprep.subr.mxu0 0.0
    %1298 = vmatpush2.msra.mxu0 0.0
    %1299 = vmatprep.subr.mxu0 0.0
    %1300 = vmatpush2.msra.mxu0 0.0
    %1301 = vmatprep.subr.mxu0 0.0
    %1302 = vmatpush2.msra.mxu0 0.0
    %1303 = vmatprep.subr.mxu0 0.0
    %1304 = vmatpush2.msra.mxu0 0.0
    %1305 = vmatprep.subr.mxu0 0.0
    %1306 = vmatpush2.msra.mxu0 0.0
    %1307 = vmatprep.subr.mxu0 0.0
    %1308 = vmatpush2.msra.mxu0 0.0
    %1309 = vmatprep.subr.mxu0 0.0
    %1310 = vmatpush2.msra.mxu0 0.0
    %1311 = vmatprep.mubr.f32.mxu0 0.0
    %1312 = vmatmul.mubr.f32.gmra.mxu0 %v1239
    %v1313 = vpop.f32.mrf.mxu0
    %v1314 = vadd.f32 %v1236, %v1313
    %v1315 = vpop.f32.mrf.mxu0
    %1316 = vmatprep.mubr.f32.mxu0 0.0
    %1317 = vmatmul.mubr.f32.gmra.mxu0 %v1242
    %v1318 = vpop.f32.mrf.mxu0
    %v1319 = vadd.f32 %v1236, %v1318
    %v1320 = vpop.f32.mrf.mxu0
    %1321 = vmatprep.mubr.f32.mxu0 0.0
    %1322 = vmatmul.mubr.f32.gmra.mxu0 %v1245
    %v1323 = vpop.f32.mrf.mxu0
    %v1324 = vadd.f32 %v1236, %v1323
    %v1325 = vpop.f32.mrf.mxu0
    %1326 = vdwg.mxu0
    %v1327 = vmul.f32 %v1314, 0.5
    %v1328 = vmul.f32 %v1319, 0.5
    %v1329 = vmul.f32 %v1324, 0.5
    %v1330 = vmul.f32 %v1314, 0.044715
    %v1331 = vmul.f32 %v1319, 0.044715
    %v1332 = vmul.f32 %v1324, 0.044715
    %v1333 = vmul.f32 %v1330, %v1314
    %v1334 = vmul.f32 %v1331, %v1319
    %v1335 = vmul.f32 %v1332, %v1324
    %v1336 = vmul.f32 %v1333, %v1314
    %v1337 = vmul.f32 %v1334, %v1319
    %v1338 = vmul.f32 %v1335, %v1324
    %v1339 = vadd.f32 %v1314, %v1336
    %v1340 = vadd.f32 %v1319, %v1337
    %v1341 = vadd.f32 %v1324, %v1338
    %v1342 = vmul.f32 %v1339, 0.7978846
    %v1343 = vmul.f32 %v1340, 0.7978846
    %v1344 = vmul.f32 %v1341, 0.7978846
    %v1345 = vtanh.pop %v1342
    %v1346 = vtanh.pop %v1343
    %v1347 = vtanh.pop %v1344
    %v1348 = vadd.f32 %v1345, 1.0
    %v1349 = vadd.f32 %v1346, 1.0
    %v1350 = vadd.f32 %v1347, 1.0
    %v1351 = vmul.f32 %v1327, %v1348
    %v1352 = vmul.f32 %v1328, %v1349
    %v1353 = vmul.f32 %v1329, %v1350
    %v1354 = vld [vmem:[#allocation17] sm:$0xff]
    %v1355 = vld [vmem:[#allocation17 + $0x8] sm:$0xff]
    %v1356 = vld [vmem:[#allocation17 + $0x10] sm:$0xff]
    %v1357 = vld [vmem:[#allocation17 + $0x18] sm:$0xff]
    %v1359 = vsel %vm348, %v1351, 0
    %v1362 = vsel %vm348, %v1352, 0
    %v1365 = vsel %vm348, %v1353, 0
    %1367 = vmatprep.subr.mxu0 0.0
    %1368 = vmatpush1.msra.mxu0 0.0
    %1369 = vmatprep.subr.mxu0 0.0
    %1370 = vmatpush1.msra.mxu0 0.0
    %1371 = vmatprep.subr.mxu0 0.0
    %1372 = vmatpush1.msra.mxu0 0.0
    %1373 = vmatprep.subr.mxu0 0.0
    %1374 = vmatpush1.msra.mxu0 0.0
    %1375 = vmatprep.subr.mxu0 0.0
    %1376 = vmatpush1.msra.mxu0 0.0
    %1377 = vmatprep.subr.mxu0 0.0
    %1378 = vmatpush1.msra.mxu0 0.0
    %1379 = vmatprep.subr.mxu0 0.0
    %1380 = vmatpush1.msra.mxu0 0.0
    %1381 = vmatprep.subr.mxu0 0.0
    %1382 = vmatpush1.msra.mxu0 0.0
    %1383 = vmatprep.subr.mxu0 0.0
    %1384 = vmatpush1.msra.mxu0 0.0
    %1385 = vmatprep.subr.mxu0 0.0
    %1386 = vmatpush1.msra.mxu0 0.0
    %1387 = vmatprep.subr.mxu0 0.0
    %1388 = vmatpush1.msra.mxu0 0.0
    %1389 = vmatprep.subr.mxu0 0.0
    %1390 = vmatpush1.msra.mxu0 0.0
    %1391 = vmatprep.subr.mxu0 0.0
    %1392 = vmatpush1.msra.mxu0 %v1357
    %1393 = vmatprep.subr.mxu0 0.0
    %1394 = vmatpush1.msra.mxu0 %v1356
    %1395 = vmatprep.subr.mxu0 0.0
    %1396 = vmatpush1.msra.mxu0 %v1355
    %1397 = vmatprep.subr.mxu0 0.0
    %1398 = vmatpush1.msra.mxu0 %v1354
    %1399 = vmatprep.subr.mxu0 0.0
    %1400 = vmatpush2.msra.mxu0 0.0
    %1401 = vmatprep.subr.mxu0 0.0
    %1402 = vmatpush2.msra.mxu0 0.0
    %1403 = vmatprep.subr.mxu0 0.0
    %1404 = vmatpush2.msra.mxu0 0.0
    %1405 = vmatprep.subr.mxu0 0.0
    %1406 = vmatpush2.msra.mxu0 0.0
    %1407 = vmatprep.subr.mxu0 0.0
    %1408 = vmatpush2.msra.mxu0 0.0
    %1409 = vmatprep.subr.mxu0 0.0
    %1410 = vmatpush2.msra.mxu0 0.0
    %1411 = vmatprep.subr.mxu0 0.0
    %1412 = vmatpush2.msra.mxu0 0.0
    %1413 = vmatprep.subr.mxu0 0.0
    %1414 = vmatpush2.msra.mxu0 0.0
    %1415 = vmatprep.subr.mxu0 0.0
    %1416 = vmatpush2.msra.mxu0 0.0
    %1417 = vmatprep.subr.mxu0 0.0
    %1418 = vmatpush2.msra.mxu0 0.0
    %1419 = vmatprep.subr.mxu0 0.0
    %1420 = vmatpush2.msra.mxu0 0.0
    %1421 = vmatprep.subr.mxu0 0.0
    %1422 = vmatpush2.msra.mxu0 0.0
    %1423 = vmatprep.subr.mxu0 0.0
    %1424 = vmatpush2.msra.mxu0 0.0
    %1425 = vmatprep.subr.mxu0 0.0
    %1426 = vmatpush2.msra.mxu0 0.0
    %1427 = vmatprep.subr.mxu0 0.0
    %1428 = vmatpush2.msra.mxu0 0.0
    %1429 = vmatprep.subr.mxu0 0.0
    %1430 = vmatpush2.msra.mxu0 0.0
    %1431 = vmatprep.mubr.f32.mxu0 0.0
    %1432 = vmatmul.mubr.f32.gmra.mxu0 %v1359
    %v1433 = vpop.f32.mrf.mxu0
    %v1434 = vadd.f32 0.0, %v1433
    %v1435 = vpop.f32.mrf.mxu0
    %1436 = vmatprep.mubr.f32.mxu0 0.0
    %1437 = vmatmul.mubr.f32.gmra.mxu0 %v1362
    %v1438 = vpop.f32.mrf.mxu0
    %v1439 = vadd.f32 0.0, %v1438
    %v1440 = vpop.f32.mrf.mxu0
    %1441 = vmatprep.mubr.f32.mxu0 0.0
    %1442 = vmatmul.mubr.f32.gmra.mxu0 %v1365
    %v1443 = vpop.f32.mrf.mxu0
    %v1444 = vadd.f32 0.0, %v1443
    %v1445 = vpop.f32.mrf.mxu0
    %1446 = vdwg.mxu0
    %v1447 = vadd.f32 %v1165, %v1434
    %v1448 = vadd.f32 %v1166, %v1439
    %v1449 = vadd.f32 %v1167, %v1444
    %v1450 = vld [vmem:[#allocation19] sm:$0x1]
    %v1452 = vlaneseq
    %v1453 = vshrl.u32 %v1452, 7
    %v1454 = vsub.s32 0, %v1453
    %v1455 = vrot.slane %v1450, %v1454
    %v1457 = vadd.f32 %v1447, %v1455
    %v1458 = vadd.f32 %v1448, %v1455
    %v1459 = vadd.f32 %v1449, %v1455
    %s1460 = scalar_lea.vmem [#allocation7], 1
    %v1461 = vld [vmem:[%s1460] sm:$0x1]
    %s1462 = scalar_lea.vmem [#allocation8], 1
    %v1463 = vld [vmem:[%s1462] sm:$0x1]
    %v1464 = vsel %vm348, %v1457, 0.0
    %1465 = vadd.xlane.f32.xlu0 %v1464
    %v1466 = vpop.xlane.xlu0 %1465
    %v1467 = vsel %vm348, %v1458, 0.0
    %1468 = vadd.xlane.f32.xlu0 %v1467
    %v1469 = vpop.xlane.xlu0 %1468
    %v1470 = vsel %vm355, %v1459, 0.0
    %1471 = vadd.xlane.f32.xlu0 %v1470
    %v1472 = vpop.xlane.xlu0 %1471
    %v1473 = vmul.f32 %v1466, %v359
    %v1474 = vmul.f32 %v1469, %v359
    %v1475 = vmul.f32 %v1472, %v359
    %v1476 = vsub.f32 %v1457, %v1473
    %v1477 = vsub.f32 %v1458, %v1474
    %v1478 = vsub.f32 %v1459, %v1475
    %v1479 = vmul.f32 %v1476, %v1476
    %v1480 = vmul.f32 %v1477, %v1477
    %v1481 = vmul.f32 %v1478, %v1478
    %v1482 = vsel %vm348, %v1479, 0.0
    %1483 = vadd.xlane.f32.xlu0 %v1482
    %v1484 = vpop.xlane.xlu0 %1483
    %v1485 = vsel %vm348, %v1480, 0.0
    %1486 = vadd.xlane.f32.xlu0 %v1485
    %v1487 = vpop.xlane.xlu0 %1486
    %v1488 = vsel %vm355, %v1481, 0.0
    %1489 = vadd.xlane.f32.xlu0 %v1488
    %v1490 = vpop.xlane.xlu0 %1489
    %v1491 = vmul.f32 %v1484, %v359
    %v1492 = vmul.f32 %v1487, %v359
    %v1493 = vmul.f32 %v1490, %v359
    %v1494 = vadd.f32 %v1491, 1e-05
    %v1495 = vadd.f32 %v1492, 1e-05
    %v1496 = vadd.f32 %v1493, 1e-05
    %v1497 = vrsqrt.pop %v1494
    %v1498 = vrsqrt.pop %v1495
    %v1499 = vrsqrt.pop %v1496
    %v1500 = vmul.f32 %v1476, %v1497
    %v1501 = vmul.f32 %v1477, %v1498
    %v1502 = vmul.f32 %v1478, %v1499
    %v1504 = vlaneseq
    %v1505 = vshrl.u32 %v1504, 7
    %v1506 = vsub.s32 0, %v1505
    %v1507 = vrot.slane %v1461, %v1506
    %v1509 = vmul.f32 %v1500, %v1507
    %v1510 = vmul.f32 %v1501, %v1507
    %v1511 = vmul.f32 %v1502, %v1507
    %v1513 = vlaneseq
    %v1514 = vshrl.u32 %v1513, 7
    %v1515 = vsub.s32 0, %v1514
    %v1516 = vrot.slane %v1463, %v1515
    %v1518 = vadd.f32 %v1509, %v1516
    %v1519 = vadd.f32 %v1510, %v1516
    %v1520 = vadd.f32 %v1511, %v1516
    %s1521 = scalar_lea.vmem %s7, 32
    %v1522 = vld [vmem:[%s1521] sm:$0xff]
    %v1523 = vld [vmem:[%s1521 + $0x8] sm:$0xff]
    %v1524 = vld [vmem:[%s1521 + $0x10] sm:$0xff]
    %v1525 = vld [vmem:[%s1521 + $0x18] sm:$0xff]
    %v1527 = vsel %vm348, %v1518, 0
    %v1530 = vsel %vm348, %v1519, 0
    %v1533 = vsel %vm348, %v1520, 0
    %1535 = vmatprep.subr.mxu0 0.0
    %1536 = vmatpush1.msra.mxu0 0.0
    %1537 = vmatprep.subr.mxu0 0.0
    %1538 = vmatpush1.msra.mxu0 0.0
    %1539 = vmatprep.subr.mxu0 0.0
    %1540 = vmatpush1.msra.mxu0 0.0
    %1541 = vmatprep.subr.mxu0 0.0
    %1542 = vmatpush1.msra.mxu0 0.0
    %1543 = vmatprep.subr.mxu0 0.0
    %1544 = vmatpush1.msra.mxu0 0.0
    %1545 = vmatprep.subr.mxu0 0.0
    %1546 = vmatpush1.msra.mxu0 0.0
    %1547 = vmatprep.subr.mxu0 0.0
    %1548 = vmatpush1.msra.mxu0 0.0
    %1549 = vmatprep.subr.mxu0 0.0
    %1550 = vmatpush1.msra.mxu0 0.0
    %1551 = vmatprep.subr.mxu0 0.0
    %1552 = vmatpush1.msra.mxu0 0.0
    %1553 = vmatprep.subr.mxu0 0.0
    %1554 = vmatpush1.msra.mxu0 0.0
    %1555 = vmatprep.subr.mxu0 0.0
    %1556 = vmatpush1.msra.mxu0 0.0
    %1557 = vmatprep.subr.mxu0 0.0
    %1558 = vmatpush1.msra.mxu0 0.0
    %1559 = vmatprep.subr.mxu0 0.0
    %1560 = vmatpush1.msra.mxu0 %v1525
    %1561 = vmatprep.subr.mxu0 0.0
    %1562 = vmatpush1.msra.mxu0 %v1524
    %1563 = vmatprep.subr.mxu0 0.0
    %1564 = vmatpush1.msra.mxu0 %v1523
    %1565 = vmatprep.subr.mxu0 0.0
    %1566 = vmatpush1.msra.mxu0 %v1522
    %1567 = vmatprep.subr.mxu0 0.0
    %1568 = vmatpush2.msra.mxu0 0.0
    %1569 = vmatprep.subr.mxu0 0.0
    %1570 = vmatpush2.msra.mxu0 0.0
    %1571 = vmatprep.subr.mxu0 0.0
    %1572 = vmatpush2.msra.mxu0 0.0
    %1573 = vmatprep.subr.mxu0 0.0
    %1574 = vmatpush2.msra.mxu0 0.0
    %1575 = vmatprep.subr.mxu0 0.0
    %1576 = vmatpush2.msra.mxu0 0.0
    %1577 = vmatprep.subr.mxu0 0.0
    %1578 = vmatpush2.msra.mxu0 0.0
    %1579 = vmatprep.subr.mxu0 0.0
    %1580 = vmatpush2.msra.mxu0 0.0
    %1581 = vmatprep.subr.mxu0 0.0
    %1582 = vmatpush2.msra.mxu0 0.0
    %1583 = vmatprep.subr.mxu0 0.0
    %1584 = vmatpush2.msra.mxu0 0.0
    %1585 = vmatprep.subr.mxu0 0.0
    %1586 = vmatpush2.msra.mxu0 0.0
    %1587 = vmatprep.subr.mxu0 0.0
    %1588 = vmatpush2.msra.mxu0 0.0
    %1589 = vmatprep.subr.mxu0 0.0
    %1590 = vmatpush2.msra.mxu0 0.0
    %1591 = vmatprep.subr.mxu0 0.0
    %1592 = vmatpush2.msra.mxu0 0.0
    %1593 = vmatprep.subr.mxu0 0.0
    %1594 = vmatpush2.msra.mxu0 0.0
    %1595 = vmatprep.subr.mxu0 0.0
    %1596 = vmatpush2.msra.mxu0 0.0
    %1597 = vmatprep.subr.mxu0 0.0
    %1598 = vmatpush2.msra.mxu0 0.0
    %1599 = vmatprep.mubr.f32.mxu0 0.0
    %1600 = vmatmul.mubr.f32.gmra.mxu0 %v1527
    %v1601 = vpop.f32.mrf.mxu0
    %v1602 = vadd.f32 0.0, %v1601
    %v1603 = vpop.f32.mrf.mxu0
    %1604 = vmatprep.mubr.f32.mxu0 0.0
    %1605 = vmatmul.mubr.f32.gmra.mxu0 %v1530
    %v1606 = vpop.f32.mrf.mxu0
    %v1607 = vadd.f32 0.0, %v1606
    %v1608 = vpop.f32.mrf.mxu0
    %1609 = vmatprep.mubr.f32.mxu0 0.0
    %1610 = vmatmul.mubr.f32.gmra.mxu0 %v1533
    %v1611 = vpop.f32.mrf.mxu0
    %v1612 = vadd.f32 0.0, %v1611
    %v1613 = vpop.f32.mrf.mxu0
    %1614 = vdwg.mxu0
    %s1615 = scalar_lea.vmem %s8, 32
    %v1616 = vld [vmem:[%s1615] sm:$0xff]
    %v1617 = vld [vmem:[%s1615 + $0x8] sm:$0xff]
    %v1618 = vld [vmem:[%s1615 + $0x10] sm:$0xff]
    %v1619 = vld [vmem:[%s1615 + $0x18] sm:$0xff]
    %1623 = vrot.lane.b32.xlu0 %v1602, 96
    %v1624 = vpop.permute.xlu0 %1623
    %1625 = vrot.lane.b32.xlu0 %v1607, 96
    %v1626 = vpop.permute.xlu0 %1625
    %1627 = vrot.lane.b32.xlu0 %v1612, 96
    %v1628 = vpop.permute.xlu0 %1627
    %v1629 = vsel %vm253, %v1602, 0
    %v1631 = vsel %vm253, %v1607, 0
    %v1633 = vsel %vm253, %v1612, 0
    %v1635 = vsel %vm253, %v1624, 0
    %v1637 = vsel %vm253, %v1626, 0
    %v1639 = vsel %vm253, %v1628, 0
    %1641 = vmatprep.subr.mxu0 0.0
    %1642 = vmatpush1.xpose.msra.mxu0 0.0
    %1643 = vmatprep.subr.mxu0 0.0
    %1644 = vmatpush1.xpose.msra.mxu0 0.0
    %1645 = vmatprep.subr.mxu0 0.0
    %1646 = vmatpush1.xpose.msra.mxu0 0.0
    %1647 = vmatprep.subr.mxu0 0.0
    %1648 = vmatpush1.xpose.msra.mxu0 0.0
    %1649 = vmatprep.subr.mxu0 0.0
    %1650 = vmatpush1.xpose.msra.mxu0 0.0
    %1651 = vmatprep.subr.mxu0 0.0
    %1652 = vmatpush1.xpose.msra.mxu0 0.0
    %1653 = vmatprep.subr.mxu0 0.0
    %1654 = vmatpush1.xpose.msra.mxu0 0.0
    %1655 = vmatprep.subr.mxu0 0.0
    %1656 = vmatpush1.xpose.msra.mxu0 0.0
    %1657 = vmatprep.subr.mxu0 0.0
    %1658 = vmatpush1.xpose.msra.mxu0 0.0
    %1659 = vmatprep.subr.mxu0 0.0
    %1660 = vmatpush1.xpose.msra.mxu0 0.0
    %1661 = vmatprep.subr.mxu0 0.0
    %1662 = vmatpush1.xpose.msra.mxu0 0.0
    %1663 = vmatprep.subr.mxu0 0.0
    %1664 = vmatpush1.xpose.msra.mxu0 0.0
    %1665 = vmatprep.subr.mxu0 0.0
    %1666 = vmatpush1.xpose.msra.mxu0 0.0
    %1667 = vmatprep.subr.mxu0 0.0
    %1668 = vmatpush1.xpose.msra.mxu0 %v1639
    %1669 = vmatprep.subr.mxu0 0.0
    %1670 = vmatpush1.xpose.msra.mxu0 %v1637
    %1671 = vmatprep.subr.mxu0 0.0
    %1672 = vmatpush1.xpose.msra.mxu0 %v1635
    %1673 = vmatprep.subr.mxu0 0.0
    %1674 = vmatpush2.xpose.msra.mxu0 0.0
    %1675 = vmatprep.subr.mxu0 0.0
    %1676 = vmatpush2.xpose.msra.mxu0 0.0
    %1677 = vmatprep.subr.mxu0 0.0
    %1678 = vmatpush2.xpose.msra.mxu0 0.0
    %1679 = vmatprep.subr.mxu0 0.0
    %1680 = vmatpush2.xpose.msra.mxu0 0.0
    %1681 = vmatprep.subr.mxu0 0.0
    %1682 = vmatpush2.xpose.msra.mxu0 0.0
    %1683 = vmatprep.subr.mxu0 0.0
    %1684 = vmatpush2.xpose.msra.mxu0 0.0
    %1685 = vmatprep.subr.mxu0 0.0
    %1686 = vmatpush2.xpose.msra.mxu0 0.0
    %1687 = vmatprep.subr.mxu0 0.0
    %1688 = vmatpush2.xpose.msra.mxu0 0.0
    %1689 = vmatprep.subr.mxu0 0.0
    %1690 = vmatpush2.xpose.msra.mxu0 0.0
    %1691 = vmatprep.subr.mxu0 0.0
    %1692 = vmatpush2.xpose.msra.mxu0 0.0
    %1693 = vmatprep.subr.mxu0 0.0
    %1694 = vmatpush2.xpose.msra.mxu0 0.0
    %1695 = vmatprep.subr.mxu0 0.0
    %1696 = vmatpush2.xpose.msra.mxu0 0.0
    %1697 = vmatprep.subr.mxu0 0.0
    %1698 = vmatpush2.xpose.msra.mxu0 0.0
    %1699 = vmatprep.subr.mxu0 0.0
    %1700 = vmatpush2.xpose.msra.mxu0 0.0
    %1701 = vmatprep.subr.mxu0 0.0
    %1702 = vmatpush2.xpose.msra.mxu0 0.0
    %1703 = vmatprep.subr.mxu0 0.0
    %1704 = vmatpush2.xpose.msra.mxu0 0.0
    %1705 = vmatprep.mubr.f32.mxu0 0.0
    %1706 = vmatmul.mubr.f32.gmra.mxu0 %v1629
    %v1707 = vpop.f32.mrf.mxu0
    %v1708 = vadd.f32 %v343, %v1707
    %v1709 = vpop.f32.mrf.mxu0
    %1710 = vmatprep.mubr.f32.mxu0 0.0
    %1711 = vmatmul.mubr.f32.gmra.mxu0 %v1631
    %v1712 = vpop.f32.mrf.mxu0
    %v1713 = vadd.f32 %v344, %v1712
    %v1714 = vpop.f32.mrf.mxu0
    %1715 = vmatprep.mubr.f32.mxu0 0.0
    %1716 = vmatmul.mubr.f32.gmra.mxu0 %v1633
    %v1717 = vpop.f32.mrf.mxu0
    %v1718 = vadd.f32 %v345, %v1717
    %v1719 = vpop.f32.mrf.mxu0
    %1720 = vdwg.mxu0
    %v1721 = vsel %vm606, %v1708, -inf
    %1722 = vmax.xlane.f32.xlu0 %v1721
    %v1723 = vpop.xlane.xlu0 %1722
    %v1724 = vsel %vm606, %v1713, -inf
    %1725 = vmax.xlane.f32.xlu0 %v1724
    %v1726 = vpop.xlane.xlu0 %1725
    %v1727 = vsel %vm613, %v1718, -inf
    %1728 = vmax.xlane.f32.xlu0 %v1727
    %v1729 = vpop.xlane.xlu0 %1728
    %v1730 = vsub.f32 %v1708, %v1723
    %v1731 = vsub.f32 %v1713, %v1726
    %v1732 = vsub.f32 %v1718, %v1729
    %v1733 = vmul.f32 %v1730, 1.442695
    %v1734 = vpow.pop %v1733
    %v1735 = vmul.f32 %v1731, 1.442695
    %v1736 = vpow.pop %v1735
    %v1737 = vmul.f32 %v1732, 1.442695
    %v1738 = vpow.pop %v1737
    %v1739 = vsel %vm606, %v1734, 0.0
    %1740 = vadd.xlane.f32.xlu0 %v1739
    %v1741 = vpop.xlane.xlu0 %1740
    %v1742 = vsel %vm606, %v1736, 0.0
    %1743 = vadd.xlane.f32.xlu0 %v1742
    %v1744 = vpop.xlane.xlu0 %1743
    %v1745 = vsel %vm613, %v1738, 0.0
    %1746 = vadd.xlane.f32.xlu0 %v1745
    %v1747 = vpop.xlane.xlu0 %1746
    %v1748 = vrcp.pop %v1741
    %v1749 = vrcp.pop %v1744
    %v1750 = vrcp.pop %v1747
    %v1751 = vmul.f32 %v1734, %v1748
    %v1752 = vmul.f32 %v1736, %v1749
    %v1753 = vmul.f32 %v1738, %v1750
    %1754 = vrot.lane.b32.xlu0 %v1602, 64
    %v1755 = vpop.permute.xlu0 %1754
    %1756 = vrot.lane.b32.xlu0 %v1607, 64
    %v1757 = vpop.permute.xlu0 %1756
    %1758 = vrot.lane.b32.xlu0 %v1612, 64
    %v1759 = vpop.permute.xlu0 %1758
    %v1763 = vsel %vm606, %v1751, 0
    %v1766 = vsel %vm606, %v1752, 0
    %v1769 = vsel %vm606, %v1753, 0
    %v1771 = vsel %vm658, %v1759, 0
    %1773 = vmatprep.subr.mxu0 0.0
    %1774 = vmatpush1.msra.mxu0 0.0
    %1775 = vmatprep.subr.mxu0 0.0
    %1776 = vmatpush1.msra.mxu0 0.0
    %1777 = vmatprep.subr.mxu0 0.0
    %1778 = vmatpush1.msra.mxu0 0.0
    %1779 = vmatprep.subr.mxu0 0.0
    %1780 = vmatpush1.msra.mxu0 0.0
    %1781 = vmatprep.subr.mxu0 0.0
    %1782 = vmatpush1.msra.mxu0 0.0
    %1783 = vmatprep.subr.mxu0 0.0
    %1784 = vmatpush1.msra.mxu0 0.0
    %1785 = vmatprep.subr.mxu0 0.0
    %1786 = vmatpush1.msra.mxu0 0.0
    %1787 = vmatprep.subr.mxu0 0.0
    %1788 = vmatpush1.msra.mxu0 0.0
    %1789 = vmatprep.subr.mxu0 0.0
    %1790 = vmatpush1.msra.mxu0 0.0
    %1791 = vmatprep.subr.mxu0 0.0
    %1792 = vmatpush1.msra.mxu0 0.0
    %1793 = vmatprep.subr.mxu0 0.0
    %1794 = vmatpush1.msra.mxu0 0.0
    %1795 = vmatprep.subr.mxu0 0.0
    %1796 = vmatpush1.msra.mxu0 0.0
    %1797 = vmatprep.subr.mxu0 0.0
    %1798 = vmatpush1.msra.mxu0 0.0
    %1799 = vmatprep.subr.mxu0 0.0
    %1800 = vmatpush1.msra.mxu0 %v1771
    %1801 = vmatprep.subr.mxu0 0.0
    %1802 = vmatpush1.msra.mxu0 %v1757
    %1803 = vmatprep.subr.mxu0 0.0
    %1804 = vmatpush1.msra.mxu0 %v1755
    %1805 = vmatprep.subr.mxu0 0.0
    %1806 = vmatpush2.msra.mxu0 0.0
    %1807 = vmatprep.subr.mxu0 0.0
    %1808 = vmatpush2.msra.mxu0 0.0
    %1809 = vmatprep.subr.mxu0 0.0
    %1810 = vmatpush2.msra.mxu0 0.0
    %1811 = vmatprep.subr.mxu0 0.0
    %1812 = vmatpush2.msra.mxu0 0.0
    %1813 = vmatprep.subr.mxu0 0.0
    %1814 = vmatpush2.msra.mxu0 0.0
    %1815 = vmatprep.subr.mxu0 0.0
    %1816 = vmatpush2.msra.mxu0 0.0
    %1817 = vmatprep.subr.mxu0 0.0
    %1818 = vmatpush2.msra.mxu0 0.0
    %1819 = vmatprep.subr.mxu0 0.0
    %1820 = vmatpush2.msra.mxu0 0.0
    %1821 = vmatprep.subr.mxu0 0.0
    %1822 = vmatpush2.msra.mxu0 0.0
    %1823 = vmatprep.subr.mxu0 0.0
    %1824 = vmatpush2.msra.mxu0 0.0
    %1825 = vmatprep.subr.mxu0 0.0
    %1826 = vmatpush2.msra.mxu0 0.0
    %1827 = vmatprep.subr.mxu0 0.0
    %1828 = vmatpush2.msra.mxu0 0.0
    %1829 = vmatprep.subr.mxu0 0.0
    %1830 = vmatpush2.msra.mxu0 0.0
    %1831 = vmatprep.subr.mxu0 0.0
    %1832 = vmatpush2.msra.mxu0 0.0
    %1833 = vmatprep.subr.mxu0 0.0
    %1834 = vmatpush2.msra.mxu0 0.0
    %1835 = vmatprep.subr.mxu0 0.0
    %1836 = vmatpush2.msra.mxu0 0.0
    %1837 = vmatprep.mubr.f32.mxu0 0.0
    %1838 = vmatmul.mubr.f32.gmra.mxu0 %v1763
    %v1839 = vpop.f32.mrf.mxu0
    %v1840 = vadd.f32 0.0, %v1839
    %v1841 = vpop.f32.mrf.mxu0
    %1842 = vmatprep.mubr.f32.mxu0 0.0
    %1843 = vmatmul.mubr.f32.gmra.mxu0 %v1766
    %v1844 = vpop.f32.mrf.mxu0
    %v1845 = vadd.f32 0.0, %v1844
    %v1846 = vpop.f32.mrf.mxu0
    %1847 = vmatprep.mubr.f32.mxu0 0.0
    %1848 = vmatmul.mubr.f32.gmra.mxu0 %v1769
    %v1849 = vpop.f32.mrf.mxu0
    %v1850 = vadd.f32 0.0, %v1849
    %v1851 = vpop.f32.mrf.mxu0
    %1852 = vdwg.mxu0
    %1853 = vrot.lane.b32.xlu0 %v1602, 112
    %v1854 = vpop.permute.xlu0 %1853
    %1855 = vrot.lane.b32.xlu0 %v1607, 112
    %v1856 = vpop.permute.xlu0 %1855
    %1857 = vrot.lane.b32.xlu0 %v1612, 112
    %v1858 = vpop.permute.xlu0 %1857
    %1859 = vrot.lane.b32.xlu0 %v1602, 80
    %v1860 = vpop.permute.xlu0 %1859
    %1861 = vrot.lane.b32.xlu0 %v1607, 80
    %v1862 = vpop.permute.xlu0 %1861
    %1863 = vrot.lane.b32.xlu0 %v1612, 80
    %v1864 = vpop.permute.xlu0 %1863
    %v1865 = vsel %vm253, %v1854, 0
    %v1867 = vsel %vm253, %v1856, 0
    %v1869 = vsel %vm253, %v1858, 0
    %v1871 = vsel %vm253, %v1860, 0
    %v1873 = vsel %vm253, %v1862, 0
    %v1875 = vsel %vm253, %v1864, 0
    %1877 = vmatprep.subr.mxu0 0.0
    %1878 = vmatpush1.xpose.msra.mxu0 0.0
    %1879 = vmatprep.subr.mxu0 0.0
    %1880 = vmatpush1.xpose.msra.mxu0 0.0
    %1881 = vmatprep.subr.mxu0 0.0
    %1882 = vmatpush1.xpose.msra.mxu0 0.0
    %1883 = vmatprep.subr.mxu0 0.0
    %1884 = vmatpush1.xpose.msra.mxu0 0.0
    %1885 = vmatprep.subr.mxu0 0.0
    %1886 = vmatpush1.xpose.msra.mxu0 0.0
    %1887 = vmatprep.subr.mxu0 0.0
    %1888 = vmatpush1.xpose.msra.mxu0 0.0
    %1889 = vmatprep.subr.mxu0 0.0
    %1890 = vmatpush1.xpose.msra.mxu0 0.0
    %1891 = vmatprep.subr.mxu0 0.0
    %1892 = vmatpush1.xpose.msra.mxu0 0.0
    %1893 = vmatprep.subr.mxu0 0.0
    %1894 = vmatpush1.xpose.msra.mxu0 0.0
    %1895 = vmatprep.subr.mxu0 0.0
    %1896 = vmatpush1.xpose.msra.mxu0 0.0
    %1897 = vmatprep.subr.mxu0 0.0
    %1898 = vmatpush1.xpose.msra.mxu0 0.0
    %1899 = vmatprep.subr.mxu0 0.0
    %1900 = vmatpush1.xpose.msra.mxu0 0.0
    %1901 = vmatprep.subr.mxu0 0.0
    %1902 = vmatpush1.xpose.msra.mxu0 0.0
    %1903 = vmatprep.subr.mxu0 0.0
    %1904 = vmatpush1.xpose.msra.mxu0 %v1875
    %1905 = vmatprep.subr.mxu0 0.0
    %1906 = vmatpush1.xpose.msra.mxu0 %v1873
    %1907 = vmatprep.subr.mxu0 0.0
    %1908 = vmatpush1.xpose.msra.mxu0 %v1871
    %1909 = vmatprep.subr.mxu0 0.0
    %1910 = vmatpush2.xpose.msra.mxu0 0.0
    %1911 = vmatprep.subr.mxu0 0.0
    %1912 = vmatpush2.xpose.msra.mxu0 0.0
    %1913 = vmatprep.subr.mxu0 0.0
    %1914 = vmatpush2.xpose.msra.mxu0 0.0
    %1915 = vmatprep.subr.mxu0 0.0
    %1916 = vmatpush2.xpose.msra.mxu0 0.0
    %1917 = vmatprep.subr.mxu0 0.0
    %1918 = vmatpush2.xpose.msra.mxu0 0.0
    %1919 = vmatprep.subr.mxu0 0.0
    %1920 = vmatpush2.xpose.msra.mxu0 0.0
    %1921 = vmatprep.subr.mxu0 0.0
    %1922 = vmatpush2.xpose.msra.mxu0 0.0
    %1923 = vmatprep.subr.mxu0 0.0
    %1924 = vmatpush2.xpose.msra.mxu0 0.0
    %1925 = vmatprep.subr.mxu0 0.0
    %1926 = vmatpush2.xpose.msra.mxu0 0.0
    %1927 = vmatprep.subr.mxu0 0.0
    %1928 = vmatpush2.xpose.msra.mxu0 0.0
    %1929 = vmatprep.subr.mxu0 0.0
    %1930 = vmatpush2.xpose.msra.mxu0 0.0
    %1931 = vmatprep.subr.mxu0 0.0
    %1932 = vmatpush2.xpose.msra.mxu0 0.0
    %1933 = vmatprep.subr.mxu0 0.0
    %1934 = vmatpush2.xpose.msra.mxu0 0.0
    %1935 = vmatprep.subr.mxu0 0.0
    %1936 = vmatpush2.xpose.msra.mxu0 0.0
    %1937 = vmatprep.subr.mxu0 0.0
    %1938 = vmatpush2.xpose.msra.mxu0 0.0
    %1939 = vmatprep.subr.mxu0 0.0
    %1940 = vmatpush2.xpose.msra.mxu0 0.0
    %1941 = vmatprep.mubr.f32.mxu0 0.0
    %1942 = vmatmul.mubr.f32.gmra.mxu0 %v1865
    %v1943 = vpop.f32.mrf.mxu0
    %v1944 = vadd.f32 %v343, %v1943
    %v1945 = vpop.f32.mrf.mxu0
    %1946 = vmatprep.mubr.f32.mxu0 0.0
    %1947 = vmatmul.mubr.f32.gmra.mxu0 %v1867
    %v1948 = vpop.f32.mrf.mxu0
    %v1949 = vadd.f32 %v344, %v1948
    %v1950 = vpop.f32.mrf.mxu0
    %1951 = vmatprep.mubr.f32.mxu0 0.0
    %1952 = vmatmul.mubr.f32.gmra.mxu0 %v1869
    %v1953 = vpop.f32.mrf.mxu0
    %v1954 = vadd.f32 %v345, %v1953
    %v1955 = vpop.f32.mrf.mxu0
    %1956 = vdwg.mxu0
    %v1957 = vsel %vm606, %v1944, -inf
    %1958 = vmax.xlane.f32.xlu0 %v1957
    %v1959 = vpop.xlane.xlu0 %1958
    %v1960 = vsel %vm606, %v1949, -inf
    %1961 = vmax.xlane.f32.xlu0 %v1960
    %v1962 = vpop.xlane.xlu0 %1961
    %v1963 = vsel %vm613, %v1954, -inf
    %1964 = vmax.xlane.f32.xlu0 %v1963
    %v1965 = vpop.xlane.xlu0 %1964
    %v1966 = vsub.f32 %v1944, %v1959
    %v1967 = vsub.f32 %v1949, %v1962
    %v1968 = vsub.f32 %v1954, %v1965
    %v1969 = vmul.f32 %v1966, 1.442695
    %v1970 = vpow.pop %v1969
    %v1971 = vmul.f32 %v1967, 1.442695
    %v1972 = vpow.pop %v1971
    %v1973 = vmul.f32 %v1968, 1.442695
    %v1974 = vpow.pop %v1973
    %v1975 = vsel %vm606, %v1970, 0.0
    %1976 = vadd.xlane.f32.xlu0 %v1975
    %v1977 = vpop.xlane.xlu0 %1976
    %v1978 = vsel %vm606, %v1972, 0.0
    %1979 = vadd.xlane.f32.xlu0 %v1978
    %v1980 = vpop.xlane.xlu0 %1979
    %v1981 = vsel %vm613, %v1974, 0.0
    %1982 = vadd.xlane.f32.xlu0 %v1981
    %v1983 = vpop.xlane.xlu0 %1982
    %v1984 = vrcp.pop %v1977
    %v1985 = vrcp.pop %v1980
    %v1986 = vrcp.pop %v1983
    %v1987 = vmul.f32 %v1970, %v1984
    %v1988 = vmul.f32 %v1972, %v1985
    %v1989 = vmul.f32 %v1974, %v1986
    %1990 = vrot.lane.b32.xlu0 %v1602, 48
    %v1991 = vpop.permute.xlu0 %1990
    %1992 = vrot.lane.b32.xlu0 %v1607, 48
    %v1993 = vpop.permute.xlu0 %1992
    %1994 = vrot.lane.b32.xlu0 %v1612, 48
    %v1995 = vpop.permute.xlu0 %1994
    %v1999 = vsel %vm606, %v1987, 0
    %v2002 = vsel %vm606, %v1988, 0
    %v2005 = vsel %vm606, %v1989, 0
    %v2007 = vsel %vm658, %v1995, 0
    %2009 = vmatprep.subr.mxu0 0.0
    %2010 = vmatpush1.msra.mxu0 0.0
    %2011 = vmatprep.subr.mxu0 0.0
    %2012 = vmatpush1.msra.mxu0 0.0
    %2013 = vmatprep.subr.mxu0 0.0
    %2014 = vmatpush1.msra.mxu0 0.0
    %2015 = vmatprep.subr.mxu0 0.0
    %2016 = vmatpush1.msra.mxu0 0.0
    %2017 = vmatprep.subr.mxu0 0.0
    %2018 = vmatpush1.msra.mxu0 0.0
    %2019 = vmatprep.subr.mxu0 0.0
    %2020 = vmatpush1.msra.mxu0 0.0
    %2021 = vmatprep.subr.mxu0 0.0
    %2022 = vmatpush1.msra.mxu0 0.0
    %2023 = vmatprep.subr.mxu0 0.0
    %2024 = vmatpush1.msra.mxu0 0.0
    %2025 = vmatprep.subr.mxu0 0.0
    %2026 = vmatpush1.msra.mxu0 0.0
    %2027 = vmatprep.subr.mxu0 0.0
    %2028 = vmatpush1.msra.mxu0 0.0
    %2029 = vmatprep.subr.mxu0 0.0
    %2030 = vmatpush1.msra.mxu0 0.0
    %2031 = vmatprep.subr.mxu0 0.0
    %2032 = vmatpush1.msra.mxu0 0.0
    %2033 = vmatprep.subr.mxu0 0.0
    %2034 = vmatpush1.msra.mxu0 0.0
    %2035 = vmatprep.subr.mxu0 0.0
    %2036 = vmatpush1.msra.mxu0 %v2007
    %2037 = vmatprep.subr.mxu0 0.0
    %2038 = vmatpush1.msra.mxu0 %v1993
    %2039 = vmatprep.subr.mxu0 0.0
    %2040 = vmatpush1.msra.mxu0 %v1991
    %2041 = vmatprep.subr.mxu0 0.0
    %2042 = vmatpush2.msra.mxu0 0.0
    %2043 = vmatprep.subr.mxu0 0.0
    %2044 = vmatpush2.msra.mxu0 0.0
    %2045 = vmatprep.subr.mxu0 0.0
    %2046 = vmatpush2.msra.mxu0 0.0
    %2047 = vmatprep.subr.mxu0 0.0
    %2048 = vmatpush2.msra.mxu0 0.0
    %2049 = vmatprep.subr.mxu0 0.0
    %2050 = vmatpush2.msra.mxu0 0.0
    %2051 = vmatprep.subr.mxu0 0.0
    %2052 = vmatpush2.msra.mxu0 0.0
    %2053 = vmatprep.subr.mxu0 0.0
    %2054 = vmatpush2.msra.mxu0 0.0
    %2055 = vmatprep.subr.mxu0 0.0
    %2056 = vmatpush2.msra.mxu0 0.0
    %2057 = vmatprep.subr.mxu0 0.0
    %2058 = vmatpush2.msra.mxu0 0.0
    %2059 = vmatprep.subr.mxu0 0.0
    %2060 = vmatpush2.msra.mxu0 0.0
    %2061 = vmatprep.subr.mxu0 0.0
    %2062 = vmatpush2.msra.mxu0 0.0
    %2063 = vmatprep.subr.mxu0 0.0
    %2064 = vmatpush2.msra.mxu0 0.0
    %2065 = vmatprep.subr.mxu0 0.0
    %2066 = vmatpush2.msra.mxu0 0.0
    %2067 = vmatprep.subr.mxu0 0.0
    %2068 = vmatpush2.msra.mxu0 0.0
    %2069 = vmatprep.subr.mxu0 0.0
    %2070 = vmatpush2.msra.mxu0 0.0
    %2071 = vmatprep.subr.mxu0 0.0
    %2072 = vmatpush2.msra.mxu0 0.0
    %2073 = vmatprep.mubr.f32.mxu0 0.0
    %2074 = vmatmul.mubr.f32.gmra.mxu0 %v1999
    %v2075 = vpop.f32.mrf.mxu0
    %v2076 = vadd.f32 0.0, %v2075
    %v2077 = vpop.f32.mrf.mxu0
    %2078 = vmatprep.mubr.f32.mxu0 0.0
    %2079 = vmatmul.mubr.f32.gmra.mxu0 %v2002
    %v2080 = vpop.f32.mrf.mxu0
    %v2081 = vadd.f32 0.0, %v2080
    %v2082 = vpop.f32.mrf.mxu0
    %2083 = vmatprep.mubr.f32.mxu0 0.0
    %2084 = vmatmul.mubr.f32.gmra.mxu0 %v2005
    %v2085 = vpop.f32.mrf.mxu0
    %v2086 = vadd.f32 0.0, %v2085
    %v2087 = vpop.f32.mrf.mxu0
    %2088 = vdwg.mxu0
    %v2090 = vsel %vm253, %v2076, 0
    %v2093 = vsel %vm253, %v2081, 0
    %v2096 = vsel %vm253, %v2086, 0
    %2098 = vmatprep.subr.mxu0 0.0
    %2099 = vmatpush1.msra.mxu0 0.0
    %2100 = vmatprep.subr.mxu0 0.0
    %2101 = vmatpush1.msra.mxu0 0.0
    %2102 = vmatprep.subr.mxu0 0.0
    %2103 = vmatpush1.msra.mxu0 0.0
    %2104 = vmatprep.subr.mxu0 0.0
    %2105 = vmatpush1.msra.mxu0 0.0
    %2106 = vmatprep.subr.mxu0 0.0
    %2107 = vmatpush1.msra.mxu0 0.0
    %2108 = vmatprep.subr.mxu0 0.0
    %2109 = vmatpush1.msra.mxu0 0.0
    %2110 = vmatprep.subr.mxu0 0.0
    %2111 = vmatpush1.msra.mxu0 0.0
    %2112 = vmatprep.subr.mxu0 0.0
    %2113 = vmatpush1.msra.mxu0 0.0
    %2114 = vmatprep.subr.mxu0 0.0
    %2115 = vmatpush1.msra.mxu0 0.0
    %2116 = vmatprep.subr.mxu0 0.0
    %2117 = vmatpush1.msra.mxu0 0.0
    %2118 = vmatprep.subr.mxu0 0.0
    %2119 = vmatpush1.msra.mxu0 0.0
    %2120 = vmatprep.subr.mxu0 0.0
    %2121 = vmatpush1.msra.mxu0 0.0
    %2122 = vmatprep.subr.mxu0 0.0
    %2123 = vmatpush1.msra.mxu0 0.0
    %2124 = vmatprep.subr.mxu0 0.0
    %2125 = vmatpush1.msra.mxu0 0.0
    %2126 = vmatprep.subr.mxu0 0.0
    %2127 = vmatpush1.msra.mxu0 %v1619
    %2128 = vmatprep.subr.mxu0 0.0
    %2129 = vmatpush1.msra.mxu0 %v1618
    %2130 = vmatprep.subr.mxu0 0.0
    %2131 = vmatpush2.msra.mxu0 0.0
    %2132 = vmatprep.subr.mxu0 0.0
    %2133 = vmatpush2.msra.mxu0 0.0
    %2134 = vmatprep.subr.mxu0 0.0
    %2135 = vmatpush2.msra.mxu0 0.0
    %2136 = vmatprep.subr.mxu0 0.0
    %2137 = vmatpush2.msra.mxu0 0.0
    %2138 = vmatprep.subr.mxu0 0.0
    %2139 = vmatpush2.msra.mxu0 0.0
    %2140 = vmatprep.subr.mxu0 0.0
    %2141 = vmatpush2.msra.mxu0 0.0
    %2142 = vmatprep.subr.mxu0 0.0
    %2143 = vmatpush2.msra.mxu0 0.0
    %2144 = vmatprep.subr.mxu0 0.0
    %2145 = vmatpush2.msra.mxu0 0.0
    %2146 = vmatprep.subr.mxu0 0.0
    %2147 = vmatpush2.msra.mxu0 0.0
    %2148 = vmatprep.subr.mxu0 0.0
    %2149 = vmatpush2.msra.mxu0 0.0
    %2150 = vmatprep.subr.mxu0 0.0
    %2151 = vmatpush2.msra.mxu0 0.0
    %2152 = vmatprep.subr.mxu0 0.0
    %2153 = vmatpush2.msra.mxu0 0.0
    %2154 = vmatprep.subr.mxu0 0.0
    %2155 = vmatpush2.msra.mxu0 0.0
    %2156 = vmatprep.subr.mxu0 0.0
    %2157 = vmatpush2.msra.mxu0 0.0
    %2158 = vmatprep.subr.mxu0 0.0
    %2159 = vmatpush2.msra.mxu0 0.0
    %2160 = vmatprep.subr.mxu0 0.0
    %2161 = vmatpush2.msra.mxu0 0.0
    %2162 = vmatprep.mubr.f32.mxu0 0.0
    %2163 = vmatmul.mubr.f32.gmra.mxu0 %v2090
    %v2164 = vpop.f32.mrf.mxu0
    %v2165 = vadd.f32 0.0, %v2164
    %v2166 = vpop.f32.mrf.mxu0
    %2167 = vmatprep.mubr.f32.mxu0 0.0
    %2168 = vmatmul.mubr.f32.gmra.mxu0 %v2093
    %v2169 = vpop.f32.mrf.mxu0
    %v2170 = vadd.f32 0.0, %v2169
    %v2171 = vpop.f32.mrf.mxu0
    %2172 = vmatprep.mubr.f32.mxu0 0.0
    %2173 = vmatmul.mubr.f32.gmra.mxu0 %v2096
    %v2174 = vpop.f32.mrf.mxu0
    %v2175 = vadd.f32 0.0, %v2174
    %v2176 = vpop.f32.mrf.mxu0
    %2177 = vdwg.mxu0
    %v2179 = vsel %vm253, %v1840, 0
    %v2182 = vsel %vm253, %v1845, 0
    %v2185 = vsel %vm253, %v1850, 0
    %2187 = vmatprep.subr.mxu0 0.0
    %2188 = vmatpush1.msra.mxu0 0.0
    %2189 = vmatprep.subr.mxu0 0.0
    %2190 = vmatpush1.msra.mxu0 0.0
    %2191 = vmatprep.subr.mxu0 0.0
    %2192 = vmatpush1.msra.mxu0 0.0
    %2193 = vmatprep.subr.mxu0 0.0
    %2194 = vmatpush1.msra.mxu0 0.0
    %2195 = vmatprep.subr.mxu0 0.0
    %2196 = vmatpush1.msra.mxu0 0.0
    %2197 = vmatprep.subr.mxu0 0.0
    %2198 = vmatpush1.msra.mxu0 0.0
    %2199 = vmatprep.subr.mxu0 0.0
    %2200 = vmatpush1.msra.mxu0 0.0
    %2201 = vmatprep.subr.mxu0 0.0
    %2202 = vmatpush1.msra.mxu0 0.0
    %2203 = vmatprep.subr.mxu0 0.0
    %2204 = vmatpush1.msra.mxu0 0.0
    %2205 = vmatprep.subr.mxu0 0.0
    %2206 = vmatpush1.msra.mxu0 0.0
    %2207 = vmatprep.subr.mxu0 0.0
    %2208 = vmatpush1.msra.mxu0 0.0
    %2209 = vmatprep.subr.mxu0 0.0
    %2210 = vmatpush1.msra.mxu0 0.0
    %2211 = vmatprep.subr.mxu0 0.0
    %2212 = vmatpush1.msra.mxu0 0.0
    %2213 = vmatprep.subr.mxu0 0.0
    %2214 = vmatpush1.msra.mxu0 0.0
    %2215 = vmatprep.subr.mxu0 0.0
    %2216 = vmatpush1.msra.mxu0 %v1617
    %2217 = vmatprep.subr.mxu0 0.0
    %2218 = vmatpush1.msra.mxu0 %v1616
    %2219 = vmatprep.subr.mxu0 0.0
    %2220 = vmatpush2.msra.mxu0 0.0
    %2221 = vmatprep.subr.mxu0 0.0
    %2222 = vmatpush2.msra.mxu0 0.0
    %2223 = vmatprep.subr.mxu0 0.0
    %2224 = vmatpush2.msra.mxu0 0.0
    %2225 = vmatprep.subr.mxu0 0.0
    %2226 = vmatpush2.msra.mxu0 0.0
    %2227 = vmatprep.subr.mxu0 0.0
    %2228 = vmatpush2.msra.mxu0 0.0
    %2229 = vmatprep.subr.mxu0 0.0
    %2230 = vmatpush2.msra.mxu0 0.0
    %2231 = vmatprep.subr.mxu0 0.0
    %2232 = vmatpush2.msra.mxu0 0.0
    %2233 = vmatprep.subr.mxu0 0.0
    %2234 = vmatpush2.msra.mxu0 0.0
    %2235 = vmatprep.subr.mxu0 0.0
    %2236 = vmatpush2.msra.mxu0 0.0
    %2237 = vmatprep.subr.mxu0 0.0
    %2238 = vmatpush2.msra.mxu0 0.0
    %2239 = vmatprep.subr.mxu0 0.0
    %2240 = vmatpush2.msra.mxu0 0.0
    %2241 = vmatprep.subr.mxu0 0.0
    %2242 = vmatpush2.msra.mxu0 0.0
    %2243 = vmatprep.subr.mxu0 0.0
    %2244 = vmatpush2.msra.mxu0 0.0
    %2245 = vmatprep.subr.mxu0 0.0
    %2246 = vmatpush2.msra.mxu0 0.0
    %2247 = vmatprep.subr.mxu0 0.0
    %2248 = vmatpush2.msra.mxu0 0.0
    %2249 = vmatprep.subr.mxu0 0.0
    %2250 = vmatpush2.msra.mxu0 0.0
    %2251 = vmatprep.mubr.f32.mxu0 0.0
    %2252 = vmatmul.mubr.f32.gmra.mxu0 %v2179
    %v2253 = vpop.f32.mrf.mxu0
    %v2254 = vadd.f32 %v2165, %v2253
    %v2255 = vpop.f32.mrf.mxu0
    %2256 = vmatprep.mubr.f32.mxu0 0.0
    %2257 = vmatmul.mubr.f32.gmra.mxu0 %v2182
    %v2258 = vpop.f32.mrf.mxu0
    %v2259 = vadd.f32 %v2170, %v2258
    %v2260 = vpop.f32.mrf.mxu0
    %2261 = vmatprep.mubr.f32.mxu0 0.0
    %2262 = vmatmul.mubr.f32.gmra.mxu0 %v2185
    %v2263 = vpop.f32.mrf.mxu0
    %v2264 = vadd.f32 %v2175, %v2263
    %v2265 = vpop.f32.mrf.mxu0
    %2266 = vdwg.mxu0
    %v2267 = vadd.f32 %v1457, %v2254
    %v2268 = vadd.f32 %v1458, %v2259
    %v2269 = vadd.f32 %v1459, %v2264
    %s2270 = scalar_lea.vmem [#allocation10], 1
    %v2271 = vld [vmem:[%s2270] sm:$0x1]
    %v2273 = vlaneseq
    %v2274 = vshrl.u32 %v2273, 7
    %v2275 = vsub.s32 0, %v2274
    %v2276 = vrot.slane %v2271, %v2275
    %v2278 = vadd.f32 %v2267, %v2276
    %v2279 = vadd.f32 %v2268, %v2276
    %v2280 = vadd.f32 %v2269, %v2276
    %s2281 = scalar_lea.vmem [#allocation11], 1
    %v2282 = vld [vmem:[%s2281] sm:$0x1]
    %s2283 = scalar_lea.vmem [#allocation13], 1
    %v2284 = vld [vmem:[%s2283] sm:$0x1]
    %v2285 = vsel %vm348, %v2278, 0.0
    %2286 = vadd.xlane.f32.xlu0 %v2285
    %v2287 = vpop.xlane.xlu0 %2286
    %v2288 = vsel %vm348, %v2279, 0.0
    %2289 = vadd.xlane.f32.xlu0 %v2288
    %v2290 = vpop.xlane.xlu0 %2289
    %v2291 = vsel %vm355, %v2280, 0.0
    %2292 = vadd.xlane.f32.xlu0 %v2291
    %v2293 = vpop.xlane.xlu0 %2292
    %v2294 = vmul.f32 %v2287, %v359
    %v2295 = vmul.f32 %v2290, %v359
    %v2296 = vmul.f32 %v2293, %v359
    %v2297 = vsub.f32 %v2278, %v2294
    %v2298 = vsub.f32 %v2279, %v2295
    %v2299 = vsub.f32 %v2280, %v2296
    %v2300 = vmul.f32 %v2297, %v2297
    %v2301 = vmul.f32 %v2298, %v2298
    %v2302 = vmul.f32 %v2299, %v2299
    %v2303 = vsel %vm348, %v2300, 0.0
    %2304 = vadd.xlane.f32.xlu0 %v2303
    %v2305 = vpop.xlane.xlu0 %2304
    %v2306 = vsel %vm348, %v2301, 0.0
    %2307 = vadd.xlane.f32.xlu0 %v2306
    %v2308 = vpop.xlane.xlu0 %2307
    %v2309 = vsel %vm355, %v2302, 0.0
    %2310 = vadd.xlane.f32.xlu0 %v2309
    %v2311 = vpop.xlane.xlu0 %2310
    %v2312 = vmul.f32 %v2305, %v359
    %v2313 = vmul.f32 %v2308, %v359
    %v2314 = vmul.f32 %v2311, %v359
    %v2315 = vadd.f32 %v2312, 1e-05
    %v2316 = vadd.f32 %v2313, 1e-05
    %v2317 = vadd.f32 %v2314, 1e-05
    %v2318 = vrsqrt.pop %v2315
    %v2319 = vrsqrt.pop %v2316
    %v2320 = vrsqrt.pop %v2317
    %v2321 = vmul.f32 %v2297, %v2318
    %v2322 = vmul.f32 %v2298, %v2319
    %v2323 = vmul.f32 %v2299, %v2320
    %v2325 = vlaneseq
    %v2326 = vshrl.u32 %v2325, 7
    %v2327 = vsub.s32 0, %v2326
    %v2328 = vrot.slane %v2282, %v2327
    %v2330 = vmul.f32 %v2321, %v2328
    %v2331 = vmul.f32 %v2322, %v2328
    %v2332 = vmul.f32 %v2323, %v2328
    %v2334 = vlaneseq
    %v2335 = vshrl.u32 %v2334, 7
    %v2336 = vsub.s32 0, %v2335
    %v2337 = vrot.slane %v2284, %v2336
    %v2339 = vadd.f32 %v2330, %v2337
    %v2340 = vadd.f32 %v2331, %v2337
    %v2341 = vadd.f32 %v2332, %v2337
    %s2342 = scalar_lea.vmem [#allocation14], 32
    %v2343 = vld [vmem:[%s2342] sm:$0xff]
    %v2344 = vld [vmem:[%s2342 + $0x8] sm:$0xff]
    %v2345 = vld [vmem:[%s2342 + $0x10] sm:$0xff]
    %v2346 = vld [vmem:[%s2342 + $0x18] sm:$0xff]
    %s2347 = scalar_lea.vmem [#allocation16], 1
    %v2348 = vld [vmem:[%s2347] sm:$0x1]
    %v2350 = vlaneseq
    %v2351 = vshrl.u32 %v2350, 7
    %v2352 = vsub.s32 0, %v2351
    %v2353 = vrot.slane %v2348, %v2352
    %v2356 = vsel %vm348, %v2339, 0
    %v2359 = vsel %vm348, %v2340, 0
    %v2362 = vsel %vm348, %v2341, 0
    %2364 = vmatprep.subr.mxu0 0.0
    %2365 = vmatpush1.msra.mxu0 0.0
    %2366 = vmatprep.subr.mxu0 0.0
    %2367 = vmatpush1.msra.mxu0 0.0
    %2368 = vmatprep.subr.mxu0 0.0
    %2369 = vmatpush1.msra.mxu0 0.0
    %2370 = vmatprep.subr.mxu0 0.0
    %2371 = vmatpush1.msra.mxu0 0.0
    %2372 = vmatprep.subr.mxu0 0.0
    %2373 = vmatpush1.msra.mxu0 0.0
    %2374 = vmatprep.subr.mxu0 0.0
    %2375 = vmatpush1.msra.mxu0 0.0
    %2376 = vmatprep.subr.mxu0 0.0
    %2377 = vmatpush1.msra.mxu0 0.0
    %2378 = vmatprep.subr.mxu0 0.0
    %2379 = vmatpush1.msra.mxu0 0.0
    %2380 = vmatprep.subr.mxu0 0.0
    %2381 = vmatpush1.msra.mxu0 0.0
    %2382 = vmatprep.subr.mxu0 0.0
    %2383 = vmatpush1.msra.mxu0 0.0
    %2384 = vmatprep.subr.mxu0 0.0
    %2385 = vmatpush1.msra.mxu0 0.0
    %2386 = vmatprep.subr.mxu0 0.0
    %2387 = vmatpush1.msra.mxu0 0.0
    %2388 = vmatprep.subr.mxu0 0.0
    %2389 = vmatpush1.msra.mxu0 %v2346
    %2390 = vmatprep.subr.mxu0 0.0
    %2391 = vmatpush1.msra.mxu0 %v2345
    %2392 = vmatprep.subr.mxu0 0.0
    %2393 = vmatpush1.msra.mxu0 %v2344
    %2394 = vmatprep.subr.mxu0 0.0
    %2395 = vmatpush1.msra.mxu0 %v2343
    %2396 = vmatprep.subr.mxu0 0.0
    %2397 = vmatpush2.msra.mxu0 0.0
    %2398 = vmatprep.subr.mxu0 0.0
    %2399 = vmatpush2.msra.mxu0 0.0
    %2400 = vmatprep.subr.mxu0 0.0
    %2401 = vmatpush2.msra.mxu0 0.0
    %2402 = vmatprep.subr.mxu0 0.0
    %2403 = vmatpush2.msra.mxu0 0.0
    %2404 = vmatprep.subr.mxu0 0.0
    %2405 = vmatpush2.msra.mxu0 0.0
    %2406 = vmatprep.subr.mxu0 0.0
    %2407 = vmatpush2.msra.mxu0 0.0
    %2408 = vmatprep.subr.mxu0 0.0
    %2409 = vmatpush2.msra.mxu0 0.0
    %2410 = vmatprep.subr.mxu0 0.0
    %2411 = vmatpush2.msra.mxu0 0.0
    %2412 = vmatprep.subr.mxu0 0.0
    %2413 = vmatpush2.msra.mxu0 0.0
    %2414 = vmatprep.subr.mxu0 0.0
    %2415 = vmatpush2.msra.mxu0 0.0
    %2416 = vmatprep.subr.mxu0 0.0
    %2417 = vmatpush2.msra.mxu0 0.0
    %2418 = vmatprep.subr.mxu0 0.0
    %2419 = vmatpush2.msra.mxu0 0.0
    %2420 = vmatprep.subr.mxu0 0.0
    %2421 = vmatpush2.msra.mxu0 0.0
    %2422 = vmatprep.subr.mxu0 0.0
    %2423 = vmatpush2.msra.mxu0 0.0
    %2424 = vmatprep.subr.mxu0 0.0
    %2425 = vmatpush2.msra.mxu0 0.0
    %2426 = vmatprep.subr.mxu0 0.0
    %2427 = vmatpush2.msra.mxu0 0.0
    %2428 = vmatprep.mubr.f32.mxu0 0.0
    %2429 = vmatmul.mubr.f32.gmra.mxu0 %v2356
    %v2430 = vpop.f32.mrf.mxu0
    %v2431 = vadd.f32 %v2353, %v2430
    %v2432 = vpop.f32.mrf.mxu0
    %2433 = vmatprep.mubr.f32.mxu0 0.0
    %2434 = vmatmul.mubr.f32.gmra.mxu0 %v2359
    %v2435 = vpop.f32.mrf.mxu0
    %v2436 = vadd.f32 %v2353, %v2435
    %v2437 = vpop.f32.mrf.mxu0
    %2438 = vmatprep.mubr.f32.mxu0 0.0
    %2439 = vmatmul.mubr.f32.gmra.mxu0 %v2362
    %v2440 = vpop.f32.mrf.mxu0
    %v2441 = vadd.f32 %v2353, %v2440
    %v2442 = vpop.f32.mrf.mxu0
    %2443 = vdwg.mxu0
    %v2444 = vmul.f32 %v2431, 0.5
    %v2445 = vmul.f32 %v2436, 0.5
    %v2446 = vmul.f32 %v2441, 0.5
    %v2447 = vmul.f32 %v2431, 0.044715
    %v2448 = vmul.f32 %v2436, 0.044715
    %v2449 = vmul.f32 %v2441, 0.044715
    %v2450 = vmul.f32 %v2447, %v2431
    %v2451 = vmul.f32 %v2448, %v2436
    %v2452 = vmul.f32 %v2449, %v2441
    %v2453 = vmul.f32 %v2450, %v2431
    %v2454 = vmul.f32 %v2451, %v2436
    %v2455 = vmul.f32 %v2452, %v2441
    %v2456 = vadd.f32 %v2431, %v2453
    %v2457 = vadd.f32 %v2436, %v2454
    %v2458 = vadd.f32 %v2441, %v2455
    %v2459 = vmul.f32 %v2456, 0.7978846
    %v2460 = vmul.f32 %v2457, 0.7978846
    %v2461 = vmul.f32 %v2458, 0.7978846
    %v2462 = vtanh.pop %v2459
    %v2463 = vtanh.pop %v2460
    %v2464 = vtanh.pop %v2461
    %v2465 = vadd.f32 %v2462, 1.0
    %v2466 = vadd.f32 %v2463, 1.0
    %v2467 = vadd.f32 %v2464, 1.0
    %v2468 = vmul.f32 %v2444, %v2465
    %v2469 = vmul.f32 %v2445, %v2466
    %v2470 = vmul.f32 %v2446, %v2467
    %s2471 = scalar_lea.vmem [#allocation17], 32
    %v2472 = vld [vmem:[%s2471] sm:$0xff]
    %v2473 = vld [vmem:[%s2471 + $0x8] sm:$0xff]
    %v2474 = vld [vmem:[%s2471 + $0x10] sm:$0xff]
    %v2475 = vld [vmem:[%s2471 + $0x18] sm:$0xff]
    %v2477 = vsel %vm348, %v2468, 0
    %v2480 = vsel %vm348, %v2469, 0
    %v2483 = vsel %vm348, %v2470, 0
    %2485 = vmatprep.subr.mxu0 0.0
    %2486 = vmatpush1.msra.mxu0 0.0
    %2487 = vmatprep.subr.mxu0 0.0
    %2488 = vmatpush1.msra.mxu0 0.0
    %2489 = vmatprep.subr.mxu0 0.0
    %2490 = vmatpush1.msra.mxu0 0.0
    %2491 = vmatprep.subr.mxu0 0.0
    %2492 = vmatpush1.msra.mxu0 0.0
    %2493 = vmatprep.subr.mxu0 0.0
    %2494 = vmatpush1.msra.mxu0 0.0
    %2495 = vmatprep.subr.mxu0 0.0
    %2496 = vmatpush1.msra.mxu0 0.0
    %2497 = vmatprep.subr.mxu0 0.0
    %2498 = vmatpush1.msra.mxu0 0.0
    %2499 = vmatprep.subr.mxu0 0.0
    %2500 = vmatpush1.msra.mxu0 0.0
    %2501 = vmatprep.subr.mxu0 0.0
    %2502 = vmatpush1.msra.mxu0 0.0
    %2503 = vmatprep.subr.mxu0 0.0
    %2504 = vmatpush1.msra.mxu0 0.0
    %2505 = vmatprep.subr.mxu0 0.0
    %2506 = vmatpush1.msra.mxu0 0.0
    %2507 = vmatprep.subr.mxu0 0.0
    %2508 = vmatpush1.msra.mxu0 0.0
    %2509 = vmatprep.subr.mxu0 0.0
    %2510 = vmatpush1.msra.mxu0 %v2475
    %2511 = vmatprep.subr.mxu0 0.0
    %2512 = vmatpush1.msra.mxu0 %v2474
    %2513 = vmatprep.subr.mxu0 0.0
    %2514 = vmatpush1.msra.mxu0 %v2473
    %2515 = vmatprep.subr.mxu0 0.0
    %2516 = vmatpush1.msra.mxu0 %v2472
    %2517 = vmatprep.subr.mxu0 0.0
    %2518 = vmatpush2.msra.mxu0 0.0
    %2519 = vmatprep.subr.mxu0 0.0
    %2520 = vmatpush2.msra.mxu0 0.0
    %2521 = vmatprep.subr.mxu0 0.0
    %2522 = vmatpush2.msra.mxu0 0.0
    %2523 = vmatprep.subr.mxu0 0.0
    %2524 = vmatpush2.msra.mxu0 0.0
    %2525 = vmatprep.subr.mxu0 0.0
    %2526 = vmatpush2.msra.mxu0 0.0
    %2527 = vmatprep.subr.mxu0 0.0
    %2528 = vmatpush2.msra.mxu0 0.0
    %2529 = vmatprep.subr.mxu0 0.0
    %2530 = vmatpush2.msra.mxu0 0.0
    %2531 = vmatprep.subr.mxu0 0.0
    %2532 = vmatpush2.msra.mxu0 0.0
    %2533 = vmatprep.subr.mxu0 0.0
    %2534 = vmatpush2.msra.mxu0 0.0
    %2535 = vmatprep.subr.mxu0 0.0
    %2536 = vmatpush2.msra.mxu0 0.0
    %2537 = vmatprep.subr.mxu0 0.0
    %2538 = vmatpush2.msra.mxu0 0.0
    %2539 = vmatprep.subr.mxu0 0.0
    %2540 = vmatpush2.msra.mxu0 0.0
    %2541 = vmatprep.subr.mxu0 0.0
    %2542 = vmatpush2.msra.mxu0 0.0
    %2543 = vmatprep.subr.mxu0 0.0
    %2544 = vmatpush2.msra.mxu0 0.0
    %2545 = vmatprep.subr.mxu0 0.0
    %2546 = vmatpush2.msra.mxu0 0.0
    %2547 = vmatprep.subr.mxu0 0.0
    %2548 = vmatpush2.msra.mxu0 0.0
    %2549 = vmatprep.mubr.f32.mxu0 0.0
    %2550 = vmatmul.mubr.f32.gmra.mxu0 %v2477
    %v2551 = vpop.f32.mrf.mxu0
    %v2552 = vadd.f32 0.0, %v2551
    %v2553 = vpop.f32.mrf.mxu0
    %2554 = vmatprep.mubr.f32.mxu0 0.0
    %2555 = vmatmul.mubr.f32.gmra.mxu0 %v2480
    %v2556 = vpop.f32.mrf.mxu0
    %v2557 = vadd.f32 0.0, %v2556
    %v2558 = vpop.f32.mrf.mxu0
    %2559 = vmatprep.mubr.f32.mxu0 0.0
    %2560 = vmatmul.mubr.f32.gmra.mxu0 %v2483
    %v2561 = vpop.f32.mrf.mxu0
    %v2562 = vadd.f32 0.0, %v2561
    %v2563 = vpop.f32.mrf.mxu0
    %2564 = vdwg.mxu0
    %v2565 = vadd.f32 %v2278, %v2552
    %v2566 = vadd.f32 %v2279, %v2557
    %v2567 = vadd.f32 %v2280, %v2562
    %s2568 = scalar_lea.vmem [#allocation19], 1
    %v2569 = vld [vmem:[%s2568] sm:$0x1]
    %v2571 = vlaneseq
    %v2572 = vshrl.u32 %v2571, 7
    %v2573 = vsub.s32 0, %v2572
    %v2574 = vrot.slane %v2569, %v2573
    %v2576 = vadd.f32 %v2565, %v2574
    %v2577 = vadd.f32 %v2566, %v2574
    %v2578 = vadd.f32 %v2567, %v2574
    %v2579 = vld [vmem:[%s16] sm:$0xff]
    %v2580 = vld [vmem:[%s16 + $0x8] sm:$0xff]
    %v2581 = vld [vmem:[%s16 + $0x10] sm:$0x3]
    %v2582 = vld [vmem:[%s17] sm:$0xff]
    %v2583 = vld [vmem:[%s17 + $0x8] sm:$0xff]
    %v2584 = vld [vmem:[%s17 + $0x10] sm:$0x3]
    %v2586 = vsel %vm606, %v2582, 0
    %v2589 = vsel %vm606, %v2583, 0
    %v2592 = vsel %vm606, %v2584, 0
    %v2595 = vsel %vm658, %v340, 0
    %2597 = vmatprep.subr.mxu0 0.0
    %2598 = vmatpush1.msra.mxu0 0.0
    %2599 = vmatprep.subr.mxu0 0.0
    %2600 = vmatpush1.msra.mxu0 0.0
    %2601 = vmatprep.subr.mxu0 0.0
    %2602 = vmatpush1.msra.mxu0 0.0
    %2603 = vmatprep.subr.mxu0 0.0
    %2604 = vmatpush1.msra.mxu0 0.0
    %2605 = vmatprep.subr.mxu0 0.0
    %2606 = vmatpush1.msra.mxu0 0.0
    %2607 = vmatprep.subr.mxu0 0.0
    %2608 = vmatpush1.msra.mxu0 0.0
    %2609 = vmatprep.subr.mxu0 0.0
    %2610 = vmatpush1.msra.mxu0 0.0
    %2611 = vmatprep.subr.mxu0 0.0
    %2612 = vmatpush1.msra.mxu0 0.0
    %2613 = vmatprep.subr.mxu0 0.0
    %2614 = vmatpush1.msra.mxu0 0.0
    %2615 = vmatprep.subr.mxu0 0.0
    %2616 = vmatpush1.msra.mxu0 0.0
    %2617 = vmatprep.subr.mxu0 0.0
    %2618 = vmatpush1.msra.mxu0 0.0
    %2619 = vmatprep.subr.mxu0 0.0
    %2620 = vmatpush1.msra.mxu0 0.0
    %2621 = vmatprep.subr.mxu0 0.0
    %2622 = vmatpush1.msra.mxu0 0.0
    %2623 = vmatprep.subr.mxu0 0.0
    %2624 = vmatpush1.msra.mxu0 %v2595
    %2625 = vmatprep.subr.mxu0 0.0
    %2626 = vmatpush1.msra.mxu0 %v335
    %2627 = vmatprep.subr.mxu0 0.0
    %2628 = vmatpush1.msra.mxu0 %v330
    %2629 = vmatprep.subr.mxu0 0.0
    %2630 = vmatpush2.msra.mxu0 0.0
    %2631 = vmatprep.subr.mxu0 0.0
    %2632 = vmatpush2.msra.mxu0 0.0
    %2633 = vmatprep.subr.mxu0 0.0
    %2634 = vmatpush2.msra.mxu0 0.0
    %2635 = vmatprep.subr.mxu0 0.0
    %2636 = vmatpush2.msra.mxu0 0.0
    %2637 = vmatprep.subr.mxu0 0.0
    %2638 = vmatpush2.msra.mxu0 0.0
    %2639 = vmatprep.subr.mxu0 0.0
    %2640 = vmatpush2.msra.mxu0 0.0
    %2641 = vmatprep.subr.mxu0 0.0
    %2642 = vmatpush2.msra.mxu0 0.0
    %2643 = vmatprep.subr.mxu0 0.0
    %2644 = vmatpush2.msra.mxu0 0.0
    %2645 = vmatprep.subr.mxu0 0.0
    %2646 = vmatpush2.msra.mxu0 0.0
    %2647 = vmatprep.subr.mxu0 0.0
    %2648 = vmatpush2.msra.mxu0 0.0
    %2649 = vmatprep.subr.mxu0 0.0
    %2650 = vmatpush2.msra.mxu0 0.0
    %2651 = vmatprep.subr.mxu0 0.0
    %2652 = vmatpush2.msra.mxu0 0.0
    %2653 = vmatprep.subr.mxu0 0.0
    %2654 = vmatpush2.msra.mxu0 0.0
    %2655 = vmatprep.subr.mxu0 0.0
    %2656 = vmatpush2.msra.mxu0 0.0
    %2657 = vmatprep.subr.mxu0 0.0
    %2658 = vmatpush2.msra.mxu0 0.0
    %2659 = vmatprep.subr.mxu0 0.0
    %2660 = vmatpush2.msra.mxu0 0.0
    %2661 = vmatprep.mubr.f32.mxu0 0.0
    %2662 = vmatmul.mubr.f32.gmra.mxu0 %v2586
    %v2663 = vpop.f32.mrf.mxu0
    %v2664 = vadd.f32 0.0, %v2663
    %v2665 = vpop.f32.mrf.mxu0
    %2666 = vmatprep.mubr.f32.mxu0 0.0
    %2667 = vmatmul.mubr.f32.gmra.mxu0 %v2589
    %v2668 = vpop.f32.mrf.mxu0
    %v2669 = vadd.f32 0.0, %v2668
    %v2670 = vpop.f32.mrf.mxu0
    %2671 = vmatprep.mubr.f32.mxu0 0.0
    %2672 = vmatmul.mubr.f32.gmra.mxu0 %v2592
    %v2673 = vpop.f32.mrf.mxu0
    %v2674 = vadd.f32 0.0, %v2673
    %v2675 = vpop.f32.mrf.mxu0
    %2676 = vdwg.mxu0
    %v2678 = vsel %vm606, %v2579, 0
    %v2681 = vsel %vm606, %v2580, 0
    %v2684 = vsel %vm606, %v2581, 0
    %v2687 = vsel %vm658, %v2578, 0
    %2689 = vmatprep.subr.mxu0 0.0
    %2690 = vmatpush1.msra.mxu0 0.0
    %2691 = vmatprep.subr.mxu0 0.0
    %2692 = vmatpush1.msra.mxu0 0.0
    %2693 = vmatprep.subr.mxu0 0.0
    %2694 = vmatpush1.msra.mxu0 0.0
    %2695 = vmatprep.subr.mxu0 0.0
    %2696 = vmatpush1.msra.mxu0 0.0
    %2697 = vmatprep.subr.mxu0 0.0
    %2698 = vmatpush1.msra.mxu0 0.0
    %2699 = vmatprep.subr.mxu0 0.0
    %2700 = vmatpush1.msra.mxu0 0.0
    %2701 = vmatprep.subr.mxu0 0.0
    %2702 = vmatpush1.msra.mxu0 0.0
    %2703 = vmatprep.subr.mxu0 0.0
    %2704 = vmatpush1.msra.mxu0 0.0
    %2705 = vmatprep.subr.mxu0 0.0
    %2706 = vmatpush1.msra.mxu0 0.0
    %2707 = vmatprep.subr.mxu0 0.0
    %2708 = vmatpush1.msra.mxu0 0.0
    %2709 = vmatprep.subr.mxu0 0.0
    %2710 = vmatpush1.msra.mxu0 0.0
    %2711 = vmatprep.subr.mxu0 0.0
    %2712 = vmatpush1.msra.mxu0 0.0
    %2713 = vmatprep.subr.mxu0 0.0
    %2714 = vmatpush1.msra.mxu0 0.0
    %2715 = vmatprep.subr.mxu0 0.0
    %2716 = vmatpush1.msra.mxu0 %v2687
    %2717 = vmatprep.subr.mxu0 0.0
    %2718 = vmatpush1.msra.mxu0 %v2577
    %2719 = vmatprep.subr.mxu0 0.0
    %2720 = vmatpush1.msra.mxu0 %v2576
    %2721 = vmatprep.subr.mxu0 0.0
    %2722 = vmatpush2.msra.mxu0 0.0
    %2723 = vmatprep.subr.mxu0 0.0
    %2724 = vmatpush2.msra.mxu0 0.0
    %2725 = vmatprep.subr.mxu0 0.0
    %2726 = vmatpush2.msra.mxu0 0.0
    %2727 = vmatprep.subr.mxu0 0.0
    %2728 = vmatpush2.msra.mxu0 0.0
    %2729 = vmatprep.subr.mxu0 0.0
    %2730 = vmatpush2.msra.mxu0 0.0
    %2731 = vmatprep.subr.mxu0 0.0
    %2732 = vmatpush2.msra.mxu0 0.0
    %2733 = vmatprep.subr.mxu0 0.0
    %2734 = vmatpush2.msra.mxu0 0.0
    %2735 = vmatprep.subr.mxu0 0.0
    %2736 = vmatpush2.msra.mxu0 0.0
    %2737 = vmatprep.subr.mxu0 0.0
    %2738 = vmatpush2.msra.mxu0 0.0
    %2739 = vmatprep.subr.mxu0 0.0
    %2740 = vmatpush2.msra.mxu0 0.0
    %2741 = vmatprep.subr.mxu0 0.0
    %2742 = vmatpush2.msra.mxu0 0.0
    %2743 = vmatprep.subr.mxu0 0.0
    %2744 = vmatpush2.msra.mxu0 0.0
    %2745 = vmatprep.subr.mxu0 0.0
    %2746 = vmatpush2.msra.mxu0 0.0
    %2747 = vmatprep.subr.mxu0 0.0
    %2748 = vmatpush2.msra.mxu0 0.0
    %2749 = vmatprep.subr.mxu0 0.0
    %2750 = vmatpush2.msra.mxu0 0.0
    %2751 = vmatprep.subr.mxu0 0.0
    %2752 = vmatpush2.msra.mxu0 0.0
    %2753 = vmatprep.mubr.f32.mxu0 0.0
    %2754 = vmatmul.mubr.f32.gmra.mxu0 %v2678
    %v2755 = vpop.f32.mrf.mxu0
    %v2756 = vadd.f32 %v2664, %v2755
    %v2757 = vpop.f32.mrf.mxu0
    %2758 = vmatprep.mubr.f32.mxu0 0.0
    %2759 = vmatmul.mubr.f32.gmra.mxu0 %v2681
    %v2760 = vpop.f32.mrf.mxu0
    %v2761 = vadd.f32 %v2669, %v2760
    %v2762 = vpop.f32.mrf.mxu0
    %2763 = vmatprep.mubr.f32.mxu0 0.0
    %2764 = vmatmul.mubr.f32.gmra.mxu0 %v2684
    %v2765 = vpop.f32.mrf.mxu0
    %v2766 = vadd.f32 %v2674, %v2765
    %v2767 = vpop.f32.mrf.mxu0
    %2768 = vdwg.mxu0
    %v2769 = vld [vmem:[%s18] sm:$0xff]
    %v2770 = vld [vmem:[%s18 + $0x8] sm:$0xff]
    %v2771 = vld [vmem:[%s18 + $0x10] sm:$0x3]
    %2773 = vset.pattern.permute.xlu0 0
    %2774 = vperm.xlu0 %2773, %v2769
    %v2775 = vpop.permute.xlu0 %2774
    %2778 = vset.pattern.permute.xlu0 0
    %2779 = vperm.xlu0 %2778, %v2770
    %v2780 = vpop.permute.xlu0 %2779
    %2783 = vset.pattern.permute.xlu0 0
    %2784 = vperm.xlu0 %2783, %v2771
    %v2785 = vpop.permute.xlu0 %2784
    %v2787 = vadd.f32 %v2756, %v2775
    %v2788 = vadd.f32 %v2761, %v2780
    %v2789 = vadd.f32 %v2766, %v2785
    %s2790 = scalar_lea.vmem [#allocation7], 2
    %v2791 = vld [vmem:[%s2790] sm:$0x1]
    %s2792 = scalar_lea.vmem [#allocation8], 2
    %v2793 = vld [vmem:[%s2792] sm:$0x1]
    %v2794 = vsel %vm348, %v2787, 0.0
    %2795 = vadd.xlane.f32.xlu0 %v2794
    %v2796 = vpop.xlane.xlu0 %2795
    %v2797 = vsel %vm348, %v2788, 0.0
    %2798 = vadd.xlane.f32.xlu0 %v2797
    %v2799 = vpop.xlane.xlu0 %2798
    %v2800 = vsel %vm355, %v2789, 0.0
    %2801 = vadd.xlane.f32.xlu0 %v2800
    %v2802 = vpop.xlane.xlu0 %2801
    %v2803 = vmul.f32 %v2796, %v359
    %v2804 = vmul.f32 %v2799, %v359
    %v2805 = vmul.f32 %v2802, %v359
    %v2806 = vsub.f32 %v2787, %v2803
    %v2807 = vsub.f32 %v2788, %v2804
    %v2808 = vsub.f32 %v2789, %v2805
    %v2809 = vmul.f32 %v2806, %v2806
    %v2810 = vmul.f32 %v2807, %v2807
    %v2811 = vmul.f32 %v2808, %v2808
    %v2812 = vsel %vm348, %v2809, 0.0
    %2813 = vadd.xlane.f32.xlu0 %v2812
    %v2814 = vpop.xlane.xlu0 %2813
    %v2815 = vsel %vm348, %v2810, 0.0
    %2816 = vadd.xlane.f32.xlu0 %v2815
    %v2817 = vpop.xlane.xlu0 %2816
    %v2818 = vsel %vm355, %v2811, 0.0
    %2819 = vadd.xlane.f32.xlu0 %v2818
    %v2820 = vpop.xlane.xlu0 %2819
    %v2821 = vmul.f32 %v2814, %v359
    %v2822 = vmul.f32 %v2817, %v359
    %v2823 = vmul.f32 %v2820, %v359
    %v2824 = vadd.f32 %v2821, 1e-05
    %v2825 = vadd.f32 %v2822, 1e-05
    %v2826 = vadd.f32 %v2823, 1e-05
    %v2827 = vrsqrt.pop %v2824
    %v2828 = vrsqrt.pop %v2825
    %v2829 = vrsqrt.pop %v2826
    %v2830 = vmul.f32 %v2806, %v2827
    %v2831 = vmul.f32 %v2807, %v2828
    %v2832 = vmul.f32 %v2808, %v2829
    %v2834 = vlaneseq
    %v2835 = vshrl.u32 %v2834, 7
    %v2836 = vsub.s32 0, %v2835
    %v2837 = vrot.slane %v2791, %v2836
    %v2839 = vmul.f32 %v2830, %v2837
    %v2840 = vmul.f32 %v2831, %v2837
    %v2841 = vmul.f32 %v2832, %v2837
    %v2843 = vlaneseq
    %v2844 = vshrl.u32 %v2843, 7
    %v2845 = vsub.s32 0, %v2844
    %v2846 = vrot.slane %v2793, %v2845
    %v2848 = vadd.f32 %v2839, %v2846
    %v2849 = vadd.f32 %v2840, %v2846
    %v2850 = vadd.f32 %v2841, %v2846
    %s2851 = scalar_lea.vmem %s7, 64
    %v2852 = vld [vmem:[%s2851] sm:$0xff]
    %v2853 = vld [vmem:[%s2851 + $0x8] sm:$0xff]
    %v2854 = vld [vmem:[%s2851 + $0x10] sm:$0xff]
    %v2855 = vld [vmem:[%s2851 + $0x18] sm:$0xff]
    %v2857 = vsel %vm348, %v2848, 0
    %v2860 = vsel %vm348, %v2849, 0
    %v2863 = vsel %vm348, %v2850, 0
    %2865 = vmatprep.subr.mxu0 0.0
    %2866 = vmatpush1.msra.mxu0 0.0
    %2867 = vmatprep.subr.mxu0 0.0
    %2868 = vmatpush1.msra.mxu0 0.0
    %2869 = vmatprep.subr.mxu0 0.0
    %2870 = vmatpush1.msra.mxu0 0.0
    %2871 = vmatprep.subr.mxu0 0.0
    %2872 = vmatpush1.msra.mxu0 0.0
    %2873 = vmatprep.subr.mxu0 0.0
    %2874 = vmatpush1.msra.mxu0 0.0
    %2875 = vmatprep.subr.mxu0 0.0
    %2876 = vmatpush1.msra.mxu0 0.0
    %2877 = vmatprep.subr.mxu0 0.0
    %2878 = vmatpush1.msra.mxu0 0.0
    %2879 = vmatprep.subr.mxu0 0.0
    %2880 = vmatpush1.msra.mxu0 0.0
    %2881 = vmatprep.subr.mxu0 0.0
    %2882 = vmatpush1.msra.mxu0 0.0
    %2883 = vmatprep.subr.mxu0 0.0
    %2884 = vmatpush1.msra.mxu0 0.0
    %2885 = vmatprep.subr.mxu0 0.0
    %2886 = vmatpush1.msra.mxu0 0.0
    %2887 = vmatprep.subr.mxu0 0.0
    %2888 = vmatpush1.msra.mxu0 0.0
    %2889 = vmatprep.subr.mxu0 0.0
    %2890 = vmatpush1.msra.mxu0 %v2855
    %2891 = vmatprep.subr.mxu0 0.0
    %2892 = vmatpush1.msra.mxu0 %v2854
    %2893 = vmatprep.subr.mxu0 0.0
    %2894 = vmatpush1.msra.mxu0 %v2853
    %2895 = vmatprep.subr.mxu0 0.0
    %2896 = vmatpush1.msra.mxu0 %v2852
    %2897 = vmatprep.subr.mxu0 0.0
    %2898 = vmatpush2.msra.mxu0 0.0
    %2899 = vmatprep.subr.mxu0 0.0
    %2900 = vmatpush2.msra.mxu0 0.0
    %2901 = vmatprep.subr.mxu0 0.0
    %2902 = vmatpush2.msra.mxu0 0.0
    %2903 = vmatprep.subr.mxu0 0.0
    %2904 = vmatpush2.msra.mxu0 0.0
    %2905 = vmatprep.subr.mxu0 0.0
    %2906 = vmatpush2.msra.mxu0 0.0
    %2907 = vmatprep.subr.mxu0 0.0
    %2908 = vmatpush2.msra.mxu0 0.0
    %2909 = vmatprep.subr.mxu0 0.0
    %2910 = vmatpush2.msra.mxu0 0.0
    %2911 = vmatprep.subr.mxu0 0.0
    %2912 = vmatpush2.msra.mxu0 0.0
    %2913 = vmatprep.subr.mxu0 0.0
    %2914 = vmatpush2.msra.mxu0 0.0
    %2915 = vmatprep.subr.mxu0 0.0
    %2916 = vmatpush2.msra.mxu0 0.0
    %2917 = vmatprep.subr.mxu0 0.0
    %2918 = vmatpush2.msra.mxu0 0.0
    %2919 = vmatprep.subr.mxu0 0.0
    %2920 = vmatpush2.msra.mxu0 0.0
    %2921 = vmatprep.subr.mxu0 0.0
    %2922 = vmatpush2.msra.mxu0 0.0
    %2923 = vmatprep.subr.mxu0 0.0
    %2924 = vmatpush2.msra.mxu0 0.0
    %2925 = vmatprep.subr.mxu0 0.0
    %2926 = vmatpush2.msra.mxu0 0.0
    %2927 = vmatprep.subr.mxu0 0.0
    %2928 = vmatpush2.msra.mxu0 0.0
    %2929 = vmatprep.mubr.f32.mxu0 0.0
    %2930 = vmatmul.mubr.f32.gmra.mxu0 %v2857
    %v2931 = vpop.f32.mrf.mxu0
    %v2932 = vadd.f32 0.0, %v2931
    %v2933 = vpop.f32.mrf.mxu0
    %2934 = vmatprep.mubr.f32.mxu0 0.0
    %2935 = vmatmul.mubr.f32.gmra.mxu0 %v2860
    %v2936 = vpop.f32.mrf.mxu0
    %v2937 = vadd.f32 0.0, %v2936
    %v2938 = vpop.f32.mrf.mxu0
    %2939 = vmatprep.mubr.f32.mxu0 0.0
    %2940 = vmatmul.mubr.f32.gmra.mxu0 %v2863
    %v2941 = vpop.f32.mrf.mxu0
    %v2942 = vadd.f32 0.0, %v2941
    %v2943 = vpop.f32.mrf.mxu0
    %2944 = vdwg.mxu0
    %s2945 = scalar_lea.vmem %s8, 64
    %v2946 = vld [vmem:[%s2945] sm:$0xff]
    %v2947 = vld [vmem:[%s2945 + $0x8] sm:$0xff]
    %v2948 = vld [vmem:[%s2945 + $0x10] sm:$0xff]
    %v2949 = vld [vmem:[%s2945 + $0x18] sm:$0xff]
    %2953 = vrot.lane.b32.xlu0 %v2932, 96
    %v2954 = vpop.permute.xlu0 %2953
    %2955 = vrot.lane.b32.xlu0 %v2937, 96
    %v2956 = vpop.permute.xlu0 %2955
    %2957 = vrot.lane.b32.xlu0 %v2942, 96
    %v2958 = vpop.permute.xlu0 %2957
    %v2959 = vsel %vm253, %v2932, 0
    %v2961 = vsel %vm253, %v2937, 0
    %v2963 = vsel %vm253, %v2942, 0
    %v2965 = vsel %vm253, %v2954, 0
    %v2967 = vsel %vm253, %v2956, 0
    %v2969 = vsel %vm253, %v2958, 0
    %2971 = vmatprep.subr.mxu0 0.0
    %2972 = vmatpush1.xpose.msra.mxu0 0.0
    %2973 = vmatprep.subr.mxu0 0.0
    %2974 = vmatpush1.xpose.msra.mxu0 0.0
    %2975 = vmatprep.subr.mxu0 0.0
    %2976 = vmatpush1.xpose.msra.mxu0 0.0
    %2977 = vmatprep.subr.mxu0 0.0
    %2978 = vmatpush1.xpose.msra.mxu0 0.0
    %2979 = vmatprep.subr.mxu0 0.0
    %2980 = vmatpush1.xpose.msra.mxu0 0.0
    %2981 = vmatprep.subr.mxu0 0.0
    %2982 = vmatpush1.xpose.msra.mxu0 0.0
    %2983 = vmatprep.subr.mxu0 0.0
    %2984 = vmatpush1.xpose.msra.mxu0 0.0
    %2985 = vmatprep.subr.mxu0 0.0
    %2986 = vmatpush1.xpose.msra.mxu0 0.0
    %2987 = vmatprep.subr.mxu0 0.0
    %2988 = vmatpush1.xpose.msra.mxu0 0.0
    %2989 = vmatprep.subr.mxu0 0.0
    %2990 = vmatpush1.xpose.msra.mxu0 0.0
    %2991 = vmatprep.subr.mxu0 0.0
    %2992 = vmatpush1.xpose.msra.mxu0 0.0
    %2993 = vmatprep.subr.mxu0 0.0
    %2994 = vmatpush1.xpose.msra.mxu0 0.0
    %2995 = vmatprep.subr.mxu0 0.0
    %2996 = vmatpush1.xpose.msra.mxu0 0.0
    %2997 = vmatprep.subr.mxu0 0.0
    %2998 = vmatpush1.xpose.msra.mxu0 %v2969
    %2999 = vmatprep.subr.mxu0 0.0
    %3000 = vmatpush1.xpose.msra.mxu0 %v2967
    %3001 = vmatprep.subr.mxu0 0.0
    %3002 = vmatpush1.xpose.msra.mxu0 %v2965
    %3003 = vmatprep.subr.mxu0 0.0
    %3004 = vmatpush2.xpose.msra.mxu0 0.0
    %3005 = vmatprep.subr.mxu0 0.0
    %3006 = vmatpush2.xpose.msra.mxu0 0.0
    %3007 = vmatprep.subr.mxu0 0.0
    %3008 = vmatpush2.xpose.msra.mxu0 0.0
    %3009 = vmatprep.subr.mxu0 0.0
    %3010 = vmatpush2.xpose.msra.mxu0 0.0
    %3011 = vmatprep.subr.mxu0 0.0
    %3012 = vmatpush2.xpose.msra.mxu0 0.0
    %3013 = vmatprep.subr.mxu0 0.0
    %3014 = vmatpush2.xpose.msra.mxu0 0.0
    %3015 = vmatprep.subr.mxu0 0.0
    %3016 = vmatpush2.xpose.msra.mxu0 0.0
    %3017 = vmatprep.subr.mxu0 0.0
    %3018 = vmatpush2.xpose.msra.mxu0 0.0
    %3019 = vmatprep.subr.mxu0 0.0
    %3020 = vmatpush2.xpose.msra.mxu0 0.0
    %3021 = vmatprep.subr.mxu0 0.0
    %3022 = vmatpush2.xpose.msra.mxu0 0.0
    %3023 = vmatprep.subr.mxu0 0.0
    %3024 = vmatpush2.xpose.msra.mxu0 0.0
    %3025 = vmatprep.subr.mxu0 0.0
    %3026 = vmatpush2.xpose.msra.mxu0 0.0
    %3027 = vmatprep.subr.mxu0 0.0
    %3028 = vmatpush2.xpose.msra.mxu0 0.0
    %3029 = vmatprep.subr.mxu0 0.0
    %3030 = vmatpush2.xpose.msra.mxu0 0.0
    %3031 = vmatprep.subr.mxu0 0.0
    %3032 = vmatpush2.xpose.msra.mxu0 0.0
    %3033 = vmatprep.subr.mxu0 0.0
    %3034 = vmatpush2.xpose.msra.mxu0 0.0
    %3035 = vmatprep.mubr.f32.mxu0 0.0
    %3036 = vmatmul.mubr.f32.gmra.mxu0 %v2959
    %v3037 = vpop.f32.mrf.mxu0
    %v3038 = vadd.f32 %v343, %v3037
    %v3039 = vpop.f32.mrf.mxu0
    %3040 = vmatprep.mubr.f32.mxu0 0.0
    %3041 = vmatmul.mubr.f32.gmra.mxu0 %v2961
    %v3042 = vpop.f32.mrf.mxu0
    %v3043 = vadd.f32 %v344, %v3042
    %v3044 = vpop.f32.mrf.mxu0
    %3045 = vmatprep.mubr.f32.mxu0 0.0
    %3046 = vmatmul.mubr.f32.gmra.mxu0 %v2963
    %v3047 = vpop.f32.mrf.mxu0
    %v3048 = vadd.f32 %v345, %v3047
    %v3049 = vpop.f32.mrf.mxu0
    %3050 = vdwg.mxu0
    %v3051 = vsel %vm606, %v3038, -inf
    %3052 = vmax.xlane.f32.xlu0 %v3051
    %v3053 = vpop.xlane.xlu0 %3052
    %v3054 = vsel %vm606, %v3043, -inf
    %3055 = vmax.xlane.f32.xlu0 %v3054
    %v3056 = vpop.xlane.xlu0 %3055
    %v3057 = vsel %vm613, %v3048, -inf
    %3058 = vmax.xlane.f32.xlu0 %v3057
    %v3059 = vpop.xlane.xlu0 %3058
    %v3060 = vsub.f32 %v3038, %v3053
    %v3061 = vsub.f32 %v3043, %v3056
    %v3062 = vsub.f32 %v3048, %v3059
    %v3063 = vmul.f32 %v3060, 1.442695
    %v3064 = vpow.pop %v3063
    %v3065 = vmul.f32 %v3061, 1.442695
    %v3066 = vpow.pop %v3065
    %v3067 = vmul.f32 %v3062, 1.442695
    %v3068 = vpow.pop %v3067
    %v3069 = vsel %vm606, %v3064, 0.0
    %3070 = vadd.xlane.f32.xlu0 %v3069
    %v3071 = vpop.xlane.xlu0 %3070
    %v3072 = vsel %vm606, %v3066, 0.0
    %3073 = vadd.xlane.f32.xlu0 %v3072
    %v3074 = vpop.xlane.xlu0 %3073
    %v3075 = vsel %vm613, %v3068, 0.0
    %3076 = vadd.xlane.f32.xlu0 %v3075
    %v3077 = vpop.xlane.xlu0 %3076
    %v3078 = vrcp.pop %v3071
    %v3079 = vrcp.pop %v3074
    %v3080 = vrcp.pop %v3077
    %v3081 = vmul.f32 %v3064, %v3078
    %v3082 = vmul.f32 %v3066, %v3079
    %v3083 = vmul.f32 %v3068, %v3080
    %3084 = vrot.lane.b32.xlu0 %v2932, 64
    %v3085 = vpop.permute.xlu0 %3084
    %3086 = vrot.lane.b32.xlu0 %v2937, 64
    %v3087 = vpop.permute.xlu0 %3086
    %3088 = vrot.lane.b32.xlu0 %v2942, 64
    %v3089 = vpop.permute.xlu0 %3088
    %v3093 = vsel %vm606, %v3081, 0
    %v3096 = vsel %vm606, %v3082, 0
    %v3099 = vsel %vm606, %v3083, 0
    %v3101 = vsel %vm658, %v3089, 0
    %3103 = vmatprep.subr.mxu0 0.0
    %3104 = vmatpush1.msra.mxu0 0.0
    %3105 = vmatprep.subr.mxu0 0.0
    %3106 = vmatpush1.msra.mxu0 0.0
    %3107 = vmatprep.subr.mxu0 0.0
    %3108 = vmatpush1.msra.mxu0 0.0
    %3109 = vmatprep.subr.mxu0 0.0
    %3110 = vmatpush1.msra.mxu0 0.0
    %3111 = vmatprep.subr.mxu0 0.0
    %3112 = vmatpush1.msra.mxu0 0.0
    %3113 = vmatprep.subr.mxu0 0.0
    %3114 = vmatpush1.msra.mxu0 0.0
    %3115 = vmatprep.subr.mxu0 0.0
    %3116 = vmatpush1.msra.mxu0 0.0
    %3117 = vmatprep.subr.mxu0 0.0
    %3118 = vmatpush1.msra.mxu0 0.0
    %3119 = vmatprep.subr.mxu0 0.0
    %3120 = vmatpush1.msra.mxu0 0.0
    %3121 = vmatprep.subr.mxu0 0.0
    %3122 = vmatpush1.msra.mxu0 0.0
    %3123 = vmatprep.subr.mxu0 0.0
    %3124 = vmatpush1.msra.mxu0 0.0
    %3125 = vmatprep.subr.mxu0 0.0
    %3126 = vmatpush1.msra.mxu0 0.0
    %3127 = vmatprep.subr.mxu0 0.0
    %3128 = vmatpush1.msra.mxu0 0.0
    %3129 = vmatprep.subr.mxu0 0.0
    %3130 = vmatpush1.msra.mxu0 %v3101
    %3131 = vmatprep.subr.mxu0 0.0
    %3132 = vmatpush1.msra.mxu0 %v3087
    %3133 = vmatprep.subr.mxu0 0.0
    %3134 = vmatpush1.msra.mxu0 %v3085
    %3135 = vmatprep.subr.mxu0 0.0
    %3136 = vmatpush2.msra.mxu0 0.0
    %3137 = vmatprep.subr.mxu0 0.0
    %3138 = vmatpush2.msra.mxu0 0.0
    %3139 = vmatprep.subr.mxu0 0.0
    %3140 = vmatpush2.msra.mxu0 0.0
    %3141 = vmatprep.subr.mxu0 0.0
    %3142 = vmatpush2.msra.mxu0 0.0
    %3143 = vmatprep.subr.mxu0 0.0
    %3144 = vmatpush2.msra.mxu0 0.0
    %3145 = vmatprep.subr.mxu0 0.0
    %3146 = vmatpush2.msra.mxu0 0.0
    %3147 = vmatprep.subr.mxu0 0.0
    %3148 = vmatpush2.msra.mxu0 0.0
    %3149 = vmatprep.subr.mxu0 0.0
    %3150 = vmatpush2.msra.mxu0 0.0
    %3151 = vmatprep.subr.mxu0 0.0
    %3152 = vmatpush2.msra.mxu0 0.0
    %3153 = vmatprep.subr.mxu0 0.0
    %3154 = vmatpush2.msra.mxu0 0.0
    %3155 = vmatprep.subr.mxu0 0.0
    %3156 = vmatpush2.msra.mxu0 0.0
    %3157 = vmatprep.subr.mxu0 0.0
    %3158 = vmatpush2.msra.mxu0 0.0
    %3159 = vmatprep.subr.mxu0 0.0
    %3160 = vmatpush2.msra.mxu0 0.0
    %3161 = vmatprep.subr.mxu0 0.0
    %3162 = vmatpush2.msra.mxu0 0.0
    %3163 = vmatprep.subr.mxu0 0.0
    %3164 = vmatpush2.msra.mxu0 0.0
    %3165 = vmatprep.subr.mxu0 0.0
    %3166 = vmatpush2.msra.mxu0 0.0
    %3167 = vmatprep.mubr.f32.mxu0 0.0
    %3168 = vmatmul.mubr.f32.gmra.mxu0 %v3093
    %v3169 = vpop.f32.mrf.mxu0
    %v3170 = vadd.f32 0.0, %v3169
    %v3171 = vpop.f32.mrf.mxu0
    %3172 = vmatprep.mubr.f32.mxu0 0.0
    %3173 = vmatmul.mubr.f32.gmra.mxu0 %v3096
    %v3174 = vpop.f32.mrf.mxu0
    %v3175 = vadd.f32 0.0, %v3174
    %v3176 = vpop.f32.mrf.mxu0
    %3177 = vmatprep.mubr.f32.mxu0 0.0
    %3178 = vmatmul.mubr.f32.gmra.mxu0 %v3099
    %v3179 = vpop.f32.mrf.mxu0
    %v3180 = vadd.f32 0.0, %v3179
    %v3181 = vpop.f32.mrf.mxu0
    %3182 = vdwg.mxu0
    %3183 = vrot.lane.b32.xlu0 %v2932, 112
    %v3184 = vpop.permute.xlu0 %3183
    %3185 = vrot.lane.b32.xlu0 %v2937, 112
    %v3186 = vpop.permute.xlu0 %3185
    %3187 = vrot.lane.b32.xlu0 %v2942, 112
    %v3188 = vpop.permute.xlu0 %3187
    %3189 = vrot.lane.b32.xlu0 %v2932, 80
    %v3190 = vpop.permute.xlu0 %3189
    %3191 = vrot.lane.b32.xlu0 %v2937, 80
    %v3192 = vpop.permute.xlu0 %3191
    %3193 = vrot.lane.b32.xlu0 %v2942, 80
    %v3194 = vpop.permute.xlu0 %3193
    %v3195 = vsel %vm253, %v3184, 0
    %v3197 = vsel %vm253, %v3186, 0
    %v3199 = vsel %vm253, %v3188, 0
    %v3201 = vsel %vm253, %v3190, 0
    %v3203 = vsel %vm253, %v3192, 0
    %v3205 = vsel %vm253, %v3194, 0
    %3207 = vmatprep.subr.mxu0 0.0
    %3208 = vmatpush1.xpose.msra.mxu0 0.0
    %3209 = vmatprep.subr.mxu0 0.0
    %3210 = vmatpush1.xpose.msra.mxu0 0.0
    %3211 = vmatprep.subr.mxu0 0.0
    %3212 = vmatpush1.xpose.msra.mxu0 0.0
    %3213 = vmatprep.subr.mxu0 0.0
    %3214 = vmatpush1.xpose.msra.mxu0 0.0
    %3215 = vmatprep.subr.mxu0 0.0
    %3216 = vmatpush1.xpose.msra.mxu0 0.0
    %3217 = vmatprep.subr.mxu0 0.0
    %3218 = vmatpush1.xpose.msra.mxu0 0.0
    %3219 = vmatprep.subr.mxu0 0.0
    %3220 = vmatpush1.xpose.msra.mxu0 0.0
    %3221 = vmatprep.subr.mxu0 0.0
    %3222 = vmatpush1.xpose.msra.mxu0 0.0
    %3223 = vmatprep.subr.mxu0 0.0
    %3224 = vmatpush1.xpose.msra.mxu0 0.0
    %3225 = vmatprep.subr.mxu0 0.0
    %3226 = vmatpush1.xpose.msra.mxu0 0.0
    %3227 = vmatprep.subr.mxu0 0.0
    %3228 = vmatpush1.xpose.msra.mxu0 0.0
    %3229 = vmatprep.subr.mxu0 0.0
    %3230 = vmatpush1.xpose.msra.mxu0 0.0
    %3231 = vmatprep.subr.mxu0 0.0
    %3232 = vmatpush1.xpose.msra.mxu0 0.0
    %3233 = vmatprep.subr.mxu0 0.0
    %3234 = vmatpush1.xpose.msra.mxu0 %v3205
    %3235 = vmatprep.subr.mxu0 0.0
    %3236 = vmatpush1.xpose.msra.mxu0 %v3203
    %3237 = vmatprep.subr.mxu0 0.0
    %3238 = vmatpush1.xpose.msra.mxu0 %v3201
    %3239 = vmatprep.subr.mxu0 0.0
    %3240 = vmatpush2.xpose.msra.mxu0 0.0
    %3241 = vmatprep.subr.mxu0 0.0
    %3242 = vmatpush2.xpose.msra.mxu0 0.0
    %3243 = vmatprep.subr.mxu0 0.0
    %3244 = vmatpush2.xpose.msra.mxu0 0.0
    %3245 = vmatprep.subr.mxu0 0.0
    %3246 = vmatpush2.xpose.msra.mxu0 0.0
    %3247 = vmatprep.subr.mxu0 0.0
    %3248 = vmatpush2.xpose.msra.mxu0 0.0
    %3249 = vmatprep.subr.mxu0 0.0
    %3250 = vmatpush2.xpose.msra.mxu0 0.0
    %3251 = vmatprep.subr.mxu0 0.0
    %3252 = vmatpush2.xpose.msra.mxu0 0.0
    %3253 = vmatprep.subr.mxu0 0.0
    %3254 = vmatpush2.xpose.msra.mxu0 0.0
    %3255 = vmatprep.subr.mxu0 0.0
    %3256 = vmatpush2.xpose.msra.mxu0 0.0
    %3257 = vmatprep.subr.mxu0 0.0
    %3258 = vmatpush2.xpose.msra.mxu0 0.0
    %3259 = vmatprep.subr.mxu0 0.0
    %3260 = vmatpush2.xpose.msra.mxu0 0.0
    %3261 = vmatprep.subr.mxu0 0.0
    %3262 = vmatpush2.xpose.msra.mxu0 0.0
    %3263 = vmatprep.subr.mxu0 0.0
    %3264 = vmatpush2.xpose.msra.mxu0 0.0
    %3265 = vmatprep.subr.mxu0 0.0
    %3266 = vmatpush2.xpose.msra.mxu0 0.0
    %3267 = vmatprep.subr.mxu0 0.0
    %3268 = vmatpush2.xpose.msra.mxu0 0.0
    %3269 = vmatprep.subr.mxu0 0.0
    %3270 = vmatpush2.xpose.msra.mxu0 0.0
    %3271 = vmatprep.mubr.f32.mxu0 0.0
    %3272 = vmatmul.mubr.f32.gmra.mxu0 %v3195
    %v3273 = vpop.f32.mrf.mxu0
    %v3274 = vadd.f32 %v343, %v3273
    %v3275 = vpop.f32.mrf.mxu0
    %3276 = vmatprep.mubr.f32.mxu0 0.0
    %3277 = vmatmul.mubr.f32.gmra.mxu0 %v3197
    %v3278 = vpop.f32.mrf.mxu0
    %v3279 = vadd.f32 %v344, %v3278
    %v3280 = vpop.f32.mrf.mxu0
    %3281 = vmatprep.mubr.f32.mxu0 0.0
    %3282 = vmatmul.mubr.f32.gmra.mxu0 %v3199
    %v3283 = vpop.f32.mrf.mxu0
    %v3284 = vadd.f32 %v345, %v3283
    %v3285 = vpop.f32.mrf.mxu0
    %3286 = vdwg.mxu0
    %v3287 = vsel %vm606, %v3274, -inf
    %3288 = vmax.xlane.f32.xlu0 %v3287
    %v3289 = vpop.xlane.xlu0 %3288
    %v3290 = vsel %vm606, %v3279, -inf
    %3291 = vmax.xlane.f32.xlu0 %v3290
    %v3292 = vpop.xlane.xlu0 %3291
    %v3293 = vsel %vm613, %v3284, -inf
    %3294 = vmax.xlane.f32.xlu0 %v3293
    %v3295 = vpop.xlane.xlu0 %3294
    %v3296 = vsub.f32 %v3274, %v3289
    %v3297 = vsub.f32 %v3279, %v3292
    %v3298 = vsub.f32 %v3284, %v3295
    %v3299 = vmul.f32 %v3296, 1.442695
    %v3300 = vpow.pop %v3299
    %v3301 = vmul.f32 %v3297, 1.442695
    %v3302 = vpow.pop %v3301
    %v3303 = vmul.f32 %v3298, 1.442695
    %v3304 = vpow.pop %v3303
    %v3305 = vsel %vm606, %v3300, 0.0
    %3306 = vadd.xlane.f32.xlu0 %v3305
    %v3307 = vpop.xlane.xlu0 %3306
    %v3308 = vsel %vm606, %v3302, 0.0
    %3309 = vadd.xlane.f32.xlu0 %v3308
    %v3310 = vpop.xlane.xlu0 %3309
    %v3311 = vsel %vm613, %v3304, 0.0
    %3312 = vadd.xlane.f32.xlu0 %v3311
    %v3313 = vpop.xlane.xlu0 %3312
    %v3314 = vrcp.pop %v3307
    %v3315 = vrcp.pop %v3310
    %v3316 = vrcp.pop %v3313
    %v3317 = vmul.f32 %v3300, %v3314
    %v3318 = vmul.f32 %v3302, %v3315
    %v3319 = vmul.f32 %v3304, %v3316
    %3320 = vrot.lane.b32.xlu0 %v2932, 48
    %v3321 = vpop.permute.xlu0 %3320
    %3322 = vrot.lane.b32.xlu0 %v2937, 48
    %v3323 = vpop.permute.xlu0 %3322
    %3324 = vrot.lane.b32.xlu0 %v2942, 48
    %v3325 = vpop.permute.xlu0 %3324
    %v3329 = vsel %vm606, %v3317, 0
    %v3332 = vsel %vm606, %v3318, 0
    %v3335 = vsel %vm606, %v3319, 0
    %v3337 = vsel %vm658, %v3325, 0
    %3339 = vmatprep.subr.mxu0 0.0
    %3340 = vmatpush1.msra.mxu0 0.0
    %3341 = vmatprep.subr.mxu0 0.0
    %3342 = vmatpush1.msra.mxu0 0.0
    %3343 = vmatprep.subr.mxu0 0.0
    %3344 = vmatpush1.msra.mxu0 0.0
    %3345 = vmatprep.subr.mxu0 0.0
    %3346 = vmatpush1.msra.mxu0 0.0
    %3347 = vmatprep.subr.mxu0 0.0
    %3348 = vmatpush1.msra.mxu0 0.0
    %3349 = vmatprep.subr.mxu0 0.0
    %3350 = vmatpush1.msra.mxu0 0.0
    %3351 = vmatprep.subr.mxu0 0.0
    %3352 = vmatpush1.msra.mxu0 0.0
    %3353 = vmatprep.subr.mxu0 0.0
    %3354 = vmatpush1.msra.mxu0 0.0
    %3355 = vmatprep.subr.mxu0 0.0
    %3356 = vmatpush1.msra.mxu0 0.0
    %3357 = vmatprep.subr.mxu0 0.0
    %3358 = vmatpush1.msra.mxu0 0.0
    %3359 = vmatprep.subr.mxu0 0.0
    %3360 = vmatpush1.msra.mxu0 0.0
    %3361 = vmatprep.subr.mxu0 0.0
    %3362 = vmatpush1.msra.mxu0 0.0
    %3363 = vmatprep.subr.mxu0 0.0
    %3364 = vmatpush1.msra.mxu0 0.0
    %3365 = vmatprep.subr.mxu0 0.0
    %3366 = vmatpush1.msra.mxu0 %v3337
    %3367 = vmatprep.subr.mxu0 0.0
    %3368 = vmatpush1.msra.mxu0 %v3323
    %3369 = vmatprep.subr.mxu0 0.0
    %3370 = vmatpush1.msra.mxu0 %v3321
    %3371 = vmatprep.subr.mxu0 0.0
    %3372 = vmatpush2.msra.mxu0 0.0
    %3373 = vmatprep.subr.mxu0 0.0
    %3374 = vmatpush2.msra.mxu0 0.0
    %3375 = vmatprep.subr.mxu0 0.0
    %3376 = vmatpush2.msra.mxu0 0.0
    %3377 = vmatprep.subr.mxu0 0.0
    %3378 = vmatpush2.msra.mxu0 0.0
    %3379 = vmatprep.subr.mxu0 0.0
    %3380 = vmatpush2.msra.mxu0 0.0
    %3381 = vmatprep.subr.mxu0 0.0
    %3382 = vmatpush2.msra.mxu0 0.0
    %3383 = vmatprep.subr.mxu0 0.0
    %3384 = vmatpush2.msra.mxu0 0.0
    %3385 = vmatprep.subr.mxu0 0.0
    %3386 = vmatpush2.msra.mxu0 0.0
    %3387 = vmatprep.subr.mxu0 0.0
    %3388 = vmatpush2.msra.mxu0 0.0
    %3389 = vmatprep.subr.mxu0 0.0
    %3390 = vmatpush2.msra.mxu0 0.0
    %3391 = vmatprep.subr.mxu0 0.0
    %3392 = vmatpush2.msra.mxu0 0.0
    %3393 = vmatprep.subr.mxu0 0.0
    %3394 = vmatpush2.msra.mxu0 0.0
    %3395 = vmatprep.subr.mxu0 0.0
    %3396 = vmatpush2.msra.mxu0 0.0
    %3397 = vmatprep.subr.mxu0 0.0
    %3398 = vmatpush2.msra.mxu0 0.0
    %3399 = vmatprep.subr.mxu0 0.0
    %3400 = vmatpush2.msra.mxu0 0.0
    %3401 = vmatprep.subr.mxu0 0.0
    %3402 = vmatpush2.msra.mxu0 0.0
    %3403 = vmatprep.mubr.f32.mxu0 0.0
    %3404 = vmatmul.mubr.f32.gmra.mxu0 %v3329
    %v3405 = vpop.f32.mrf.mxu0
    %v3406 = vadd.f32 0.0, %v3405
    %v3407 = vpop.f32.mrf.mxu0
    %3408 = vmatprep.mubr.f32.mxu0 0.0
    %3409 = vmatmul.mubr.f32.gmra.mxu0 %v3332
    %v3410 = vpop.f32.mrf.mxu0
    %v3411 = vadd.f32 0.0, %v3410
    %v3412 = vpop.f32.mrf.mxu0
    %3413 = vmatprep.mubr.f32.mxu0 0.0
    %3414 = vmatmul.mubr.f32.gmra.mxu0 %v3335
    %v3415 = vpop.f32.mrf.mxu0
    %v3416 = vadd.f32 0.0, %v3415
    %v3417 = vpop.f32.mrf.mxu0
    %3418 = vdwg.mxu0
    %v3420 = vsel %vm253, %v3406, 0
    %v3423 = vsel %vm253, %v3411, 0
    %v3426 = vsel %vm253, %v3416, 0
    %3428 = vmatprep.subr.mxu0 0.0
    %3429 = vmatpush1.msra.mxu0 0.0
    %3430 = vmatprep.subr.mxu0 0.0
    %3431 = vmatpush1.msra.mxu0 0.0
    %3432 = vmatprep.subr.mxu0 0.0
    %3433 = vmatpush1.msra.mxu0 0.0
    %3434 = vmatprep.subr.mxu0 0.0
    %3435 = vmatpush1.msra.mxu0 0.0
    %3436 = vmatprep.subr.mxu0 0.0
    %3437 = vmatpush1.msra.mxu0 0.0
    %3438 = vmatprep.subr.mxu0 0.0
    %3439 = vmatpush1.msra.mxu0 0.0
    %3440 = vmatprep.subr.mxu0 0.0
    %3441 = vmatpush1.msra.mxu0 0.0
    %3442 = vmatprep.subr.mxu0 0.0
    %3443 = vmatpush1.msra.mxu0 0.0
    %3444 = vmatprep.subr.mxu0 0.0
    %3445 = vmatpush1.msra.mxu0 0.0
    %3446 = vmatprep.subr.mxu0 0.0
    %3447 = vmatpush1.msra.mxu0 0.0
    %3448 = vmatprep.subr.mxu0 0.0
    %3449 = vmatpush1.msra.mxu0 0.0
    %3450 = vmatprep.subr.mxu0 0.0
    %3451 = vmatpush1.msra.mxu0 0.0
    %3452 = vmatprep.subr.mxu0 0.0
    %3453 = vmatpush1.msra.mxu0 0.0
    %3454 = vmatprep.subr.mxu0 0.0
    %3455 = vmatpush1.msra.mxu0 0.0
    %3456 = vmatprep.subr.mxu0 0.0
    %3457 = vmatpush1.msra.mxu0 %v2949
    %3458 = vmatprep.subr.mxu0 0.0
    %3459 = vmatpush1.msra.mxu0 %v2948
    %3460 = vmatprep.subr.mxu0 0.0
    %3461 = vmatpush2.msra.mxu0 0.0
    %3462 = vmatprep.subr.mxu0 0.0
    %3463 = vmatpush2.msra.mxu0 0.0
    %3464 = vmatprep.subr.mxu0 0.0
    %3465 = vmatpush2.msra.mxu0 0.0
    %3466 = vmatprep.subr.mxu0 0.0
    %3467 = vmatpush2.msra.mxu0 0.0
    %3468 = vmatprep.subr.mxu0 0.0
    %3469 = vmatpush2.msra.mxu0 0.0
    %3470 = vmatprep.subr.mxu0 0.0
    %3471 = vmatpush2.msra.mxu0 0.0
    %3472 = vmatprep.subr.mxu0 0.0
    %3473 = vmatpush2.msra.mxu0 0.0
    %3474 = vmatprep.subr.mxu0 0.0
    %3475 = vmatpush2.msra.mxu0 0.0
    %3476 = vmatprep.subr.mxu0 0.0
    %3477 = vmatpush2.msra.mxu0 0.0
    %3478 = vmatprep.subr.mxu0 0.0
    %3479 = vmatpush2.msra.mxu0 0.0
    %3480 = vmatprep.subr.mxu0 0.0
    %3481 = vmatpush2.msra.mxu0 0.0
    %3482 = vmatprep.subr.mxu0 0.0
    %3483 = vmatpush2.msra.mxu0 0.0
    %3484 = vmatprep.subr.mxu0 0.0
    %3485 = vmatpush2.msra.mxu0 0.0
    %3486 = vmatprep.subr.mxu0 0.0
    %3487 = vmatpush2.msra.mxu0 0.0
    %3488 = vmatprep.subr.mxu0 0.0
    %3489 = vmatpush2.msra.mxu0 0.0
    %3490 = vmatprep.subr.mxu0 0.0
    %3491 = vmatpush2.msra.mxu0 0.0
    %3492 = vmatprep.mubr.f32.mxu0 0.0
    %3493 = vmatmul.mubr.f32.gmra.mxu0 %v3420
    %v3494 = vpop.f32.mrf.mxu0
    %v3495 = vadd.f32 0.0, %v3494
    %v3496 = vpop.f32.mrf.mxu0
    %3497 = vmatprep.mubr.f32.mxu0 0.0
    %3498 = vmatmul.mubr.f32.gmra.mxu0 %v3423
    %v3499 = vpop.f32.mrf.mxu0
    %v3500 = vadd.f32 0.0, %v3499
    %v3501 = vpop.f32.mrf.mxu0
    %3502 = vmatprep.mubr.f32.mxu0 0.0
    %3503 = vmatmul.mubr.f32.gmra.mxu0 %v3426
    %v3504 = vpop.f32.mrf.mxu0
    %v3505 = vadd.f32 0.0, %v3504
    %v3506 = vpop.f32.mrf.mxu0
    %3507 = vdwg.mxu0
    %v3509 = vsel %vm253, %v3170, 0
    %v3512 = vsel %vm253, %v3175, 0
    %v3515 = vsel %vm253, %v3180, 0
    %3517 = vmatprep.subr.mxu0 0.0
    %3518 = vmatpush1.msra.mxu0 0.0
    %3519 = vmatprep.subr.mxu0 0.0
    %3520 = vmatpush1.msra.mxu0 0.0
    %3521 = vmatprep.subr.mxu0 0.0
    %3522 = vmatpush1.msra.mxu0 0.0
    %3523 = vmatprep.subr.mxu0 0.0
    %3524 = vmatpush1.msra.mxu0 0.0
    %3525 = vmatprep.subr.mxu0 0.0
    %3526 = vmatpush1.msra.mxu0 0.0
    %3527 = vmatprep.subr.mxu0 0.0
    %3528 = vmatpush1.msra.mxu0 0.0
    %3529 = vmatprep.subr.mxu0 0.0
    %3530 = vmatpush1.msra.mxu0 0.0
    %3531 = vmatprep.subr.mxu0 0.0
    %3532 = vmatpush1.msra.mxu0 0.0
    %3533 = vmatprep.subr.mxu0 0.0
    %3534 = vmatpush1.msra.mxu0 0.0
    %3535 = vmatprep.subr.mxu0 0.0
    %3536 = vmatpush1.msra.mxu0 0.0
    %3537 = vmatprep.subr.mxu0 0.0
    %3538 = vmatpush1.msra.mxu0 0.0
    %3539 = vmatprep.subr.mxu0 0.0
    %3540 = vmatpush1.msra.mxu0 0.0
    %3541 = vmatprep.subr.mxu0 0.0
    %3542 = vmatpush1.msra.mxu0 0.0
    %3543 = vmatprep.subr.mxu0 0.0
    %3544 = vmatpush1.msra.mxu0 0.0
    %3545 = vmatprep.subr.mxu0 0.0
    %3546 = vmatpush1.msra.mxu0 %v2947
    %3547 = vmatprep.subr.mxu0 0.0
    %3548 = vmatpush1.msra.mxu0 %v2946
    %3549 = vmatprep.subr.mxu0 0.0
    %3550 = vmatpush2.msra.mxu0 0.0
    %3551 = vmatprep.subr.mxu0 0.0
    %3552 = vmatpush2.msra.mxu0 0.0
    %3553 = vmatprep.subr.mxu0 0.0
    %3554 = vmatpush2.msra.mxu0 0.0
    %3555 = vmatprep.subr.mxu0 0.0
    %3556 = vmatpush2.msra.mxu0 0.0
    %3557 = vmatprep.subr.mxu0 0.0
    %3558 = vmatpush2.msra.mxu0 0.0
    %3559 = vmatprep.subr.mxu0 0.0
    %3560 = vmatpush2.msra.mxu0 0.0
    %3561 = vmatprep.subr.mxu0 0.0
    %3562 = vmatpush2.msra.mxu0 0.0
    %3563 = vmatprep.subr.mxu0 0.0
    %3564 = vmatpush2.msra.mxu0 0.0
    %3565 = vmatprep.subr.mxu0 0.0
    %3566 = vmatpush2.msra.mxu0 0.0
    %3567 = vmatprep.subr.mxu0 0.0
    %3568 = vmatpush2.msra.mxu0 0.0
    %3569 = vmatprep.subr.mxu0 0.0
    %3570 = vmatpush2.msra.mxu0 0.0
    %3571 = vmatprep.subr.mxu0 0.0
    %3572 = vmatpush2.msra.mxu0 0.0
    %3573 = vmatprep.subr.mxu0 0.0
    %3574 = vmatpush2.msra.mxu0 0.0
    %3575 = vmatprep.subr.mxu0 0.0
    %3576 = vmatpush2.msra.mxu0 0.0
    %3577 = vmatprep.subr.mxu0 0.0
    %3578 = vmatpush2.msra.mxu0 0.0
    %3579 = vmatprep.subr.mxu0 0.0
    %3580 = vmatpush2.msra.mxu0 0.0
    %3581 = vmatprep.mubr.f32.mxu0 0.0
    %3582 = vmatmul.mubr.f32.gmra.mxu0 %v3509
    %v3583 = vpop.f32.mrf.mxu0
    %v3584 = vadd.f32 %v3495, %v3583
    %v3585 = vpop.f32.mrf.mxu0
    %3586 = vmatprep.mubr.f32.mxu0 0.0
    %3587 = vmatmul.mubr.f32.gmra.mxu0 %v3512
    %v3588 = vpop.f32.mrf.mxu0
    %v3589 = vadd.f32 %v3500, %v3588
    %v3590 = vpop.f32.mrf.mxu0
    %3591 = vmatprep.mubr.f32.mxu0 0.0
    %3592 = vmatmul.mubr.f32.gmra.mxu0 %v3515
    %v3593 = vpop.f32.mrf.mxu0
    %v3594 = vadd.f32 %v3505, %v3593
    %v3595 = vpop.f32.mrf.mxu0
    %3596 = vdwg.mxu0
    %v3597 = vadd.f32 %v2787, %v3584
    %v3598 = vadd.f32 %v2788, %v3589
    %v3599 = vadd.f32 %v2789, %v3594
    %s3600 = scalar_lea.vmem [#allocation10], 2
    %v3601 = vld [vmem:[%s3600] sm:$0x1]
    %v3603 = vlaneseq
    %v3604 = vshrl.u32 %v3603, 7
    %v3605 = vsub.s32 0, %v3604
    %v3606 = vrot.slane %v3601, %v3605
    %v3608 = vadd.f32 %v3597, %v3606
    %v3609 = vadd.f32 %v3598, %v3606
    %v3610 = vadd.f32 %v3599, %v3606
    %s3611 = scalar_lea.vmem [#allocation11], 2
    %v3612 = vld [vmem:[%s3611] sm:$0x1]
    %s3613 = scalar_lea.vmem [#allocation13], 2
    %v3614 = vld [vmem:[%s3613] sm:$0x1]
    %v3615 = vsel %vm348, %v3608, 0.0
    %3616 = vadd.xlane.f32.xlu0 %v3615
    %v3617 = vpop.xlane.xlu0 %3616
    %v3618 = vsel %vm348, %v3609, 0.0
    %3619 = vadd.xlane.f32.xlu0 %v3618
    %v3620 = vpop.xlane.xlu0 %3619
    %v3621 = vsel %vm355, %v3610, 0.0
    %3622 = vadd.xlane.f32.xlu0 %v3621
    %v3623 = vpop.xlane.xlu0 %3622
    %v3624 = vmul.f32 %v3617, %v359
    %v3625 = vmul.f32 %v3620, %v359
    %v3626 = vmul.f32 %v3623, %v359
    %v3627 = vsub.f32 %v3608, %v3624
    %v3628 = vsub.f32 %v3609, %v3625
    %v3629 = vsub.f32 %v3610, %v3626
    %v3630 = vmul.f32 %v3627, %v3627
    %v3631 = vmul.f32 %v3628, %v3628
    %v3632 = vmul.f32 %v3629, %v3629
    %v3633 = vsel %vm348, %v3630, 0.0
    %3634 = vadd.xlane.f32.xlu0 %v3633
    %v3635 = vpop.xlane.xlu0 %3634
    %v3636 = vsel %vm348, %v3631, 0.0
    %3637 = vadd.xlane.f32.xlu0 %v3636
    %v3638 = vpop.xlane.xlu0 %3637
    %v3639 = vsel %vm355, %v3632, 0.0
    %3640 = vadd.xlane.f32.xlu0 %v3639
    %v3641 = vpop.xlane.xlu0 %3640
    %v3642 = vmul.f32 %v3635, %v359
    %v3643 = vmul.f32 %v3638, %v359
    %v3644 = vmul.f32 %v3641, %v359
    %v3645 = vadd.f32 %v3642, 1e-05
    %v3646 = vadd.f32 %v3643, 1e-05
    %v3647 = vadd.f32 %v3644, 1e-05
    %v3648 = vrsqrt.pop %v3645
    %v3649 = vrsqrt.pop %v3646
    %v3650 = vrsqrt.pop %v3647
    %v3651 = vmul.f32 %v3627, %v3648
    %v3652 = vmul.f32 %v3628, %v3649
    %v3653 = vmul.f32 %v3629, %v3650
    %v3655 = vlaneseq
    %v3656 = vshrl.u32 %v3655, 7
    %v3657 = vsub.s32 0, %v3656
    %v3658 = vrot.slane %v3612, %v3657
    %v3660 = vmul.f32 %v3651, %v3658
    %v3661 = vmul.f32 %v3652, %v3658
    %v3662 = vmul.f32 %v3653, %v3658
    %v3664 = vlaneseq
    %v3665 = vshrl.u32 %v3664, 7
    %v3666 = vsub.s32 0, %v3665
    %v3667 = vrot.slane %v3614, %v3666
    %v3669 = vadd.f32 %v3660, %v3667
    %v3670 = vadd.f32 %v3661, %v3667
    %v3671 = vadd.f32 %v3662, %v3667
    %s3672 = scalar_lea.vmem [#allocation14], 64
    %v3673 = vld [vmem:[%s3672] sm:$0xff]
    %v3674 = vld [vmem:[%s3672 + $0x8] sm:$0xff]
    %v3675 = vld [vmem:[%s3672 + $0x10] sm:$0xff]
    %v3676 = vld [vmem:[%s3672 + $0x18] sm:$0xff]
    %s3677 = scalar_lea.vmem [#allocation16], 2
    %v3678 = vld [vmem:[%s3677] sm:$0x1]
    %v3680 = vlaneseq
    %v3681 = vshrl.u32 %v3680, 7
    %v3682 = vsub.s32 0, %v3681
    %v3683 = vrot.slane %v3678, %v3682
    %v3686 = vsel %vm348, %v3669, 0
    %v3689 = vsel %vm348, %v3670, 0
    %v3692 = vsel %vm348, %v3671, 0
    %3694 = vmatprep.subr.mxu0 0.0
    %3695 = vmatpush1.msra.mxu0 0.0
    %3696 = vmatprep.subr.mxu0 0.0
    %3697 = vmatpush1.msra.mxu0 0.0
    %3698 = vmatprep.subr.mxu0 0.0
    %3699 = vmatpush1.msra.mxu0 0.0
    %3700 = vmatprep.subr.mxu0 0.0
    %3701 = vmatpush1.msra.mxu0 0.0
    %3702 = vmatprep.subr.mxu0 0.0
    %3703 = vmatpush1.msra.mxu0 0.0
    %3704 = vmatprep.subr.mxu0 0.0
    %3705 = vmatpush1.msra.mxu0 0.0
    %3706 = vmatprep.subr.mxu0 0.0
    %3707 = vmatpush1.msra.mxu0 0.0
    %3708 = vmatprep.subr.mxu0 0.0
    %3709 = vmatpush1.msra.mxu0 0.0
    %3710 = vmatprep.subr.mxu0 0.0
    %3711 = vmatpush1.msra.mxu0 0.0
    %3712 = vmatprep.subr.mxu0 0.0
    %3713 = vmatpush1.msra.mxu0 0.0
    %3714 = vmatprep.subr.mxu0 0.0
    %3715 = vmatpush1.msra.mxu0 0.0
    %3716 = vmatprep.subr.mxu0 0.0
    %3717 = vmatpush1.msra.mxu0 0.0
    %3718 = vmatprep.subr.mxu0 0.0
    %3719 = vmatpush1.msra.mxu0 %v3676
    %3720 = vmatprep.subr.mxu0 0.0
    %3721 = vmatpush1.msra.mxu0 %v3675
    %3722 = vmatprep.subr.mxu0 0.0
    %3723 = vmatpush1.msra.mxu0 %v3674
    %3724 = vmatprep.subr.mxu0 0.0
    %3725 = vmatpush1.msra.mxu0 %v3673
    %3726 = vmatprep.subr.mxu0 0.0
    %3727 = vmatpush2.msra.mxu0 0.0
    %3728 = vmatprep.subr.mxu0 0.0
    %3729 = vmatpush2.msra.mxu0 0.0
    %3730 = vmatprep.subr.mxu0 0.0
    %3731 = vmatpush2.msra.mxu0 0.0
    %3732 = vmatprep.subr.mxu0 0.0
    %3733 = vmatpush2.msra.mxu0 0.0
    %3734 = vmatprep.subr.mxu0 0.0
    %3735 = vmatpush2.msra.mxu0 0.0
    %3736 = vmatprep.subr.mxu0 0.0
    %3737 = vmatpush2.msra.mxu0 0.0
    %3738 = vmatprep.subr.mxu0 0.0
    %3739 = vmatpush2.msra.mxu0 0.0
    %3740 = vmatprep.subr.mxu0 0.0
    %3741 = vmatpush2.msra.mxu0 0.0
    %3742 = vmatprep.subr.mxu0 0.0
    %3743 = vmatpush2.msra.mxu0 0.0
    %3744 = vmatprep.subr.mxu0 0.0
    %3745 = vmatpush2.msra.mxu0 0.0
    %3746 = vmatprep.subr.mxu0 0.0
    %3747 = vmatpush2.msra.mxu0 0.0
    %3748 = vmatprep.subr.mxu0 0.0
    %3749 = vmatpush2.msra.mxu0 0.0
    %3750 = vmatprep.subr.mxu0 0.0
    %3751 = vmatpush2.msra.mxu0 0.0
    %3752 = vmatprep.subr.mxu0 0.0
    %3753 = vmatpush2.msra.mxu0 0.0
    %3754 = vmatprep.subr.mxu0 0.0
    %3755 = vmatpush2.msra.mxu0 0.0
    %3756 = vmatprep.subr.mxu0 0.0
    %3757 = vmatpush2.msra.mxu0 0.0
    %3758 = vmatprep.mubr.f32.mxu0 0.0
    %3759 = vmatmul.mubr.f32.gmra.mxu0 %v3686
    %v3760 = vpop.f32.mrf.mxu0
    %v3761 = vadd.f32 %v3683, %v3760
    %v3762 = vpop.f32.mrf.mxu0
    %3763 = vmatprep.mubr.f32.mxu0 0.0
    %3764 = vmatmul.mubr.f32.gmra.mxu0 %v3689
    %v3765 = vpop.f32.mrf.mxu0
    %v3766 = vadd.f32 %v3683, %v3765
    %v3767 = vpop.f32.mrf.mxu0
    %3768 = vmatprep.mubr.f32.mxu0 0.0
    %3769 = vmatmul.mubr.f32.gmra.mxu0 %v3692
    %v3770 = vpop.f32.mrf.mxu0
    %v3771 = vadd.f32 %v3683, %v3770
    %v3772 = vpop.f32.mrf.mxu0
    %3773 = vdwg.mxu0
    %v3774 = vmul.f32 %v3761, 0.5
    %v3775 = vmul.f32 %v3766, 0.5
    %v3776 = vmul.f32 %v3771, 0.5
    %v3777 = vmul.f32 %v3761, 0.044715
    %v3778 = vmul.f32 %v3766, 0.044715
    %v3779 = vmul.f32 %v3771, 0.044715
    %v3780 = vmul.f32 %v3777, %v3761
    %v3781 = vmul.f32 %v3778, %v3766
    %v3782 = vmul.f32 %v3779, %v3771
    %v3783 = vmul.f32 %v3780, %v3761
    %v3784 = vmul.f32 %v3781, %v3766
    %v3785 = vmul.f32 %v3782, %v3771
    %v3786 = vadd.f32 %v3761, %v3783
    %v3787 = vadd.f32 %v3766, %v3784
    %v3788 = vadd.f32 %v3771, %v3785
    %v3789 = vmul.f32 %v3786, 0.7978846
    %v3790 = vmul.f32 %v3787, 0.7978846
    %v3791 = vmul.f32 %v3788, 0.7978846
    %v3792 = vtanh.pop %v3789
    %v3793 = vtanh.pop %v3790
    %v3794 = vtanh.pop %v3791
    %v3795 = vadd.f32 %v3792, 1.0
    %v3796 = vadd.f32 %v3793, 1.0
    %v3797 = vadd.f32 %v3794, 1.0
    %v3798 = vmul.f32 %v3774, %v3795
    %v3799 = vmul.f32 %v3775, %v3796
    %v3800 = vmul.f32 %v3776, %v3797
    %s3801 = scalar_lea.vmem [#allocation17], 64
    %v3802 = vld [vmem:[%s3801] sm:$0xff]
    %v3803 = vld [vmem:[%s3801 + $0x8] sm:$0xff]
    %v3804 = vld [vmem:[%s3801 + $0x10] sm:$0xff]
    %v3805 = vld [vmem:[%s3801 + $0x18] sm:$0xff]
    %v3807 = vsel %vm348, %v3798, 0
    %v3810 = vsel %vm348, %v3799, 0
    %v3813 = vsel %vm348, %v3800, 0
    %3815 = vmatprep.subr.mxu0 0.0
    %3816 = vmatpush1.msra.mxu0 0.0
    %3817 = vmatprep.subr.mxu0 0.0
    %3818 = vmatpush1.msra.mxu0 0.0
    %3819 = vmatprep.subr.mxu0 0.0
    %3820 = vmatpush1.msra.mxu0 0.0
    %3821 = vmatprep.subr.mxu0 0.0
    %3822 = vmatpush1.msra.mxu0 0.0
    %3823 = vmatprep.subr.mxu0 0.0
    %3824 = vmatpush1.msra.mxu0 0.0
    %3825 = vmatprep.subr.mxu0 0.0
    %3826 = vmatpush1.msra.mxu0 0.0
    %3827 = vmatprep.subr.mxu0 0.0
    %3828 = vmatpush1.msra.mxu0 0.0
    %3829 = vmatprep.subr.mxu0 0.0
    %3830 = vmatpush1.msra.mxu0 0.0
    %3831 = vmatprep.subr.mxu0 0.0
    %3832 = vmatpush1.msra.mxu0 0.0
    %3833 = vmatprep.subr.mxu0 0.0
    %3834 = vmatpush1.msra.mxu0 0.0
    %3835 = vmatprep.subr.mxu0 0.0
    %3836 = vmatpush1.msra.mxu0 0.0
    %3837 = vmatprep.subr.mxu0 0.0
    %3838 = vmatpush1.msra.mxu0 0.0
    %3839 = vmatprep.subr.mxu0 0.0
    %3840 = vmatpush1.msra.mxu0 %v3805
    %3841 = vmatprep.subr.mxu0 0.0
    %3842 = vmatpush1.msra.mxu0 %v3804
    %3843 = vmatprep.subr.mxu0 0.0
    %3844 = vmatpush1.msra.mxu0 %v3803
    %3845 = vmatprep.subr.mxu0 0.0
    %3846 = vmatpush1.msra.mxu0 %v3802
    %3847 = vmatprep.subr.mxu0 0.0
    %3848 = vmatpush2.msra.mxu0 0.0
    %3849 = vmatprep.subr.mxu0 0.0
    %3850 = vmatpush2.msra.mxu0 0.0
    %3851 = vmatprep.subr.mxu0 0.0
    %3852 = vmatpush2.msra.mxu0 0.0
    %3853 = vmatprep.subr.mxu0 0.0
    %3854 = vmatpush2.msra.mxu0 0.0
    %3855 = vmatprep.subr.mxu0 0.0
    %3856 = vmatpush2.msra.mxu0 0.0
    %3857 = vmatprep.subr.mxu0 0.0
    %3858 = vmatpush2.msra.mxu0 0.0
    %3859 = vmatprep.subr.mxu0 0.0
    %3860 = vmatpush2.msra.mxu0 0.0
    %3861 = vmatprep.subr.mxu0 0.0
    %3862 = vmatpush2.msra.mxu0 0.0
    %3863 = vmatprep.subr.mxu0 0.0
    %3864 = vmatpush2.msra.mxu0 0.0
    %3865 = vmatprep.subr.mxu0 0.0
    %3866 = vmatpush2.msra.mxu0 0.0
    %3867 = vmatprep.subr.mxu0 0.0
    %3868 = vmatpush2.msra.mxu0 0.0
    %3869 = vmatprep.subr.mxu0 0.0
    %3870 = vmatpush2.msra.mxu0 0.0
    %3871 = vmatprep.subr.mxu0 0.0
    %3872 = vmatpush2.msra.mxu0 0.0
    %3873 = vmatprep.subr.mxu0 0.0
    %3874 = vmatpush2.msra.mxu0 0.0
    %3875 = vmatprep.subr.mxu0 0.0
    %3876 = vmatpush2.msra.mxu0 0.0
    %3877 = vmatprep.subr.mxu0 0.0
    %3878 = vmatpush2.msra.mxu0 0.0
    %3879 = vmatprep.mubr.f32.mxu0 0.0
    %3880 = vmatmul.mubr.f32.gmra.mxu0 %v3807
    %v3881 = vpop.f32.mrf.mxu0
    %v3882 = vadd.f32 0.0, %v3881
    %v3883 = vpop.f32.mrf.mxu0
    %3884 = vmatprep.mubr.f32.mxu0 0.0
    %3885 = vmatmul.mubr.f32.gmra.mxu0 %v3810
    %v3886 = vpop.f32.mrf.mxu0
    %v3887 = vadd.f32 0.0, %v3886
    %v3888 = vpop.f32.mrf.mxu0
    %3889 = vmatprep.mubr.f32.mxu0 0.0
    %3890 = vmatmul.mubr.f32.gmra.mxu0 %v3813
    %v3891 = vpop.f32.mrf.mxu0
    %v3892 = vadd.f32 0.0, %v3891
    %v3893 = vpop.f32.mrf.mxu0
    %3894 = vdwg.mxu0
    %v3895 = vadd.f32 %v3608, %v3882
    %v3896 = vadd.f32 %v3609, %v3887
    %v3897 = vadd.f32 %v3610, %v3892
    %s3898 = scalar_lea.vmem [#allocation19], 2
    %v3899 = vld [vmem:[%s3898] sm:$0x1]
    %v3901 = vlaneseq
    %v3902 = vshrl.u32 %v3901, 7
    %v3903 = vsub.s32 0, %v3902
    %v3904 = vrot.slane %v3899, %v3903
    %v3906 = vadd.f32 %v3895, %v3904
    %v3907 = vadd.f32 %v3896, %v3904
    %v3908 = vadd.f32 %v3897, %v3904
    %v3909 = vld [vmem:[#allocation5] sm:$0x3]
    %v3911 = vsel %vm606, %v3909, 0
    %v3914 = vsel %vm658, %v3908, 0
    %3916 = vmatprep.subr.mxu0 0.0
    %3917 = vmatpush1.msra.mxu0 0.0
    %3918 = vmatprep.subr.mxu0 0.0
    %3919 = vmatpush1.msra.mxu0 0.0
    %3920 = vmatprep.subr.mxu0 0.0
    %3921 = vmatpush1.msra.mxu0 0.0
    %3922 = vmatprep.subr.mxu0 0.0
    %3923 = vmatpush1.msra.mxu0 0.0
    %3924 = vmatprep.subr.mxu0 0.0
    %3925 = vmatpush1.msra.mxu0 0.0
    %3926 = vmatprep.subr.mxu0 0.0
    %3927 = vmatpush1.msra.mxu0 0.0
    %3928 = vmatprep.subr.mxu0 0.0
    %3929 = vmatpush1.msra.mxu0 0.0
    %3930 = vmatprep.subr.mxu0 0.0
    %3931 = vmatpush1.msra.mxu0 0.0
    %3932 = vmatprep.subr.mxu0 0.0
    %3933 = vmatpush1.msra.mxu0 0.0
    %3934 = vmatprep.subr.mxu0 0.0
    %3935 = vmatpush1.msra.mxu0 0.0
    %3936 = vmatprep.subr.mxu0 0.0
    %3937 = vmatpush1.msra.mxu0 0.0
    %3938 = vmatprep.subr.mxu0 0.0
    %3939 = vmatpush1.msra.mxu0 0.0
    %3940 = vmatprep.subr.mxu0 0.0
    %3941 = vmatpush1.msra.mxu0 0.0
    %3942 = vmatprep.subr.mxu0 0.0
    %3943 = vmatpush1.msra.mxu0 %v3914
    %3944 = vmatprep.subr.mxu0 0.0
    %3945 = vmatpush1.msra.mxu0 %v3907
    %3946 = vmatprep.subr.mxu0 0.0
    %3947 = vmatpush1.msra.mxu0 %v3906
    %3948 = vmatprep.subr.mxu0 0.0
    %3949 = vmatpush2.msra.mxu0 0.0
    %3950 = vmatprep.subr.mxu0 0.0
    %3951 = vmatpush2.msra.mxu0 0.0
    %3952 = vmatprep.subr.mxu0 0.0
    %3953 = vmatpush2.msra.mxu0 0.0
    %3954 = vmatprep.subr.mxu0 0.0
    %3955 = vmatpush2.msra.mxu0 0.0
    %3956 = vmatprep.subr.mxu0 0.0
    %3957 = vmatpush2.msra.mxu0 0.0
    %3958 = vmatprep.subr.mxu0 0.0
    %3959 = vmatpush2.msra.mxu0 0.0
    %3960 = vmatprep.subr.mxu0 0.0
    %3961 = vmatpush2.msra.mxu0 0.0
    %3962 = vmatprep.subr.mxu0 0.0
    %3963 = vmatpush2.msra.mxu0 0.0
    %3964 = vmatprep.subr.mxu0 0.0
    %3965 = vmatpush2.msra.mxu0 0.0
    %3966 = vmatprep.subr.mxu0 0.0
    %3967 = vmatpush2.msra.mxu0 0.0
    %3968 = vmatprep.subr.mxu0 0.0
    %3969 = vmatpush2.msra.mxu0 0.0
    %3970 = vmatprep.subr.mxu0 0.0
    %3971 = vmatpush2.msra.mxu0 0.0
    %3972 = vmatprep.subr.mxu0 0.0
    %3973 = vmatpush2.msra.mxu0 0.0
    %3974 = vmatprep.subr.mxu0 0.0
    %3975 = vmatpush2.msra.mxu0 0.0
    %3976 = vmatprep.subr.mxu0 0.0
    %3977 = vmatpush2.msra.mxu0 0.0
    %3978 = vmatprep.subr.mxu0 0.0
    %3979 = vmatpush2.msra.mxu0 0.0
    %3980 = vmatprep.mubr.f32.mxu0 0.0
    %3981 = vmatmul.mubr.f32.gmra.mxu0 %v3911
    %v3982 = vpop.f32.mrf.mxu0
    %v3983 = vadd.f32 0.0, %v3982
    %v3984 = vpop.f32.mrf.mxu0
    %3985 = vdwg.mxu0
    %v3986 = vld [vmem:[%s19] sm:$0x1]
    %v3987 = vld [vmem:[#allocation20] sm:$0x1]
    %v3988 = vsel %vm355, %v3983, 0.0
    %3989 = vadd.xlane.f32.xlu0 %v3988
    %v3990 = vpop.xlane.xlu0 %3989
    %v3991 = vmul.f32 %v3990, %v359
    %v3992 = vsub.f32 %v3983, %v3991
    %v3993 = vmul.f32 %v3992, %v3992
    %v3994 = vsel %vm355, %v3993, 0.0
    %3995 = vadd.xlane.f32.xlu0 %v3994
    %v3996 = vpop.xlane.xlu0 %3995
    %v3997 = vmul.f32 %v3996, %v359
    %v3998 = vadd.f32 %v3997, 1e-05
    %v3999 = vrsqrt.pop %v3998
    %v4000 = vmul.f32 %v3992, %v3999
    %v4002 = vlaneseq
    %v4003 = vshrl.u32 %v4002, 7
    %v4004 = vsub.s32 0, %v4003
    %v4005 = vrot.slane %v3986, %v4004
    %v4007 = vmul.f32 %v4000, %v4005
    %v4009 = vlaneseq
    %v4010 = vshrl.u32 %v4009, 7
    %v4011 = vsub.s32 0, %v4010
    %v4012 = vrot.slane %v3987, %v4011
    %v4014 = vadd.f32 %v4007, %v4012
    %v4015 = vld [vmem:[%s21] sm:$0xff]
    %v4016 = vld [vmem:[%s21 + $0x8] sm:$0xff]
    %v4017 = vld [vmem:[%s21 + $0x10] sm:$0xff]
    %v4018 = vld [vmem:[%s21 + $0x18] sm:$0xff]
    %v4019 = vld [vmem:[#allocation22] sm:$0x1]
    %v4021 = vlaneseq
    %v4022 = vshrl.u32 %v4021, 7
    %v4023 = vsub.s32 0, %v4022
    %v4024 = vrot.slane %v4019, %v4023
    %v4027 = vsel %vm348, %v4014, 0
    %4029 = vmatprep.subr.mxu0 0.0
    %4030 = vmatpush1.msra.mxu0 0.0
    %4031 = vmatprep.subr.mxu0 0.0
    %4032 = vmatpush1.msra.mxu0 0.0
    %4033 = vmatprep.subr.mxu0 0.0
    %4034 = vmatpush1.msra.mxu0 0.0
    %4035 = vmatprep.subr.mxu0 0.0
    %4036 = vmatpush1.msra.mxu0 0.0
    %4037 = vmatprep.subr.mxu0 0.0
    %4038 = vmatpush1.msra.mxu0 0.0
    %4039 = vmatprep.subr.mxu0 0.0
    %4040 = vmatpush1.msra.mxu0 0.0
    %4041 = vmatprep.subr.mxu0 0.0
    %4042 = vmatpush1.msra.mxu0 0.0
    %4043 = vmatprep.subr.mxu0 0.0
    %4044 = vmatpush1.msra.mxu0 0.0
    %4045 = vmatprep.subr.mxu0 0.0
    %4046 = vmatpush1.msra.mxu0 0.0
    %4047 = vmatprep.subr.mxu0 0.0
    %4048 = vmatpush1.msra.mxu0 0.0
    %4049 = vmatprep.subr.mxu0 0.0
    %4050 = vmatpush1.msra.mxu0 0.0
    %4051 = vmatprep.subr.mxu0 0.0
    %4052 = vmatpush1.msra.mxu0 0.0
    %4053 = vmatprep.subr.mxu0 0.0
    %4054 = vmatpush1.msra.mxu0 %v4018
    %4055 = vmatprep.subr.mxu0 0.0
    %4056 = vmatpush1.msra.mxu0 %v4017
    %4057 = vmatprep.subr.mxu0 0.0
    %4058 = vmatpush1.msra.mxu0 %v4016
    %4059 = vmatprep.subr.mxu0 0.0
    %4060 = vmatpush1.msra.mxu0 %v4015
    %4061 = vmatprep.subr.mxu0 0.0
    %4062 = vmatpush2.msra.mxu0 0.0
    %4063 = vmatprep.subr.mxu0 0.0
    %4064 = vmatpush2.msra.mxu0 0.0
    %4065 = vmatprep.subr.mxu0 0.0
    %4066 = vmatpush2.msra.mxu0 0.0
    %4067 = vmatprep.subr.mxu0 0.0
    %4068 = vmatpush2.msra.mxu0 0.0
    %4069 = vmatprep.subr.mxu0 0.0
    %4070 = vmatpush2.msra.mxu0 0.0
    %4071 = vmatprep.subr.mxu0 0.0
    %4072 = vmatpush2.msra.mxu0 0.0
    %4073 = vmatprep.subr.mxu0 0.0
    %4074 = vmatpush2.msra.mxu0 0.0
    %4075 = vmatprep.subr.mxu0 0.0
    %4076 = vmatpush2.msra.mxu0 0.0
    %4077 = vmatprep.subr.mxu0 0.0
    %4078 = vmatpush2.msra.mxu0 0.0
    %4079 = vmatprep.subr.mxu0 0.0
    %4080 = vmatpush2.msra.mxu0 0.0
    %4081 = vmatprep.subr.mxu0 0.0
    %4082 = vmatpush2.msra.mxu0 0.0
    %4083 = vmatprep.subr.mxu0 0.0
    %4084 = vmatpush2.msra.mxu0 0.0
    %4085 = vmatprep.subr.mxu0 0.0
    %4086 = vmatpush2.msra.mxu0 0.0
    %4087 = vmatprep.subr.mxu0 0.0
    %4088 = vmatpush2.msra.mxu0 0.0
    %4089 = vmatprep.subr.mxu0 0.0
    %4090 = vmatpush2.msra.mxu0 0.0
    %4091 = vmatprep.subr.mxu0 0.0
    %4092 = vmatpush2.msra.mxu0 0.0
    %4093 = vmatprep.mubr.f32.mxu0 0.0
    %4094 = vmatmul.mubr.f32.gmra.mxu0 %v4027
    %v4095 = vpop.f32.mrf.mxu0
    %v4096 = vadd.f32 %v4024, %v4095
    %v4097 = vpop.f32.mrf.mxu0
    %4098 = vdwg.mxu0
    %vm4099 = vcmask 25600
    %4100 = vst.msk [vmem:[#allocation23] sm:$0x3] %vm4099, %v4096
    // Predicated region
    $region146: #{vit_forward.1} parent=1 // pred_check
      _
    $region147: #{vit_forward.1} parent=1 // pred_check_branch
      %4102 = sbr.rel (0) target = $region149
    $region148: #{vit_forward.1} parent=1 // pred_region
      %s4104 = ssub.s32 32, 32
      %4105 = vsyncadd [#allocation4], %s4104
      %s4107 = sshll.u32 [#allocation23], 4
      %s4108 = int_to_ptr.vmem [resolvable:$true] %s4107
      %4110 = dma.vmem_to_hbm [thread:$0]  %s4108, 32, %s23, [#allocation4]
    $region149: #{vit_forward.1} parent=1 // pred_fallthru
      _
    // Predicated region
    $region150: #{vit_forward.1} parent=1 // pred_check
      _
    $region151: #{vit_forward.1} parent=1 // pred_check_branch
      %4112 = sbr.rel (0) target = $region153
    $region152: #{vit_forward.1} parent=1 // pred_region
      %4113 = dma.done [#allocation4], 32
    $region153: #{vit_forward.1} parent=1 // pred_fallthru
      _
    %4114 = vsyncpa [#allocation3], 1
    %4115 = vsyncpa [#allocation6], 1
    %4116 = vsyncpa [#allocation9], 1
    %4117 = vsyncpa [#allocation12], 1
    %4118 = vsyncpa [#allocation15], 1
    %4119 = vsyncpa [#allocation18], 1
    %4120 = vsyncpa [#allocation21], 1
    %4121 = vsyncpa [#allocation4], 1

</llo_original>
